<compile_context>
chip_gen: v7x
topology: tpu7x:2x2x1
jax: 0.10.0
libtpu: 0.0.40
codegen_flags: <defaults>
</compile_context>

<pallas_src>
import jax
import jax.numpy as jnp
from jax.experimental import pallas as pl
from jax.experimental.pallas import tpu as pltpu


TS = 8  # timesteps processed per grid iteration (full (8,128) output tiles)


def _round_up(x, m):
    return ((x + m - 1) // m) * m


def gru_block_kernel(x_ref, h0_ref, w_ref, b_ref, out_ref, h_scr, xh_scr):
    """Run TS GRU timesteps per grid iteration (time recurrence is serial).

    x_ref   : (TS, Hp)      pre-gathered embeddings for this block (weight dtype)
    h0_ref  : (1, Hp)       initial hidden state (read only at block 0)
    w_ref   : (2Hp, 4Hp)    fused GRU weights, gate chunks [r | z | gi_n | gh_n]
    b_ref   : (1, 4Hp) f32  fused biases [b_r(summed) | b_z(summed) | b_in | b_hn]
    out_ref : (TS, Hp) f32  per-step GRU outputs (row t%TS == hidden after step t)
    h_scr   : (1, Hp) f32   hidden state carried across grid blocks (VMEM scratch)
    xh_scr  : (1, 2Hp)      staged matmul LHS [x | h] in the weight dtype
    """
    Hp = h0_ref.shape[-1]
    ts = x_ref.shape[0]

    @pl.when(pl.program_id(0) == 0)
    def _():
        h_scr[...] = h0_ref[...].astype(jnp.float32)

    def step(t, h):
        # Stage [x_t | h_{t-1}] into the persistent LHS scratch (no lane concat).
        xh_scr[:, :Hp] = x_ref[pl.ds(t, 1), :].astype(xh_scr.dtype)
        xh_scr[:, Hp:] = h.astype(xh_scr.dtype)

        # One fused MXU push per step; f32 accumulation, f32 gate math.
        g = jnp.dot(xh_scr[...], w_ref[...],
                    preferred_element_type=jnp.float32) + b_ref[...]

        r = jax.nn.sigmoid(g[:, 0 * Hp:1 * Hp])
        z = jax.nn.sigmoid(g[:, 1 * Hp:2 * Hp])
        n = jnp.tanh(g[:, 2 * Hp:3 * Hp] + r * g[:, 3 * Hp:4 * Hp])
        h_new = (1.0 - z) * n + z * h

        out_ref[pl.ds(t, 1), :] = h_new.astype(out_ref.dtype)
        return h_new

    # Short fixed trip count -> fully unrolled for LLO scheduler visibility.
    h_fin = jax.lax.fori_loop(0, ts, step, h_scr[...], unroll=True)
    h_scr[...] = h_fin


def encoder_rnn_encode(tokens, hidden, kparams):
    """Run the GRU over a whole token sequence in one pallas_call.

    tokens : (T,) int32 token ids (T >= 1)
    hidden : (1, 1, H) float32 initial hidden state
    returns (outputs (T, 1, H) f32, hidden (1, 1, H) f32)
    """
    emb_p = kparams["embedding_padded"]   # (V, Hp)
    w_f = kparams["w_fused"]              # (2Hp, 4Hp)
    b_f = kparams["b_fused"]              # (1, 4Hp) f32
    H = kparams["hidden_size"]
    Hp = kparams["hidden_padded"]
    wdt = w_f.dtype

    tokens = jnp.asarray(tokens, jnp.int32).reshape(-1)
    T = int(tokens.shape[0])
    if T < 1:
        raise ValueError("encoder_rnn_encode requires at least one token")
    Tp = _round_up(T, TS)

    # Pre-gather embeddings in the wrapper: one contiguous (Tp, Hp) input slab
    # (blocked (TS, Hp) DMAs) instead of T tiny in-kernel row gathers.
    # Padded tail rows are zero (their outputs are discarded below).
    x_seq = jnp.take(emb_p, tokens, axis=0)                        # (T, Hp)
    x_pad = jnp.zeros((Tp, Hp), wdt).at[:T, :].set(x_seq.astype(wdt))

    # Zero-padded lanes of h0 keep padded hidden lanes exactly 0 (see prepare_*).
    h0 = jnp.zeros((1, Hp), jnp.float32).at[:, :H].set(hidden.reshape(1, H))

    cost = pl.CostEstimate(
        flops=int(Tp) * 2 * (2 * Hp) * (4 * Hp),
        transcendentals=int(Tp) * 3 * Hp,
        bytes_accessed=int(w_f.size) * int(w_f.dtype.itemsize)
        + int(b_f.size) * 4
        + int(x_pad.size) * int(x_pad.dtype.itemsize)
        + int(Tp) * Hp * 4,
    )

    grid_spec = pltpu.PrefetchScalarGridSpec(
        num_scalar_prefetch=0,
        grid=(Tp // TS,),
        in_specs=[
            # Blocked embeddings: one (TS, Hp) tile per grid step.
            pl.BlockSpec((TS, Hp), lambda b: (b, 0)),
            # Constant block index -> fetched once, VMEM-resident for all steps.
            pl.BlockSpec((1, Hp), lambda b: (0, 0)),
            pl.BlockSpec((2 * Hp, 4 * Hp), lambda b: (0, 0)),
            pl.BlockSpec((1, 4 * Hp), lambda b: (0, 0)),
        ],
        out_specs=pl.BlockSpec((TS, Hp), lambda b: (b, 0)),
        scratch_shapes=[
            pltpu.VMEM((1, Hp), jnp.float32),   # carried hidden state (f32)
            pltpu.VMEM((1, 2 * Hp), wdt),       # staged [x | h] matmul LHS
        ],
    )

    outs_padded = pl.pallas_call(
        gru_block_kernel,
        grid_spec=grid_spec,
        out_shape=jax.ShapeDtypeStruct((Tp, Hp), jnp.float32),
        compiler_params=pltpu.CompilerParams(
            # The time recurrence is inherently serial.
            dimension_semantics=("arbitrary",)),
        cost_estimate=cost,
    )(x_pad, h0, w_f, b_f)

    outputs = outs_padded[:T, :H].reshape(T, 1, H)
    hidden_out = outs_padded[T - 1, :H].reshape(1, 1, H)
    return outputs, hidden_out


def encoder_rnn_forward(token, hidden, kparams):
    """PyTorch EncoderRNN.forward(input, hidden) equivalent (single token)."""
    outputs, hidden_out = encoder_rnn_encode(token, hidden, kparams)
    H = kparams["hidden_size"]
    return outputs.reshape(1, 1, H), hidden_out


def init_raw_params(key, input_size, hidden_size):
    """Deterministic synthetic parameters mirroring nn.Embedding + nn.GRU init."""
    H = hidden_size
    k_emb, k_wih, k_whh, k_bih, k_bhh = jax.random.split(key, 5)
    bound = 1.0 / jnp.sqrt(jnp.float32(H))
    return {
        "embedding": jax.random.normal(k_emb, (input_size, H), jnp.float32),
        "w_ih": jax.random.uniform(k_wih, (3 * H, H), jnp.float32, -bound, bound),
        "w_hh": jax.random.uniform(k_whh, (3 * H, H), jnp.float32, -bound, bound),
        "b_ih": jax.random.uniform(k_bih, (3 * H,), jnp.float32, -bound, bound),
        "b_hh": jax.random.uniform(k_bhh, (3 * H,), jnp.float32, -bound, bound),
    }


def prepare_kernel_params(raw, weight_dtype=jnp.float32):
    """Pad to lane-dense shapes and fuse the two GRU matmuls into one weight.

    Gate-chunk layout along the fused 4*Hp axis: [r | z | gi_n | gh_n]; the r/z
    chunks combine the x- and h-weights (r/z biases pre-summed).  Padded
    rows/cols are zero so padded hidden lanes stay exactly 0 across steps.
    weight_dtype=jnp.bfloat16 halves weight HBM/VMEM traffic on ALL TPU
    generations (the MXU takes bf16 inputs with f32 accumulation, including
    v5e); the f32 hidden carry is rounded to bf16 only when staged into the
    matmul LHS, so rounding error compounds slowly over long sequences —
    a precision tradeoff, not a bug.
    """
    emb, w_ih, w_hh = raw["embedding"], raw["w_ih"], raw["w_hh"]
    b_ih, b_hh = raw["b_ih"], raw["b_hh"]
    V, H = emb.shape
    Hp = _round_up(H, 128)

    w_ih_t = w_ih.T  # (H, 3H), gate cols [r | z | n]
    w_hh_t = w_hh.T

    W = jnp.zeros((2 * Hp, 4 * Hp), jnp.float32)
    # x rows (0:H)
    W = W.at[0:H, 0:H].set(w_ih_t[:, 0:H])                             # x -> r
    W = W.at[0:H, Hp:Hp + H].set(w_ih_t[:, H:2 * H])                   # x -> z
    W = W.at[0:H, 2 * Hp:2 * Hp + H].set(w_ih_t[:, 2 * H:3 * H])       # x -> gi_n
    # h rows (Hp:Hp+H)
    W = W.at[Hp:Hp + H, 0:H].set(w_hh_t[:, 0:H])                       # h -> r
    W = W.at[Hp:Hp + H, Hp:Hp + H].set(w_hh_t[:, H:2 * H])             # h -> z
    W = W.at[Hp:Hp + H, 3 * Hp:3 * Hp + H].set(w_hh_t[:, 2 * H:3 * H]) # h -> gh_n

    b = jnp.zeros((1, 4 * Hp), jnp.float32)
    b = b.at[0, 0:H].set(b_ih[0:H] + b_hh[0:H])
    b = b.at[0, Hp:Hp + H].set(b_ih[H:2 * H] + b_hh[H:2 * H])
    b = b.at[0, 2 * Hp:2 * Hp + H].set(b_ih[2 * H:3 * H])
    b = b.at[0, 3 * Hp:3 * Hp + H].set(b_hh[2 * H:3 * H])

    emb_p = jnp.zeros((V, Hp), jnp.float32).at[:, :H].set(emb)

    return {
        "embedding_padded": emb_p.astype(weight_dtype),
        "w_fused": W.astype(weight_dtype),
        "b_fused": b,                       # keep f32 (added to f32 accumulation)
        "hidden_size": H,
        "hidden_padded": Hp,
    }


def reference_encode(tokens, hidden, raw):
    """Pure-JAX reference implementing PyTorch nn.GRU semantics over a sequence."""
    emb, w_ih, w_hh = raw["embedding"], raw["w_ih"], raw["w_hh"]
    b_ih, b_hh = raw["b_ih"], raw["b_hh"]
    H = emb.shape[1]

    def step(h, tok):
        x = emb[tok].reshape(1, H)
        gi = x @ w_ih.T + b_ih
        gh = h @ w_hh.T + b_hh
        r = jax.nn.sigmoid(gi[:, :H] + gh[:, :H])
        z = jax.nn.sigmoid(gi[:, H:2 * H] + gh[:, H:2 * H])
        n = jnp.tanh(gi[:, 2 * H:] + r * gh[:, 2 * H:])
        h_new = (1.0 - z) * n + z * h
        return h_new, h_new[0]

    h0 = hidden.reshape(1, H)
    h_f, outs = jax.lax.scan(step, h0, jnp.asarray(tokens, jnp.int32).reshape(-1))
    return outs.reshape(-1, 1, H), h_f.reshape(1, 1, H)


if __name__ == "__main__":
    INPUT_SIZE = 10   # vocab size
    HIDDEN = 32
    SEQ_LEN = 8

    key = jax.random.PRNGKey(0)
    k_params, k_tok, k_hid = jax.random.split(key, 3)

    raw = init_raw_params(k_params, INPUT_SIZE, HIDDEN)
    tokens = jax.random.randint(k_tok, (SEQ_LEN,), 0, INPUT_SIZE, dtype=jnp.int32)
    hidden0 = jax.random.normal(k_hid, (1, 1, HIDDEN), jnp.float32)

    outs_ref, h_ref = reference_encode(tokens, hidden0, raw)

    # ---- f32 weights: exact match vs the PyTorch-semantics reference ----
    kp32 = prepare_kernel_params(raw, jnp.float32)
    outs, h_fin = encoder_rnn_encode(tokens, hidden0, kp32)
    outs = jax.block_until_ready(outs)
    h_fin = jax.block_until_ready(h_fin)
    assert outs.shape == (SEQ_LEN, 1, HIDDEN) and h_fin.shape == (1, 1, HIDDEN)
    assert jnp.allclose(outs, outs_ref, atol=1e-5, rtol=1e-5)
    assert jnp.allclose(h_fin, h_ref, atol=1e-5, rtol=1e-5)

    # ---- T not a multiple of TS: multi-block hidden carry + tail padding ----
    k_tok2 = jax.random.fold_in(k_tok, 1)
    tokens_long = jax.random.randint(k_tok2, (21,), 0, INPUT_SIZE, dtype=jnp.int32)
    outs_l_ref, h_l_ref = reference_encode(tokens_long, hidden0, raw)
    outs_l, h_l = encoder_rnn_encode(tokens_long, hidden0, kp32)
    outs_l = jax.block_until_ready(outs_l)
    h_l = jax.block_until_ready(h_l)
    assert outs_l.shape == (21, 1, HIDDEN)
    assert jnp.allclose(outs_l, outs_l_ref, atol=1e-5, rtol=1e-5)
    assert jnp.allclose(h_l, h_l_ref, atol=1e-5, rtol=1e-5)

    # ---- single-token forward (EncoderRNN.forward semantics) ----
    out1, h1 = encoder_rnn_forward(tokens[:1], hidden0, kp32)
    out1 = jax.block_until_ready(out1)
    out1_ref, h1_ref = reference_encode(tokens[:1], hidden0, raw)
    assert out1.shape == (1, 1, HIDDEN) and h1.shape == (1, 1, HIDDEN)
    assert jnp.allclose(out1, out1_ref, atol=1e-5, rtol=1e-5)
    assert jnp.allclose(h1, h1_ref, atol=1e-5, rtol=1e-5)

    # ---- bf16 weights (all generations): half the weight HBM/VMEM traffic ----
    kp_bf16 = prepare_kernel_params(raw, jnp.bfloat16)
    outs_bf, _ = encoder_rnn_encode(tokens, hidden0, kp_bf16)
    outs_bf = jax.block_until_ready(outs_bf)
    assert jnp.allclose(outs_bf, outs_ref, atol=1e-1, rtol=5e-2)

    print("KERNEL_OK")
</pallas_src>

<mosaic_0001>
module attributes {stable_mosaic.version = 11 : i64} {
  func.func @gru_block_kernel(%arg0: i32, %arg1: memref<8x128xf32, #tpu.memory_space<vmem>>, %arg2: memref<1x128xf32, #tpu.memory_space<vmem>>, %arg3: memref<256x512xf32, #tpu.memory_space<vmem>>, %arg4: memref<1x512xf32, #tpu.memory_space<vmem>>, %arg5: memref<8x128xf32, #tpu.memory_space<vmem>>, %arg6: memref<1x128xf32, #tpu.memory_space<vmem>>, %arg7: memref<1x256xf32, #tpu.memory_space<vmem>>) attributes {dimension_semantics = [#tpu.dimension_semantics<arbitrary>], iteration_bounds = array<i64: 1>, scalar_prefetch = 0 : i64, scratch_operands = 2 : i64, tpu.core_type = #tpu.core_type<tc>, window_params = [{transform_indices = @transform_0, window_bounds = array<i64: 8, 128>}, {pipeline_mode = #tpu.pipeline_mode<synchronous>, transform_indices = @transform_1, window_bounds = array<i64: 1, 128>}, {pipeline_mode = #tpu.pipeline_mode<synchronous>, transform_indices = @transform_2, window_bounds = array<i64: 256, 512>}, {pipeline_mode = #tpu.pipeline_mode<synchronous>, transform_indices = @transform_3, window_bounds = array<i64: 1, 512>}, {transform_indices = @transform_4, window_bounds = array<i64: 8, 128>}]} {
    %c0_i32 = arith.constant 0 : i32
    %0 = arith.cmpi eq, %arg0, %c0_i32 : i32
    %1 = arith.extui %0 : i1 to i32
    %c0_i32_0 = arith.constant 0 : i32
    %2 = arith.cmpi ne, %1, %c0_i32_0 : i32
    scf.if %2 {
      %c0_131 = arith.constant 0 : index
      %c0_132 = arith.constant 0 : index
      %269 = vector.load %arg2[%c0_131, %c0_132] : memref<1x128xf32, #tpu.memory_space<vmem>>, vector<1x128xf32>
      %c0_133 = arith.constant 0 : index
      %c0_134 = arith.constant 0 : index
      %270 = vector.load %arg6[%c0_133, %c0_134] : memref<1x128xf32, #tpu.memory_space<vmem>>, vector<1x128xf32>
      tpu.vector_store %arg6[%c0_133, %c0_134], %269 {strides = array<i32>} : memref<1x128xf32, #tpu.memory_space<vmem>>, vector<1x128xf32>,
    } else {
    }
    %c0 = arith.constant 0 : index
    %c0_1 = arith.constant 0 : index
    %3 = vector.load %arg6[%c0, %c0_1] : memref<1x128xf32, #tpu.memory_space<vmem>>, vector<1x128xf32>
    %c0_i32_2 = arith.constant 0 : i32
    %4 = arith.index_cast %c0_i32_2 : i32 to index
    %c0_3 = arith.constant 0 : index
    %5 = vector.load %arg1[%4, %c0_3] : memref<8x128xf32, #tpu.memory_space<vmem>>, vector<1x128xf32>
    %c0_4 = arith.constant 0 : index
    %c0_5 = arith.constant 0 : index
    %6 = vector.load %arg7[%c0_4, %c0_5] : memref<1x256xf32, #tpu.memory_space<vmem>>, vector<1x128xf32>
    tpu.vector_store %arg7[%c0_4, %c0_5], %5 {strides = array<i32>} : memref<1x256xf32, #tpu.memory_space<vmem>>, vector<1x128xf32>,
    %c0_6 = arith.constant 0 : index
    %c128 = arith.constant 128 : index
    %7 = vector.load %arg7[%c0_6, %c128] : memref<1x256xf32, #tpu.memory_space<vmem>>, vector<1x128xf32>
    tpu.vector_store %arg7[%c0_6, %c128], %3 {strides = array<i32>} : memref<1x256xf32, #tpu.memory_space<vmem>>, vector<1x128xf32>,
    %c0_7 = arith.constant 0 : index
    %c0_8 = arith.constant 0 : index
    %8 = vector.load %arg7[%c0_7, %c0_8] : memref<1x256xf32, #tpu.memory_space<vmem>>, vector<1x256xf32>
    %c0_9 = arith.constant 0 : index
    %c0_10 = arith.constant 0 : index
    %9 = vector.load %arg3[%c0_9, %c0_10] : memref<256x512xf32, #tpu.memory_space<vmem>>, vector<256x512xf32>
    %cst = arith.constant dense<0.000000e+00> : vector<1x512xf32>
    %10 = tpu.matmul %8, %9, %cst {dimension_numbers = #tpu.dot_dimension_numbers<[1], [0], [0], [1], [0, 0, 1, 1], [], []>} : vector<1x256xf32>, vector<256x512xf32>, vector<1x512xf32> -> vector<1x512xf32>
    %c0_11 = arith.constant 0 : index
    %c0_12 = arith.constant 0 : index
    %11 = vector.load %arg4[%c0_11, %c0_12] : memref<1x512xf32, #tpu.memory_space<vmem>>, vector<1x512xf32>
    %12 = arith.addf %10, %11 : vector<1x512xf32>
    %13 = vector.extract_strided_slice %12 {offsets = [0, 0], sizes = [1, 128], strides = [1, 1]} : vector<1x512xf32> to vector<1x128xf32>
    %14 = arith.negf %13 : vector<1x128xf32>
    %15 = math.exp %14 : vector<1x128xf32>
    %cst_13 = arith.constant 1.000000e+00 : f32
    %16 = vector.broadcast %cst_13 : f32 to vector<1x128xf32>
    %17 = arith.addf %16, %15 : vector<1x128xf32>
    %18 = arith.divf %16, %17 : vector<1x128xf32>
    %19 = vector.extract_strided_slice %12 {offsets = [0, 128], sizes = [1, 128], strides = [1, 1]} : vector<1x512xf32> to vector<1x128xf32>
    %20 = arith.negf %19 : vector<1x128xf32>
    %21 = math.exp %20 : vector<1x128xf32>
    %cst_14 = arith.constant 1.000000e+00 : f32
    %22 = vector.broadcast %cst_14 : f32 to vector<1x128xf32>
    %23 = arith.addf %22, %21 : vector<1x128xf32>
    %24 = arith.divf %22, %23 : vector<1x128xf32>
    %25 = vector.extract_strided_slice %12 {offsets = [0, 256], sizes = [1, 128], strides = [1, 1]} : vector<1x512xf32> to vector<1x128xf32>
    %26 = vector.extract_strided_slice %12 {offsets = [0, 384], sizes = [1, 128], strides = [1, 1]} : vector<1x512xf32> to vector<1x128xf32>
    %27 = arith.mulf %18, %26 : vector<1x128xf32>
    %28 = arith.addf %25, %27 : vector<1x128xf32>
    %29 = math.tanh %28 : vector<1x128xf32>
    %cst_15 = arith.constant 1.000000e+00 : f32
    %30 = vector.broadcast %cst_15 : f32 to vector<1x128xf32>
    %31 = arith.subf %30, %24 : vector<1x128xf32>
    %32 = arith.mulf %31, %29 : vector<1x128xf32>
    %33 = arith.mulf %24, %3 : vector<1x128xf32>
    %34 = arith.addf %32, %33 : vector<1x128xf32>
    %35 = arith.index_cast %c0_i32_2 : i32 to index
    %c0_16 = arith.constant 0 : index
    %36 = vector.load %arg5[%35, %c0_16] : memref<8x128xf32, #tpu.memory_space<vmem>>, vector<1x128xf32>
    tpu.vector_store %arg5[%35, %c0_16], %34 {strides = array<i32>} : memref<8x128xf32, #tpu.memory_space<vmem>>, vector<1x128xf32>,
    %c1_i32 = arith.constant 1 : i32
    %37 = arith.index_cast %c1_i32 : i32 to index
    %c0_17 = arith.constant 0 : index
    %38 = vector.load %arg1[%37, %c0_17] : memref<8x128xf32, #tpu.memory_space<vmem>>, vector<1x128xf32>
    %c0_18 = arith.constant 0 : index
    %c0_19 = arith.constant 0 : index
    %39 = vector.load %arg7[%c0_18, %c0_19] : memref<1x256xf32, #tpu.memory_space<vmem>>, vector<1x128xf32>
    tpu.vector_store %arg7[%c0_18, %c0_19], %38 {strides = array<i32>} : memref<1x256xf32, #tpu.memory_space<vmem>>, vector<1x128xf32>,
    %c0_20 = arith.constant 0 : index
    %c128_21 = arith.constant 128 : index
    %40 = vector.load %arg7[%c0_20, %c128_21] : memref<1x256xf32, #tpu.memory_space<vmem>>, vector<1x128xf32>
    tpu.vector_store %arg7[%c0_20, %c128_21], %34 {strides = array<i32>} : memref<1x256xf32, #tpu.memory_space<vmem>>, vector<1x128xf32>,
    %c0_22 = arith.constant 0 : index
    %c0_23 = arith.constant 0 : index
    %41 = vector.load %arg7[%c0_22, %c0_23] : memref<1x256xf32, #tpu.memory_space<vmem>>, vector<1x256xf32>
    %c0_24 = arith.constant 0 : index
    %c0_25 = arith.constant 0 : index
    %42 = vector.load %arg3[%c0_24, %c0_25] : memref<256x512xf32, #tpu.memory_space<vmem>>, vector<256x512xf32>
    %cst_26 = arith.constant dense<0.000000e+00> : vector<1x512xf32>
    %43 = tpu.matmul %41, %42, %cst_26 {dimension_numbers = #tpu.dot_dimension_numbers<[1], [0], [0], [1], [0, 0, 1, 1], [], []>} : vector<1x256xf32>, vector<256x512xf32>, vector<1x512xf32> -> vector<1x512xf32>
    %c0_27 = arith.constant 0 : index
    %c0_28 = arith.constant 0 : index
    %44 = vector.load %arg4[%c0_27, %c0_28] : memref<1x512xf32, #tpu.memory_space<vmem>>, vector<1x512xf32>
    %45 = arith.addf %43, %44 : vector<1x512xf32>
    %46 = vector.extract_strided_slice %45 {offsets = [0, 0], sizes = [1, 128], strides = [1, 1]} : vector<1x512xf32> to vector<1x128xf32>
    %47 = arith.negf %46 : vector<1x128xf32>
    %48 = math.exp %47 : vector<1x128xf32>
    %cst_29 = arith.constant 1.000000e+00 : f32
    %49 = vector.broadcast %cst_29 : f32 to vector<1x128xf32>
    %50 = arith.addf %49, %48 : vector<1x128xf32>
    %51 = arith.divf %49, %50 : vector<1x128xf32>
    %52 = vector.extract_strided_slice %45 {offsets = [0, 128], sizes = [1, 128], strides = [1, 1]} : vector<1x512xf32> to vector<1x128xf32>
    %53 = arith.negf %52 : vector<1x128xf32>
    %54 = math.exp %53 : vector<1x128xf32>
    %cst_30 = arith.constant 1.000000e+00 : f32
    %55 = vector.broadcast %cst_30 : f32 to vector<1x128xf32>
    %56 = arith.addf %55, %54 : vector<1x128xf32>
    %57 = arith.divf %55, %56 : vector<1x128xf32>
    %58 = vector.extract_strided_slice %45 {offsets = [0, 256], sizes = [1, 128], strides = [1, 1]} : vector<1x512xf32> to vector<1x128xf32>
    %59 = vector.extract_strided_slice %45 {offsets = [0, 384], sizes = [1, 128], strides = [1, 1]} : vector<1x512xf32> to vector<1x128xf32>
    %60 = arith.mulf %51, %59 : vector<1x128xf32>
    %61 = arith.addf %58, %60 : vector<1x128xf32>
    %62 = math.tanh %61 : vector<1x128xf32>
    %cst_31 = arith.constant 1.000000e+00 : f32
    %63 = vector.broadcast %cst_31 : f32 to vector<1x128xf32>
    %64 = arith.subf %63, %57 : vector<1x128xf32>
    %65 = arith.mulf %64, %62 : vector<1x128xf32>
    %66 = arith.mulf %57, %34 : vector<1x128xf32>
    %67 = arith.addf %65, %66 : vector<1x128xf32>
    %68 = arith.index_cast %c1_i32 : i32 to index
    %c0_32 = arith.constant 0 : index
    %69 = vector.load %arg5[%68, %c0_32] : memref<8x128xf32, #tpu.memory_space<vmem>>, vector<1x128xf32>
    tpu.vector_store %arg5[%68, %c0_32], %67 {strides = array<i32>} : memref<8x128xf32, #tpu.memory_space<vmem>>, vector<1x128xf32>,
    %c2_i32 = arith.constant 2 : i32
    %70 = arith.index_cast %c2_i32 : i32 to index
    %c0_33 = arith.constant 0 : index
    %71 = vector.load %arg1[%70, %c0_33] : memref<8x128xf32, #tpu.memory_space<vmem>>, vector<1x128xf32>
    %c0_34 = arith.constant 0 : index
    %c0_35 = arith.constant 0 : index
    %72 = vector.load %arg7[%c0_34, %c0_35] : memref<1x256xf32, #tpu.memory_space<vmem>>, vector<1x128xf32>
    tpu.vector_store %arg7[%c0_34, %c0_35], %71 {strides = array<i32>} : memref<1x256xf32, #tpu.memory_space<vmem>>, vector<1x128xf32>,
    %c0_36 = arith.constant 0 : index
    %c128_37 = arith.constant 128 : index
    %73 = vector.load %arg7[%c0_36, %c128_37] : memref<1x256xf32, #tpu.memory_space<vmem>>, vector<1x128xf32>
    tpu.vector_store %arg7[%c0_36, %c128_37], %67 {strides = array<i32>} : memref<1x256xf32, #tpu.memory_space<vmem>>, vector<1x128xf32>,
    %c0_38 = arith.constant 0 : index
    %c0_39 = arith.constant 0 : index
    %74 = vector.load %arg7[%c0_38, %c0_39] : memref<1x256xf32, #tpu.memory_space<vmem>>, vector<1x256xf32>
    %c0_40 = arith.constant 0 : index
    %c0_41 = arith.constant 0 : index
    %75 = vector.load %arg3[%c0_40, %c0_41] : memref<256x512xf32, #tpu.memory_space<vmem>>, vector<256x512xf32>
    %cst_42 = arith.constant dense<0.000000e+00> : vector<1x512xf32>
    %76 = tpu.matmul %74, %75, %cst_42 {dimension_numbers = #tpu.dot_dimension_numbers<[1], [0], [0], [1], [0, 0, 1, 1], [], []>} : vector<1x256xf32>, vector<256x512xf32>, vector<1x512xf32> -> vector<1x512xf32>
    %c0_43 = arith.constant 0 : index
    %c0_44 = arith.constant 0 : index
    %77 = vector.load %arg4[%c0_43, %c0_44] : memref<1x512xf32, #tpu.memory_space<vmem>>, vector<1x512xf32>
    %78 = arith.addf %76, %77 : vector<1x512xf32>
    %79 = vector.extract_strided_slice %78 {offsets = [0, 0], sizes = [1, 128], strides = [1, 1]} : vector<1x512xf32> to vector<1x128xf32>
    %80 = arith.negf %79 : vector<1x128xf32>
    %81 = math.exp %80 : vector<1x128xf32>
    %cst_45 = arith.constant 1.000000e+00 : f32
    %82 = vector.broadcast %cst_45 : f32 to vector<1x128xf32>
    %83 = arith.addf %82, %81 : vector<1x128xf32>
    %84 = arith.divf %82, %83 : vector<1x128xf32>
    %85 = vector.extract_strided_slice %78 {offsets = [0, 128], sizes = [1, 128], strides = [1, 1]} : vector<1x512xf32> to vector<1x128xf32>
    %86 = arith.negf %85 : vector<1x128xf32>
    %87 = math.exp %86 : vector<1x128xf32>
    %cst_46 = arith.constant 1.000000e+00 : f32
    %88 = vector.broadcast %cst_46 : f32 to vector<1x128xf32>
    %89 = arith.addf %88, %87 : vector<1x128xf32>
    %90 = arith.divf %88, %89 : vector<1x128xf32>
    %91 = vector.extract_strided_slice %78 {offsets = [0, 256], sizes = [1, 128], strides = [1, 1]} : vector<1x512xf32> to vector<1x128xf32>
    %92 = vector.extract_strided_slice %78 {offsets = [0, 384], sizes = [1, 128], strides = [1, 1]} : vector<1x512xf32> to vector<1x128xf32>
    %93 = arith.mulf %84, %92 : vector<1x128xf32>
    %94 = arith.addf %91, %93 : vector<1x128xf32>
    %95 = math.tanh %94 : vector<1x128xf32>
    %cst_47 = arith.constant 1.000000e+00 : f32
    %96 = vector.broadcast %cst_47 : f32 to vector<1x128xf32>
    %97 = arith.subf %96, %90 : vector<1x128xf32>
    %98 = arith.mulf %97, %95 : vector<1x128xf32>
    %99 = arith.mulf %90, %67 : vector<1x128xf32>
    %100 = arith.addf %98, %99 : vector<1x128xf32>
    %101 = arith.index_cast %c2_i32 : i32 to index
    %c0_48 = arith.constant 0 : index
    %102 = vector.load %arg5[%101, %c0_48] : memref<8x128xf32, #tpu.memory_space<vmem>>, vector<1x128xf32>
    tpu.vector_store %arg5[%101, %c0_48], %100 {strides = array<i32>} : memref<8x128xf32, #tpu.memory_space<vmem>>, vector<1x128xf32>,
    %c3_i32 = arith.constant 3 : i32
    %103 = arith.index_cast %c3_i32 : i32 to index
    %c0_49 = arith.constant 0 : index
    %104 = vector.load %arg1[%103, %c0_49] : memref<8x128xf32, #tpu.memory_space<vmem>>, vector<1x128xf32>
    %c0_50 = arith.constant 0 : index
    %c0_51 = arith.constant 0 : index
    %105 = vector.load %arg7[%c0_50, %c0_51] : memref<1x256xf32, #tpu.memory_space<vmem>>, vector<1x128xf32>
    tpu.vector_store %arg7[%c0_50, %c0_51], %104 {strides = array<i32>} : memref<1x256xf32, #tpu.memory_space<vmem>>, vector<1x128xf32>,
    %c0_52 = arith.constant 0 : index
    %c128_53 = arith.constant 128 : index
    %106 = vector.load %arg7[%c0_52, %c128_53] : memref<1x256xf32, #tpu.memory_space<vmem>>, vector<1x128xf32>
    tpu.vector_store %arg7[%c0_52, %c128_53], %100 {strides = array<i32>} : memref<1x256xf32, #tpu.memory_space<vmem>>, vector<1x128xf32>,
    %c0_54 = arith.constant 0 : index
    %c0_55 = arith.constant 0 : index
    %107 = vector.load %arg7[%c0_54, %c0_55] : memref<1x256xf32, #tpu.memory_space<vmem>>, vector<1x256xf32>
    %c0_56 = arith.constant 0 : index
    %c0_57 = arith.constant 0 : index
    %108 = vector.load %arg3[%c0_56, %c0_57] : memref<256x512xf32, #tpu.memory_space<vmem>>, vector<256x512xf32>
    %cst_58 = arith.constant dense<0.000000e+00> : vector<1x512xf32>
    %109 = tpu.matmul %107, %108, %cst_58 {dimension_numbers = #tpu.dot_dimension_numbers<[1], [0], [0], [1], [0, 0, 1, 1], [], []>} : vector<1x256xf32>, vector<256x512xf32>, vector<1x512xf32> -> vector<1x512xf32>
    %c0_59 = arith.constant 0 : index
    %c0_60 = arith.constant 0 : index
    %110 = vector.load %arg4[%c0_59, %c0_60] : memref<1x512xf32, #tpu.memory_space<vmem>>, vector<1x512xf32>
    %111 = arith.addf %109, %110 : vector<1x512xf32>
    %112 = vector.extract_strided_slice %111 {offsets = [0, 0], sizes = [1, 128], strides = [1, 1]} : vector<1x512xf32> to vector<1x128xf32>
    %113 = arith.negf %112 : vector<1x128xf32>
    %114 = math.exp %113 : vector<1x128xf32>
    %cst_61 = arith.constant 1.000000e+00 : f32
    %115 = vector.broadcast %cst_61 : f32 to vector<1x128xf32>
    %116 = arith.addf %115, %114 : vector<1x128xf32>
    %117 = arith.divf %115, %116 : vector<1x128xf32>
    %118 = vector.extract_strided_slice %111 {offsets = [0, 128], sizes = [1, 128], strides = [1, 1]} : vector<1x512xf32> to vector<1x128xf32>
    %119 = arith.negf %118 : vector<1x128xf32>
    %120 = math.exp %119 : vector<1x128xf32>
    %cst_62 = arith.constant 1.000000e+00 : f32
    %121 = vector.broadcast %cst_62 : f32 to vector<1x128xf32>
    %122 = arith.addf %121, %120 : vector<1x128xf32>
    %123 = arith.divf %121, %122 : vector<1x128xf32>
    %124 = vector.extract_strided_slice %111 {offsets = [0, 256], sizes = [1, 128], strides = [1, 1]} : vector<1x512xf32> to vector<1x128xf32>
    %125 = vector.extract_strided_slice %111 {offsets = [0, 384], sizes = [1, 128], strides = [1, 1]} : vector<1x512xf32> to vector<1x128xf32>
    %126 = arith.mulf %117, %125 : vector<1x128xf32>
    %127 = arith.addf %124, %126 : vector<1x128xf32>
    %128 = math.tanh %127 : vector<1x128xf32>
    %cst_63 = arith.constant 1.000000e+00 : f32
    %129 = vector.broadcast %cst_63 : f32 to vector<1x128xf32>
    %130 = arith.subf %129, %123 : vector<1x128xf32>
    %131 = arith.mulf %130, %128 : vector<1x128xf32>
    %132 = arith.mulf %123, %100 : vector<1x128xf32>
    %133 = arith.addf %131, %132 : vector<1x128xf32>
    %134 = arith.index_cast %c3_i32 : i32 to index
    %c0_64 = arith.constant 0 : index
    %135 = vector.load %arg5[%134, %c0_64] : memref<8x128xf32, #tpu.memory_space<vmem>>, vector<1x128xf32>
    tpu.vector_store %arg5[%134, %c0_64], %133 {strides = array<i32>} : memref<8x128xf32, #tpu.memory_space<vmem>>, vector<1x128xf32>,
    %c4_i32 = arith.constant 4 : i32
    %136 = arith.index_cast %c4_i32 : i32 to index
    %c0_65 = arith.constant 0 : index
    %137 = vector.load %arg1[%136, %c0_65] : memref<8x128xf32, #tpu.memory_space<vmem>>, vector<1x128xf32>
    %c0_66 = arith.constant 0 : index
    %c0_67 = arith.constant 0 : index
    %138 = vector.load %arg7[%c0_66, %c0_67] : memref<1x256xf32, #tpu.memory_space<vmem>>, vector<1x128xf32>
    tpu.vector_store %arg7[%c0_66, %c0_67], %137 {strides = array<i32>} : memref<1x256xf32, #tpu.memory_space<vmem>>, vector<1x128xf32>,
    %c0_68 = arith.constant 0 : index
    %c128_69 = arith.constant 128 : index
    %139 = vector.load %arg7[%c0_68, %c128_69] : memref<1x256xf32, #tpu.memory_space<vmem>>, vector<1x128xf32>
    tpu.vector_store %arg7[%c0_68, %c128_69], %133 {strides = array<i32>} : memref<1x256xf32, #tpu.memory_space<vmem>>, vector<1x128xf32>,
    %c0_70 = arith.constant 0 : index
    %c0_71 = arith.constant 0 : index
    %140 = vector.load %arg7[%c0_70, %c0_71] : memref<1x256xf32, #tpu.memory_space<vmem>>, vector<1x256xf32>
    %c0_72 = arith.constant 0 : index
    %c0_73 = arith.constant 0 : index
    %141 = vector.load %arg3[%c0_72, %c0_73] : memref<256x512xf32, #tpu.memory_space<vmem>>, vector<256x512xf32>
    %cst_74 = arith.constant dense<0.000000e+00> : vector<1x512xf32>
    %142 = tpu.matmul %140, %141, %cst_74 {dimension_numbers = #tpu.dot_dimension_numbers<[1], [0], [0], [1], [0, 0, 1, 1], [], []>} : vector<1x256xf32>, vector<256x512xf32>, vector<1x512xf32> -> vector<1x512xf32>
    %c0_75 = arith.constant 0 : index
    %c0_76 = arith.constant 0 : index
    %143 = vector.load %arg4[%c0_75, %c0_76] : memref<1x512xf32, #tpu.memory_space<vmem>>, vector<1x512xf32>
    %144 = arith.addf %142, %143 : vector<1x512xf32>
    %145 = vector.extract_strided_slice %144 {offsets = [0, 0], sizes = [1, 128], strides = [1, 1]} : vector<1x512xf32> to vector<1x128xf32>
    %146 = arith.negf %145 : vector<1x128xf32>
    %147 = math.exp %146 : vector<1x128xf32>
    %cst_77 = arith.constant 1.000000e+00 : f32
    %148 = vector.broadcast %cst_77 : f32 to vector<1x128xf32>
    %149 = arith.addf %148, %147 : vector<1x128xf32>
    %150 = arith.divf %148, %149 : vector<1x128xf32>
    %151 = vector.extract_strided_slice %144 {offsets = [0, 128], sizes = [1, 128], strides = [1, 1]} : vector<1x512xf32> to vector<1x128xf32>
    %152 = arith.negf %151 : vector<1x128xf32>
    %153 = math.exp %152 : vector<1x128xf32>
    %cst_78 = arith.constant 1.000000e+00 : f32
    %154 = vector.broadcast %cst_78 : f32 to vector<1x128xf32>
    %155 = arith.addf %154, %153 : vector<1x128xf32>
    %156 = arith.divf %154, %155 : vector<1x128xf32>
    %157 = vector.extract_strided_slice %144 {offsets = [0, 256], sizes = [1, 128], strides = [1, 1]} : vector<1x512xf32> to vector<1x128xf32>
    %158 = vector.extract_strided_slice %144 {offsets = [0, 384], sizes = [1, 128], strides = [1, 1]} : vector<1x512xf32> to vector<1x128xf32>
    %159 = arith.mulf %150, %158 : vector<1x128xf32>
    %160 = arith.addf %157, %159 : vector<1x128xf32>
    %161 = math.tanh %160 : vector<1x128xf32>
    %cst_79 = arith.constant 1.000000e+00 : f32
    %162 = vector.broadcast %cst_79 : f32 to vector<1x128xf32>
    %163 = arith.subf %162, %156 : vector<1x128xf32>
    %164 = arith.mulf %163, %161 : vector<1x128xf32>
    %165 = arith.mulf %156, %133 : vector<1x128xf32>
    %166 = arith.addf %164, %165 : vector<1x128xf32>
    %167 = arith.index_cast %c4_i32 : i32 to index
    %c0_80 = arith.constant 0 : index
    %168 = vector.load %arg5[%167, %c0_80] : memref<8x128xf32, #tpu.memory_space<vmem>>, vector<1x128xf32>
    tpu.vector_store %arg5[%167, %c0_80], %166 {strides = array<i32>} : memref<8x128xf32, #tpu.memory_space<vmem>>, vector<1x128xf32>,
    %c5_i32 = arith.constant 5 : i32
    %169 = arith.index_cast %c5_i32 : i32 to index
    %c0_81 = arith.constant 0 : index
    %170 = vector.load %arg1[%169, %c0_81] : memref<8x128xf32, #tpu.memory_space<vmem>>, vector<1x128xf32>
    %c0_82 = arith.constant 0 : index
    %c0_83 = arith.constant 0 : index
    %171 = vector.load %arg7[%c0_82, %c0_83] : memref<1x256xf32, #tpu.memory_space<vmem>>, vector<1x128xf32>
    tpu.vector_store %arg7[%c0_82, %c0_83], %170 {strides = array<i32>} : memref<1x256xf32, #tpu.memory_space<vmem>>, vector<1x128xf32>,
    %c0_84 = arith.constant 0 : index
    %c128_85 = arith.constant 128 : index
    %172 = vector.load %arg7[%c0_84, %c128_85] : memref<1x256xf32, #tpu.memory_space<vmem>>, vector<1x128xf32>
    tpu.vector_store %arg7[%c0_84, %c128_85], %166 {strides = array<i32>} : memref<1x256xf32, #tpu.memory_space<vmem>>, vector<1x128xf32>,
    %c0_86 = arith.constant 0 : index
    %c0_87 = arith.constant 0 : index
    %173 = vector.load %arg7[%c0_86, %c0_87] : memref<1x256xf32, #tpu.memory_space<vmem>>, vector<1x256xf32>
    %c0_88 = arith.constant 0 : index
    %c0_89 = arith.constant 0 : index
    %174 = vector.load %arg3[%c0_88, %c0_89] : memref<256x512xf32, #tpu.memory_space<vmem>>, vector<256x512xf32>
    %cst_90 = arith.constant dense<0.000000e+00> : vector<1x512xf32>
    %175 = tpu.matmul %173, %174, %cst_90 {dimension_numbers = #tpu.dot_dimension_numbers<[1], [0], [0], [1], [0, 0, 1, 1], [], []>} : vector<1x256xf32>, vector<256x512xf32>, vector<1x512xf32> -> vector<1x512xf32>
    %c0_91 = arith.constant 0 : index
    %c0_92 = arith.constant 0 : index
    %176 = vector.load %arg4[%c0_91, %c0_92] : memref<1x512xf32, #tpu.memory_space<vmem>>, vector<1x512xf32>
    %177 = arith.addf %175, %176 : vector<1x512xf32>
    %178 = vector.extract_strided_slice %177 {offsets = [0, 0], sizes = [1, 128], strides = [1, 1]} : vector<1x512xf32> to vector<1x128xf32>
    %179 = arith.negf %178 : vector<1x128xf32>
    %180 = math.exp %179 : vector<1x128xf32>
    %cst_93 = arith.constant 1.000000e+00 : f32
    %181 = vector.broadcast %cst_93 : f32 to vector<1x128xf32>
    %182 = arith.addf %181, %180 : vector<1x128xf32>
    %183 = arith.divf %181, %182 : vector<1x128xf32>
    %184 = vector.extract_strided_slice %177 {offsets = [0, 128], sizes = [1, 128], strides = [1, 1]} : vector<1x512xf32> to vector<1x128xf32>
    %185 = arith.negf %184 : vector<1x128xf32>
    %186 = math.exp %185 : vector<1x128xf32>
    %cst_94 = arith.constant 1.000000e+00 : f32
    %187 = vector.broadcast %cst_94 : f32 to vector<1x128xf32>
    %188 = arith.addf %187, %186 : vector<1x128xf32>
    %189 = arith.divf %187, %188 : vector<1x128xf32>
    %190 = vector.extract_strided_slice %177 {offsets = [0, 256], sizes = [1, 128], strides = [1, 1]} : vector<1x512xf32> to vector<1x128xf32>
    %191 = vector.extract_strided_slice %177 {offsets = [0, 384], sizes = [1, 128], strides = [1, 1]} : vector<1x512xf32> to vector<1x128xf32>
    %192 = arith.mulf %183, %191 : vector<1x128xf32>
    %193 = arith.addf %190, %192 : vector<1x128xf32>
    %194 = math.tanh %193 : vector<1x128xf32>
    %cst_95 = arith.constant 1.000000e+00 : f32
    %195 = vector.broadcast %cst_95 : f32 to vector<1x128xf32>
    %196 = arith.subf %195, %189 : vector<1x128xf32>
    %197 = arith.mulf %196, %194 : vector<1x128xf32>
    %198 = arith.mulf %189, %166 : vector<1x128xf32>
    %199 = arith.addf %197, %198 : vector<1x128xf32>
    %200 = arith.index_cast %c5_i32 : i32 to index
    %c0_96 = arith.constant 0 : index
    %201 = vector.load %arg5[%200, %c0_96] : memref<8x128xf32, #tpu.memory_space<vmem>>, vector<1x128xf32>
    tpu.vector_store %arg5[%200, %c0_96], %199 {strides = array<i32>} : memref<8x128xf32, #tpu.memory_space<vmem>>, vector<1x128xf32>,
    %c6_i32 = arith.constant 6 : i32
    %202 = arith.index_cast %c6_i32 : i32 to index
    %c0_97 = arith.constant 0 : index
    %203 = vector.load %arg1[%202, %c0_97] : memref<8x128xf32, #tpu.memory_space<vmem>>, vector<1x128xf32>
    %c0_98 = arith.constant 0 : index
    %c0_99 = arith.constant 0 : index
    %204 = vector.load %arg7[%c0_98, %c0_99] : memref<1x256xf32, #tpu.memory_space<vmem>>, vector<1x128xf32>
    tpu.vector_store %arg7[%c0_98, %c0_99], %203 {strides = array<i32>} : memref<1x256xf32, #tpu.memory_space<vmem>>, vector<1x128xf32>,
    %c0_100 = arith.constant 0 : index
    %c128_101 = arith.constant 128 : index
    %205 = vector.load %arg7[%c0_100, %c128_101] : memref<1x256xf32, #tpu.memory_space<vmem>>, vector<1x128xf32>
    tpu.vector_store %arg7[%c0_100, %c128_101], %199 {strides = array<i32>} : memref<1x256xf32, #tpu.memory_space<vmem>>, vector<1x128xf32>,
    %c0_102 = arith.constant 0 : index
    %c0_103 = arith.constant 0 : index
    %206 = vector.load %arg7[%c0_102, %c0_103] : memref<1x256xf32, #tpu.memory_space<vmem>>, vector<1x256xf32>
    %c0_104 = arith.constant 0 : index
    %c0_105 = arith.constant 0 : index
    %207 = vector.load %arg3[%c0_104, %c0_105] : memref<256x512xf32, #tpu.memory_space<vmem>>, vector<256x512xf32>
    %cst_106 = arith.constant dense<0.000000e+00> : vector<1x512xf32>
    %208 = tpu.matmul %206, %207, %cst_106 {dimension_numbers = #tpu.dot_dimension_numbers<[1], [0], [0], [1], [0, 0, 1, 1], [], []>} : vector<1x256xf32>, vector<256x512xf32>, vector<1x512xf32> -> vector<1x512xf32>
    %c0_107 = arith.constant 0 : index
    %c0_108 = arith.constant 0 : index
    %209 = vector.load %arg4[%c0_107, %c0_108] : memref<1x512xf32, #tpu.memory_space<vmem>>, vector<1x512xf32>
    %210 = arith.addf %208, %209 : vector<1x512xf32>
    %211 = vector.extract_strided_slice %210 {offsets = [0, 0], sizes = [1, 128], strides = [1, 1]} : vector<1x512xf32> to vector<1x128xf32>
    %212 = arith.negf %211 : vector<1x128xf32>
    %213 = math.exp %212 : vector<1x128xf32>
    %cst_109 = arith.constant 1.000000e+00 : f32
    %214 = vector.broadcast %cst_109 : f32 to vector<1x128xf32>
    %215 = arith.addf %214, %213 : vector<1x128xf32>
    %216 = arith.divf %214, %215 : vector<1x128xf32>
    %217 = vector.extract_strided_slice %210 {offsets = [0, 128], sizes = [1, 128], strides = [1, 1]} : vector<1x512xf32> to vector<1x128xf32>
    %218 = arith.negf %217 : vector<1x128xf32>
    %219 = math.exp %218 : vector<1x128xf32>
    %cst_110 = arith.constant 1.000000e+00 : f32
    %220 = vector.broadcast %cst_110 : f32 to vector<1x128xf32>
    %221 = arith.addf %220, %219 : vector<1x128xf32>
    %222 = arith.divf %220, %221 : vector<1x128xf32>
    %223 = vector.extract_strided_slice %210 {offsets = [0, 256], sizes = [1, 128], strides = [1, 1]} : vector<1x512xf32> to vector<1x128xf32>
    %224 = vector.extract_strided_slice %210 {offsets = [0, 384], sizes = [1, 128], strides = [1, 1]} : vector<1x512xf32> to vector<1x128xf32>
    %225 = arith.mulf %216, %224 : vector<1x128xf32>
    %226 = arith.addf %223, %225 : vector<1x128xf32>
    %227 = math.tanh %226 : vector<1x128xf32>
    %cst_111 = arith.constant 1.000000e+00 : f32
    %228 = vector.broadcast %cst_111 : f32 to vector<1x128xf32>
    %229 = arith.subf %228, %222 : vector<1x128xf32>
    %230 = arith.mulf %229, %227 : vector<1x128xf32>
    %231 = arith.mulf %222, %199 : vector<1x128xf32>
    %232 = arith.addf %230, %231 : vector<1x128xf32>
    %233 = arith.index_cast %c6_i32 : i32 to index
    %c0_112 = arith.constant 0 : index
    %234 = vector.load %arg5[%233, %c0_112] : memref<8x128xf32, #tpu.memory_space<vmem>>, vector<1x128xf32>
    tpu.vector_store %arg5[%233, %c0_112], %232 {strides = array<i32>} : memref<8x128xf32, #tpu.memory_space<vmem>>, vector<1x128xf32>,
    %c7_i32 = arith.constant 7 : i32
    %235 = arith.index_cast %c7_i32 : i32 to index
    %c0_113 = arith.constant 0 : index
    %236 = vector.load %arg1[%235, %c0_113] : memref<8x128xf32, #tpu.memory_space<vmem>>, vector<1x128xf32>
    %c0_114 = arith.constant 0 : index
    %c0_115 = arith.constant 0 : index
    %237 = vector.load %arg7[%c0_114, %c0_115] : memref<1x256xf32, #tpu.memory_space<vmem>>, vector<1x128xf32>
    tpu.vector_store %arg7[%c0_114, %c0_115], %236 {strides = array<i32>} : memref<1x256xf32, #tpu.memory_space<vmem>>, vector<1x128xf32>,
    %c0_116 = arith.constant 0 : index
    %c128_117 = arith.constant 128 : index
    %238 = vector.load %arg7[%c0_116, %c128_117] : memref<1x256xf32, #tpu.memory_space<vmem>>, vector<1x128xf32>
    tpu.vector_store %arg7[%c0_116, %c128_117], %232 {strides = array<i32>} : memref<1x256xf32, #tpu.memory_space<vmem>>, vector<1x128xf32>,
    %c0_118 = arith.constant 0 : index
    %c0_119 = arith.constant 0 : index
    %239 = vector.load %arg7[%c0_118, %c0_119] : memref<1x256xf32, #tpu.memory_space<vmem>>, vector<1x256xf32>
    %c0_120 = arith.constant 0 : index
    %c0_121 = arith.constant 0 : index
    %240 = vector.load %arg3[%c0_120, %c0_121] : memref<256x512xf32, #tpu.memory_space<vmem>>, vector<256x512xf32>
    %cst_122 = arith.constant dense<0.000000e+00> : vector<1x512xf32>
    %241 = tpu.matmul %239, %240, %cst_122 {dimension_numbers = #tpu.dot_dimension_numbers<[1], [0], [0], [1], [0, 0, 1, 1], [], []>} : vector<1x256xf32>, vector<256x512xf32>, vector<1x512xf32> -> vector<1x512xf32>
    %c0_123 = arith.constant 0 : index
    %c0_124 = arith.constant 0 : index
    %242 = vector.load %arg4[%c0_123, %c0_124] : memref<1x512xf32, #tpu.memory_space<vmem>>, vector<1x512xf32>
    %243 = arith.addf %241, %242 : vector<1x512xf32>
    %244 = vector.extract_strided_slice %243 {offsets = [0, 0], sizes = [1, 128], strides = [1, 1]} : vector<1x512xf32> to vector<1x128xf32>
    %245 = arith.negf %244 : vector<1x128xf32>
    %246 = math.exp %245 : vector<1x128xf32>
    %cst_125 = arith.constant 1.000000e+00 : f32
    %247 = vector.broadcast %cst_125 : f32 to vector<1x128xf32>
    %248 = arith.addf %247, %246 : vector<1x128xf32>
    %249 = arith.divf %247, %248 : vector<1x128xf32>
    %250 = vector.extract_strided_slice %243 {offsets = [0, 128], sizes = [1, 128], strides = [1, 1]} : vector<1x512xf32> to vector<1x128xf32>
    %251 = arith.negf %250 : vector<1x128xf32>
    %252 = math.exp %251 : vector<1x128xf32>
    %cst_126 = arith.constant 1.000000e+00 : f32
    %253 = vector.broadcast %cst_126 : f32 to vector<1x128xf32>
    %254 = arith.addf %253, %252 : vector<1x128xf32>
    %255 = arith.divf %253, %254 : vector<1x128xf32>
    %256 = vector.extract_strided_slice %243 {offsets = [0, 256], sizes = [1, 128], strides = [1, 1]} : vector<1x512xf32> to vector<1x128xf32>
    %257 = vector.extract_strided_slice %243 {offsets = [0, 384], sizes = [1, 128], strides = [1, 1]} : vector<1x512xf32> to vector<1x128xf32>
    %258 = arith.mulf %249, %257 : vector<1x128xf32>
    %259 = arith.addf %256, %258 : vector<1x128xf32>
    %260 = math.tanh %259 : vector<1x128xf32>
    %cst_127 = arith.constant 1.000000e+00 : f32
    %261 = vector.broadcast %cst_127 : f32 to vector<1x128xf32>
    %262 = arith.subf %261, %255 : vector<1x128xf32>
    %263 = arith.mulf %262, %260 : vector<1x128xf32>
    %264 = arith.mulf %255, %232 : vector<1x128xf32>
    %265 = arith.addf %263, %264 : vector<1x128xf32>
    %266 = arith.index_cast %c7_i32 : i32 to index
    %c0_128 = arith.constant 0 : index
    %267 = vector.load %arg5[%266, %c0_128] : memref<8x128xf32, #tpu.memory_space<vmem>>, vector<1x128xf32>
    tpu.vector_store %arg5[%266, %c0_128], %265 {strides = array<i32>} : memref<8x128xf32, #tpu.memory_space<vmem>>, vector<1x128xf32>,
    %c8_i32 = arith.constant 8 : i32
    %c0_129 = arith.constant 0 : index
    %c0_130 = arith.constant 0 : index
    %268 = vector.load %arg6[%c0_129, %c0_130] : memref<1x128xf32, #tpu.memory_space<vmem>>, vector<1x128xf32>
    tpu.vector_store %arg6[%c0_129, %c0_130], %265 {strides = array<i32>} : memref<1x128xf32, #tpu.memory_space<vmem>>, vector<1x128xf32>,
    return
  }
  func.func @transform_0(%arg0: i32) -> (i32, i32) {
    %c0_i32 = arith.constant 0 : i32
    %c0_i32_0 = arith.constant 0 : i32
    return %arg0, %c0_i32 : i32, i32
  }
  func.func @transform_1(%arg0: i32) -> (i32, i32) {
    %c0_i32 = arith.constant 0 : i32
    %c0_i32_0 = arith.constant 0 : i32
    %c0_i32_1 = arith.constant 0 : i32
    return %c0_i32, %c0_i32_0 : i32, i32
  }
  func.func @transform_2(%arg0: i32) -> (i32, i32) {
    %c0_i32 = arith.constant 0 : i32
    %c0_i32_0 = arith.constant 0 : i32
    %c0_i32_1 = arith.constant 0 : i32
    return %c0_i32, %c0_i32_0 : i32, i32
  }
  func.func @transform_3(%arg0: i32) -> (i32, i32) {
    %c0_i32 = arith.constant 0 : i32
    %c0_i32_0 = arith.constant 0 : i32
    %c0_i32_1 = arith.constant 0 : i32
    return %c0_i32, %c0_i32_0 : i32, i32
  }
  func.func @transform_4(%arg0: i32) -> (i32, i32) {
    %c0_i32 = arith.constant 0 : i32
    %c0_i32_0 = arith.constant 0 : i32
    return %arg0, %c0_i32 : i32, i32
  }
}

</mosaic_0001>

<llo_original>
// kernel: tpu_custom_call.1
$region0: #{tpu_custom_call.1}
  #allocation0 [shape = 'u32[]', space=smem, size = 0x4, offset = 0x4, fixed_abs, tag = 'smem constant byte address 0x4 - core index']
  #allocation1 [shape = 'u32[144,128]{1,0:T(1,128)}', space=vmem, size = 0x12000, scoped, tag = 'internal scratch']
  #allocation2 [shape = 'f32[1,128]{1,0:T(1,128)}', space=vmem, size = 0x200, scoped, tag = 'scratch operand']
  #allocation3 [shape = 'f32[1,256]{1,0:T(1,128)}', space=vmem, size = 0x400, scoped, tag = 'scratch operand']
  %s0 = inlined_call_operand.hbm [shape: f32[8,128], index: 0, kind: input, shape index: {}]
  %s1 = inlined_call_operand.vmem [shape: f32[1,128], index: 1, kind: input, shape index: {}]
  %s2 = inlined_call_operand.hbm [shape: f32[256,512], index: 2, kind: input, shape index: {}]
  %s3 = inlined_call_operand.vmem [shape: f32[1,512], index: 3, kind: input, shape index: {}]
  %s4 = inlined_call_operand.hbm [shape: f32[8,128], index: 4, kind: output, shape index: {}]
  %s5 = sld [smem:[#allocation0]]
  $region38: #{tpu_custom_call.1} parent=0
    _
  %s7 = ssub.s32 1, %s5
  %s8 = scalar_select 0, %s7, %s5
  $region1: #{tpu_custom_call.1} parent=0
    #allocation4 [shape = 'u8[4096]{0}', space=vmem, size = 0x1000, scoped, tag = 'input window, operand 0, single buffered']
    #allocation5 [shape = 's32[1]{0}', space=sflag, size = 0x4, scoped, tag = 'scoped memory for tpu_custom_call.1']
    #allocation6 [shape = 's32[1]{0}', space=sflag, size = 0x4, scoped, tag = 'scoped memory for tpu_custom_call.1']
    #allocation7 [shape = 'u8[524288]{0}', space=vmem, size = 0x80000, scoped, tag = 'input window, operand 2, single buffered']
    #allocation8 [shape = 's32[1]{0}', space=sflag, size = 0x4, scoped, tag = 'scoped memory for tpu_custom_call.1']
    #allocation9 [shape = 'u8[4096]{0}', space=vmem, size = 0x1000, scoped, tag = 'output window, operand 0, single buffered']
    %9 = vsyncpa [#allocation5], 0
    %10 = vsyncpa [#allocation8], 0
    %11 = vsyncpa [#allocation6], 0
    // Predicated region
    $region2: #{tpu_custom_call.1} parent=1 // pred_check
      _
    $region3: #{tpu_custom_call.1} parent=1 // pred_check_branch
      %13 = sbr.rel (0) target = $region5
    $region4: #{tpu_custom_call.1} parent=1 // pred_region
      %s15 = ssub.s32 128, 128
      %16 = vsyncadd [#allocation5], %s15
      %s18 = sshll.u32 [#allocation4], 4
      %s19 = int_to_ptr.vmem [resolvable:$true] %s18
      %21 = dma.hbm_to_vmem [thread:$0]  %s0, 128, %s19, [#allocation5]
    $region5: #{tpu_custom_call.1} parent=1 // pred_fallthru
      _
    // Predicated region
    $region6: #{tpu_custom_call.1} parent=1 // pred_check
      _
    $region7: #{tpu_custom_call.1} parent=1 // pred_check_branch
      %23 = sbr.rel (0) target = $region9
    $region8: #{tpu_custom_call.1} parent=1 // pred_region
      _
    $region9: #{tpu_custom_call.1} parent=1 // pred_fallthru
      _
    // Predicated region
    $region10: #{tpu_custom_call.1} parent=1 // pred_check
      _
    $region11: #{tpu_custom_call.1} parent=1 // pred_check_branch
      %25 = sbr.rel (0) target = $region13
    $region12: #{tpu_custom_call.1} parent=1 // pred_region
      %s27 = ssub.s32 16384, 16384
      %28 = vsyncadd [#allocation8], %s27
      %s29 = sshll.u32 [#allocation7], 4
      %s30 = int_to_ptr.vmem [resolvable:$true] %s29
      %35 = dma.hbm_to_vmem [thread:$0]  %s2, 16384, %s30, [#allocation8], 512, 512, 32
    $region13: #{tpu_custom_call.1} parent=1 // pred_fallthru
      _
    // Predicated region
    $region14: #{tpu_custom_call.1} parent=1 // pred_check
      _
    $region15: #{tpu_custom_call.1} parent=1 // pred_check_branch
      %37 = sbr.rel (0) target = $region17
    $region16: #{tpu_custom_call.1} parent=1 // pred_region
      _
    $region17: #{tpu_custom_call.1} parent=1 // pred_fallthru
      _
    // Predicated region
    $region18: #{tpu_custom_call.1} parent=1 // pred_check
      _
    $region19: #{tpu_custom_call.1} parent=1 // pred_check_branch
      %39 = sbr.rel (0) target = $region21
    $region20: #{tpu_custom_call.1} parent=1 // pred_region
      %40 = dma.done [#allocation5], 128
    $region21: #{tpu_custom_call.1} parent=1 // pred_fallthru
      _
    // Predicated region
    $region22: #{tpu_custom_call.1} parent=1 // pred_check
      _
    $region23: #{tpu_custom_call.1} parent=1 // pred_check_branch
      %42 = sbr.rel (0) target = $region25
    $region24: #{tpu_custom_call.1} parent=1 // pred_region
      %43 = dma.done [#allocation8], 16384
    $region25: #{tpu_custom_call.1} parent=1 // pred_fallthru
      _
    %p44 = scmp.eq.s32.totalorder 0, 0
    // Predicated region
    $region26: #{tpu_custom_call.1} parent=1 // pred_check
      %p45 = pneg %p44
    $region27: #{tpu_custom_call.1} parent=1 // pred_check_branch
      %47 = sbr.rel (%p45) target = $region29
    $region28: #{tpu_custom_call.1} parent=1 // pred_region
      %v48 = vld [vmem:[%s1] sm:$0x1]
      %49 = vst [vmem:[#allocation2] sm:$0x1] %v48
    $region29: #{tpu_custom_call.1} parent=1 // pred_fallthru
      _
    %v50 = vld [vmem:[#allocation2] sm:$0x1]
    %v51 = vld [vmem:[#allocation4] sm:$0x1]
    %v52 = vlaneseq
    %vm53 = vcmp.ge.s32.totalorder %v52, 0
    %vm54 = vcmp.lt.s32.totalorder %v52, 128
    %vm55 = vmand %vm53, %vm54
    %56 = vst.msk [vmem:[#allocation3] sm:$0x1] %vm55, %v51
    %57 = vst.msk [vmem:[#allocation3 + $0x1] sm:$0x1] %vm55, %v50
    %v58 = vld [vmem:[#allocation3] sm:$0x3]
    %v59 = vld [vmem:[#allocation7] sm:$0xff]
    %v60 = vld [vmem:[#allocation7 + $0x8] sm:$0xff]
    %v61 = vld [vmem:[#allocation7 + $0x10] sm:$0xff]
    %v62 = vld [vmem:[#allocation7 + $0x18] sm:$0xff]
    %v63 = vld [vmem:[#allocation7 + $0x20] sm:$0xff]
    %v64 = vld [vmem:[#allocation7 + $0x28] sm:$0xff]
    %v65 = vld [vmem:[#allocation7 + $0x30] sm:$0xff]
    %v66 = vld [vmem:[#allocation7 + $0x38] sm:$0xff]
    %v67 = vld [vmem:[#allocation7 + $0x40] sm:$0xff]
    %v68 = vld [vmem:[#allocation7 + $0x48] sm:$0xff]
    %v69 = vld [vmem:[#allocation7 + $0x50] sm:$0xff]
    %v70 = vld [vmem:[#allocation7 + $0x58] sm:$0xff]
    %v71 = vld [vmem:[#allocation7 + $0x60] sm:$0xff]
    %v72 = vld [vmem:[#allocation7 + $0x68] sm:$0xff]
    %v73 = vld [vmem:[#allocation7 + $0x70] sm:$0xff]
    %v74 = vld [vmem:[#allocation7 + $0x78] sm:$0xff]
    %v75 = vld [vmem:[#allocation7 + $0x80] sm:$0xff]
    %v76 = vld [vmem:[#allocation7 + $0x88] sm:$0xff]
    %v77 = vld [vmem:[#allocation7 + $0x90] sm:$0xff]
    %v78 = vld [vmem:[#allocation7 + $0x98] sm:$0xff]
    %v79 = vld [vmem:[#allocation7 + $0xa0] sm:$0xff]
    %v80 = vld [vmem:[#allocation7 + $0xa8] sm:$0xff]
    %v81 = vld [vmem:[#allocation7 + $0xb0] sm:$0xff]
    %v82 = vld [vmem:[#allocation7 + $0xb8] sm:$0xff]
    %v83 = vld [vmem:[#allocation7 + $0xc0] sm:$0xff]
    %v84 = vld [vmem:[#allocation7 + $0xc8] sm:$0xff]
    %v85 = vld [vmem:[#allocation7 + $0xd0] sm:$0xff]
    %v86 = vld [vmem:[#allocation7 + $0xd8] sm:$0xff]
    %v87 = vld [vmem:[#allocation7 + $0xe0] sm:$0xff]
    %v88 = vld [vmem:[#allocation7 + $0xe8] sm:$0xff]
    %v89 = vld [vmem:[#allocation7 + $0xf0] sm:$0xff]
    %v90 = vld [vmem:[#allocation7 + $0xf8] sm:$0xff]
    %v91 = vld [vmem:[#allocation7 + $0x100] sm:$0xff]
    %v92 = vld [vmem:[#allocation7 + $0x108] sm:$0xff]
    %v93 = vld [vmem:[#allocation7 + $0x110] sm:$0xff]
    %v94 = vld [vmem:[#allocation7 + $0x118] sm:$0xff]
    %v95 = vld [vmem:[#allocation7 + $0x120] sm:$0xff]
    %v96 = vld [vmem:[#allocation7 + $0x128] sm:$0xff]
    %v97 = vld [vmem:[#allocation7 + $0x130] sm:$0xff]
    %v98 = vld [vmem:[#allocation7 + $0x138] sm:$0xff]
    %v99 = vld [vmem:[#allocation7 + $0x140] sm:$0xff]
    %v100 = vld [vmem:[#allocation7 + $0x148] sm:$0xff]
    %v101 = vld [vmem:[#allocation7 + $0x150] sm:$0xff]
    %v102 = vld [vmem:[#allocation7 + $0x158] sm:$0xff]
    %v103 = vld [vmem:[#allocation7 + $0x160] sm:$0xff]
    %v104 = vld [vmem:[#allocation7 + $0x168] sm:$0xff]
    %v105 = vld [vmem:[#allocation7 + $0x170] sm:$0xff]
    %v106 = vld [vmem:[#allocation7 + $0x178] sm:$0xff]
    %v107 = vld [vmem:[#allocation7 + $0x180] sm:$0xff]
    %v108 = vld [vmem:[#allocation7 + $0x188] sm:$0xff]
    %v109 = vld [vmem:[#allocation7 + $0x190] sm:$0xff]
    %v110 = vld [vmem:[#allocation7 + $0x198] sm:$0xff]
    %v111 = vld [vmem:[#allocation7 + $0x1a0] sm:$0xff]
    %v112 = vld [vmem:[#allocation7 + $0x1a8] sm:$0xff]
    %v113 = vld [vmem:[#allocation7 + $0x1b0] sm:$0xff]
    %v114 = vld [vmem:[#allocation7 + $0x1b8] sm:$0xff]
    %v115 = vld [vmem:[#allocation7 + $0x1c0] sm:$0xff]
    %v116 = vld [vmem:[#allocation7 + $0x1c8] sm:$0xff]
    %v117 = vld [vmem:[#allocation7 + $0x1d0] sm:$0xff]
    %v118 = vld [vmem:[#allocation7 + $0x1d8] sm:$0xff]
    %v119 = vld [vmem:[#allocation7 + $0x1e0] sm:$0xff]
    %v120 = vld [vmem:[#allocation7 + $0x1e8] sm:$0xff]
    %v121 = vld [vmem:[#allocation7 + $0x1f0] sm:$0xff]
    %v122 = vld [vmem:[#allocation7 + $0x1f8] sm:$0xff]
    %v123 = vld [vmem:[#allocation7 + $0x200] sm:$0xff]
    %v124 = vld [vmem:[#allocation7 + $0x208] sm:$0xff]
    %v125 = vld [vmem:[#allocation7 + $0x210] sm:$0xff]
    %v126 = vld [vmem:[#allocation7 + $0x218] sm:$0xff]
    %v127 = vld [vmem:[#allocation7 + $0x220] sm:$0xff]
    %v128 = vld [vmem:[#allocation7 + $0x228] sm:$0xff]
    %v129 = vld [vmem:[#allocation7 + $0x230] sm:$0xff]
    %v130 = vld [vmem:[#allocation7 + $0x238] sm:$0xff]
    %v131 = vld [vmem:[#allocation7 + $0x240] sm:$0xff]
    %v132 = vld [vmem:[#allocation7 + $0x248] sm:$0xff]
    %v133 = vld [vmem:[#allocation7 + $0x250] sm:$0xff]
    %v134 = vld [vmem:[#allocation7 + $0x258] sm:$0xff]
    %v135 = vld [vmem:[#allocation7 + $0x260] sm:$0xff]
    %v136 = vld [vmem:[#allocation7 + $0x268] sm:$0xff]
    %v137 = vld [vmem:[#allocation7 + $0x270] sm:$0xff]
    %v138 = vld [vmem:[#allocation7 + $0x278] sm:$0xff]
    %v139 = vld [vmem:[#allocation7 + $0x280] sm:$0xff]
    %v140 = vld [vmem:[#allocation7 + $0x288] sm:$0xff]
    %v141 = vld [vmem:[#allocation7 + $0x290] sm:$0xff]
    %v142 = vld [vmem:[#allocation7 + $0x298] sm:$0xff]
    %v143 = vld [vmem:[#allocation7 + $0x2a0] sm:$0xff]
    %v144 = vld [vmem:[#allocation7 + $0x2a8] sm:$0xff]
    %v145 = vld [vmem:[#allocation7 + $0x2b0] sm:$0xff]
    %v146 = vld [vmem:[#allocation7 + $0x2b8] sm:$0xff]
    %v147 = vld [vmem:[#allocation7 + $0x2c0] sm:$0xff]
    %v148 = vld [vmem:[#allocation7 + $0x2c8] sm:$0xff]
    %v149 = vld [vmem:[#allocation7 + $0x2d0] sm:$0xff]
    %v150 = vld [vmem:[#allocation7 + $0x2d8] sm:$0xff]
    %v151 = vld [vmem:[#allocation7 + $0x2e0] sm:$0xff]
    %v152 = vld [vmem:[#allocation7 + $0x2e8] sm:$0xff]
    %v153 = vld [vmem:[#allocation7 + $0x2f0] sm:$0xff]
    %v154 = vld [vmem:[#allocation7 + $0x2f8] sm:$0xff]
    %v155 = vld [vmem:[#allocation7 + $0x300] sm:$0xff]
    %v156 = vld [vmem:[#allocation7 + $0x308] sm:$0xff]
    %v157 = vld [vmem:[#allocation7 + $0x310] sm:$0xff]
    %v158 = vld [vmem:[#allocation7 + $0x318] sm:$0xff]
    %v159 = vld [vmem:[#allocation7 + $0x320] sm:$0xff]
    %v160 = vld [vmem:[#allocation7 + $0x328] sm:$0xff]
    %v161 = vld [vmem:[#allocation7 + $0x330] sm:$0xff]
    %v162 = vld [vmem:[#allocation7 + $0x338] sm:$0xff]
    %v163 = vld [vmem:[#allocation7 + $0x340] sm:$0xff]
    %v164 = vld [vmem:[#allocation7 + $0x348] sm:$0xff]
    %v165 = vld [vmem:[#allocation7 + $0x350] sm:$0xff]
    %v166 = vld [vmem:[#allocation7 + $0x358] sm:$0xff]
    %v167 = vld [vmem:[#allocation7 + $0x360] sm:$0xff]
    %v168 = vld [vmem:[#allocation7 + $0x368] sm:$0xff]
    %v169 = vld [vmem:[#allocation7 + $0x370] sm:$0xff]
    %v170 = vld [vmem:[#allocation7 + $0x378] sm:$0xff]
    %v171 = vld [vmem:[#allocation7 + $0x380] sm:$0xff]
    %v172 = vld [vmem:[#allocation7 + $0x388] sm:$0xff]
    %v173 = vld [vmem:[#allocation7 + $0x390] sm:$0xff]
    %v174 = vld [vmem:[#allocation7 + $0x398] sm:$0xff]
    %v175 = vld [vmem:[#allocation7 + $0x3a0] sm:$0xff]
    %v176 = vld [vmem:[#allocation7 + $0x3a8] sm:$0xff]
    %v177 = vld [vmem:[#allocation7 + $0x3b0] sm:$0xff]
    %v178 = vld [vmem:[#allocation7 + $0x3b8] sm:$0xff]
    %v179 = vld [vmem:[#allocation7 + $0x3c0] sm:$0xff]
    %v180 = vld [vmem:[#allocation7 + $0x3c8] sm:$0xff]
    %v181 = vld [vmem:[#allocation7 + $0x3d0] sm:$0xff]
    %v182 = vld [vmem:[#allocation7 + $0x3d8] sm:$0xff]
    %v183 = vld [vmem:[#allocation7 + $0x3e0] sm:$0xff]
    %v184 = vld [vmem:[#allocation7 + $0x3e8] sm:$0xff]
    %v185 = vld [vmem:[#allocation7 + $0x3f0] sm:$0xff]
    %v186 = vld [vmem:[#allocation7 + $0x3f8] sm:$0xff]
    %v187 = vld [vmem:[%s3] sm:$0xf]
    %v189 = vlaneseq
    %v190 = vshrl.u32 %v189, 7
    %v191 = vsub.s32 0, %v190
    %v192 = vrot.slane %v58, %v191
    %v193 = vlaneseq
    %v194 = vshrl.u32 %v193, 7
    %v195 = vsub.s32 1, %v194
    %v196 = vrot.slane %v58, %v195
    %v200 = vlaneseq
    %v201 = vshrl.u32 %v200, 7
    %v202 = vsub.s32 0, %v201
    %v203 = vrot.slane %v187, %v202
    %v204 = vlaneseq
    %v205 = vshrl.u32 %v204, 7
    %v206 = vsub.s32 1, %v205
    %v207 = vrot.slane %v187, %v206
    %v208 = vlaneseq
    %v209 = vshrl.u32 %v208, 7
    %v210 = vsub.s32 2, %v209
    %v211 = vrot.slane %v187, %v210
    %v212 = vlaneseq
    %v213 = vshrl.u32 %v212, 7
    %v214 = vsub.s32 3, %v213
    %v215 = vrot.slane %v187, %v214
    %220 = vmatprep.subr.mxu0 %v60
    %221 = vmatpush1.msra.mxu0 %v59
    %222 = vmatprep.subr.mxu0 %v64
    %223 = vmatpush1.msra.mxu0 %v63
    %224 = vmatprep.subr.mxu0 %v68
    %225 = vmatpush1.msra.mxu0 %v67
    %226 = vmatprep.subr.mxu0 %v72
    %227 = vmatpush1.msra.mxu0 %v71
    %228 = vmatprep.subr.mxu0 %v76
    %229 = vmatpush1.msra.mxu0 %v75
    %230 = vmatprep.subr.mxu0 %v80
    %231 = vmatpush1.msra.mxu0 %v79
    %232 = vmatprep.subr.mxu0 %v84
    %233 = vmatpush1.msra.mxu0 %v83
    %234 = vmatprep.subr.mxu0 %v88
    %235 = vmatpush1.msra.mxu0 %v87
    %236 = vmatprep.subr.mxu0 %v92
    %237 = vmatpush1.msra.mxu0 %v91
    %238 = vmatprep.subr.mxu0 %v96
    %239 = vmatpush1.msra.mxu0 %v95
    %240 = vmatprep.subr.mxu0 %v100
    %241 = vmatpush1.msra.mxu0 %v99
    %242 = vmatprep.subr.mxu0 %v104
    %243 = vmatpush1.msra.mxu0 %v103
    %244 = vmatprep.subr.mxu0 %v108
    %245 = vmatpush1.msra.mxu0 %v107
    %246 = vmatprep.subr.mxu0 %v112
    %247 = vmatpush1.msra.mxu0 %v111
    %248 = vmatprep.subr.mxu0 %v116
    %249 = vmatpush1.msra.mxu0 %v115
    %250 = vmatprep.subr.mxu0 %v120
    %251 = vmatpush1.msra.mxu0 %v119
    %252 = vmatprep.subr.mxu0 %v124
    %253 = vmatpush1.msra.mxu0 %v123
    %254 = vmatprep.subr.mxu0 %v128
    %255 = vmatpush1.msra.mxu0 %v127
    %256 = vmatprep.subr.mxu0 %v132
    %257 = vmatpush1.msra.mxu0 %v131
    %258 = vmatprep.subr.mxu0 %v136
    %259 = vmatpush1.msra.mxu0 %v135
    %260 = vmatprep.subr.mxu0 %v140
    %261 = vmatpush1.msra.mxu0 %v139
    %262 = vmatprep.subr.mxu0 %v144
    %263 = vmatpush1.msra.mxu0 %v143
    %264 = vmatprep.subr.mxu0 %v148
    %265 = vmatpush1.msra.mxu0 %v147
    %266 = vmatprep.subr.mxu0 %v152
    %267 = vmatpush1.msra.mxu0 %v151
    %268 = vmatprep.subr.mxu0 %v156
    %269 = vmatpush1.msra.mxu0 %v155
    %270 = vmatprep.subr.mxu0 %v160
    %271 = vmatpush1.msra.mxu0 %v159
    %272 = vmatprep.subr.mxu0 %v164
    %273 = vmatpush1.msra.mxu0 %v163
    %274 = vmatprep.subr.mxu0 %v168
    %275 = vmatpush1.msra.mxu0 %v167
    %276 = vmatprep.subr.mxu0 %v172
    %277 = vmatpush1.msra.mxu0 %v171
    %278 = vmatprep.subr.mxu0 %v176
    %279 = vmatpush1.msra.mxu0 %v175
    %280 = vmatprep.subr.mxu0 %v180
    %281 = vmatpush1.msra.mxu0 %v179
    %282 = vmatprep.subr.mxu0 %v184
    %283 = vmatpush1.msra.mxu0 %v183
    %284 = vmatprep.mubr.f32.mxu0 %v196
    %285 = vmatmul.mubr.f32.gmra.mrb[0].mxu0 %v192
    %v286 = vpop.f32.mrb[0].mxu0
    %v287 = vadd.f32 %v203, %v286
    %v288 = vpop.f32.mrb[0].mxu0
    %v289 = vadd.f32 %v207, %v288
    %290 = vdwg.mxu0
    %291 = vmatprep.subr.mxu0 %v62
    %292 = vmatpush1.msra.mxu0 %v61
    %293 = vmatprep.subr.mxu0 %v66
    %294 = vmatpush1.msra.mxu0 %v65
    %295 = vmatprep.subr.mxu0 %v70
    %296 = vmatpush1.msra.mxu0 %v69
    %297 = vmatprep.subr.mxu0 %v74
    %298 = vmatpush1.msra.mxu0 %v73
    %299 = vmatprep.subr.mxu0 %v78
    %300 = vmatpush1.msra.mxu0 %v77
    %301 = vmatprep.subr.mxu0 %v82
    %302 = vmatpush1.msra.mxu0 %v81
    %303 = vmatprep.subr.mxu0 %v86
    %304 = vmatpush1.msra.mxu0 %v85
    %305 = vmatprep.subr.mxu0 %v90
    %306 = vmatpush1.msra.mxu0 %v89
    %307 = vmatprep.subr.mxu0 %v94
    %308 = vmatpush1.msra.mxu0 %v93
    %309 = vmatprep.subr.mxu0 %v98
    %310 = vmatpush1.msra.mxu0 %v97
    %311 = vmatprep.subr.mxu0 %v102
    %312 = vmatpush1.msra.mxu0 %v101
    %313 = vmatprep.subr.mxu0 %v106
    %314 = vmatpush1.msra.mxu0 %v105
    %315 = vmatprep.subr.mxu0 %v110
    %316 = vmatpush1.msra.mxu0 %v109
    %317 = vmatprep.subr.mxu0 %v114
    %318 = vmatpush1.msra.mxu0 %v113
    %319 = vmatprep.subr.mxu0 %v118
    %320 = vmatpush1.msra.mxu0 %v117
    %321 = vmatprep.subr.mxu0 %v122
    %322 = vmatpush1.msra.mxu0 %v121
    %323 = vmatprep.subr.mxu0 %v126
    %324 = vmatpush1.msra.mxu0 %v125
    %325 = vmatprep.subr.mxu0 %v130
    %326 = vmatpush1.msra.mxu0 %v129
    %327 = vmatprep.subr.mxu0 %v134
    %328 = vmatpush1.msra.mxu0 %v133
    %329 = vmatprep.subr.mxu0 %v138
    %330 = vmatpush1.msra.mxu0 %v137
    %331 = vmatprep.subr.mxu0 %v142
    %332 = vmatpush1.msra.mxu0 %v141
    %333 = vmatprep.subr.mxu0 %v146
    %334 = vmatpush1.msra.mxu0 %v145
    %335 = vmatprep.subr.mxu0 %v150
    %336 = vmatpush1.msra.mxu0 %v149
    %337 = vmatprep.subr.mxu0 %v154
    %338 = vmatpush1.msra.mxu0 %v153
    %339 = vmatprep.subr.mxu0 %v158
    %340 = vmatpush1.msra.mxu0 %v157
    %341 = vmatprep.subr.mxu0 %v162
    %342 = vmatpush1.msra.mxu0 %v161
    %343 = vmatprep.subr.mxu0 %v166
    %344 = vmatpush1.msra.mxu0 %v165
    %345 = vmatprep.subr.mxu0 %v170
    %346 = vmatpush1.msra.mxu0 %v169
    %347 = vmatprep.subr.mxu0 %v174
    %348 = vmatpush1.msra.mxu0 %v173
    %349 = vmatprep.subr.mxu0 %v178
    %350 = vmatpush1.msra.mxu0 %v177
    %351 = vmatprep.subr.mxu0 %v182
    %352 = vmatpush1.msra.mxu0 %v181
    %353 = vmatprep.subr.mxu0 %v186
    %354 = vmatpush1.msra.mxu0 %v185
    %355 = vmatprep.mubr.f32.mxu0 %v196
    %356 = vmatmul.mubr.f32.gmra.mrb[0].mxu0 %v192
    %v357 = vpop.f32.mrb[0].mxu0
    %v358 = vadd.f32 %v211, %v357
    %v359 = vpop.f32.mrb[0].mxu0
    %v360 = vadd.f32 %v215, %v359
    %361 = vdwg.mxu0
    %v362 = vxor.u32 %v287, 2147483648
    %v363 = vmul.f32 %v362, 1.442695
    %v364 = vpow.pop %v363
    %v365 = vadd.f32 %v364, 1.0
    %v366 = vrcp.pop %v365
    %v367 = vmul.f32 1.0, %v366
    %v368 = vxor.u32 %v289, 2147483648
    %v369 = vmul.f32 %v368, 1.442695
    %v370 = vpow.pop %v369
    %v371 = vadd.f32 %v370, 1.0
    %v372 = vrcp.pop %v371
    %v373 = vmul.f32 1.0, %v372
    %v374 = vmul.f32 %v367, %v360
    %v375 = vadd.f32 %v358, %v374
    %v376 = vtanh.pop %v375
    %v377 = vsub.f32 1.0, %v373
    %v378 = vmul.f32 %v377, %v376
    %v379 = vmul.f32 %v373, %v50
    %v380 = vadd.f32 %v378, %v379
    %381 = vst [vmem:[#allocation9] sm:$0x1] %v380
    %v382 = vld [vmem:[#allocation4 + $0x1] sm:$0x1]
    %383 = vst.msk [vmem:[#allocation3] sm:$0x1] %vm55, %v382
    %384 = vst.msk [vmem:[#allocation3 + $0x1] sm:$0x1] %vm55, %v380
    %v385 = vld [vmem:[#allocation3] sm:$0x3]
    %v386 = vld [vmem:[#allocation7] sm:$0xff]
    %v387 = vld [vmem:[#allocation7 + $0x8] sm:$0xff]
    %v388 = vld [vmem:[#allocation7 + $0x10] sm:$0xff]
    %v389 = vld [vmem:[#allocation7 + $0x18] sm:$0xff]
    %v390 = vld [vmem:[#allocation7 + $0x20] sm:$0xff]
    %v391 = vld [vmem:[#allocation7 + $0x28] sm:$0xff]
    %v392 = vld [vmem:[#allocation7 + $0x30] sm:$0xff]
    %v393 = vld [vmem:[#allocation7 + $0x38] sm:$0xff]
    %v394 = vld [vmem:[#allocation7 + $0x40] sm:$0xff]
    %v395 = vld [vmem:[#allocation7 + $0x48] sm:$0xff]
    %v396 = vld [vmem:[#allocation7 + $0x50] sm:$0xff]
    %v397 = vld [vmem:[#allocation7 + $0x58] sm:$0xff]
    %v398 = vld [vmem:[#allocation7 + $0x60] sm:$0xff]
    %v399 = vld [vmem:[#allocation7 + $0x68] sm:$0xff]
    %v400 = vld [vmem:[#allocation7 + $0x70] sm:$0xff]
    %v401 = vld [vmem:[#allocation7 + $0x78] sm:$0xff]
    %v402 = vld [vmem:[#allocation7 + $0x80] sm:$0xff]
    %v403 = vld [vmem:[#allocation7 + $0x88] sm:$0xff]
    %v404 = vld [vmem:[#allocation7 + $0x90] sm:$0xff]
    %v405 = vld [vmem:[#allocation7 + $0x98] sm:$0xff]
    %v406 = vld [vmem:[#allocation7 + $0xa0] sm:$0xff]
    %v407 = vld [vmem:[#allocation7 + $0xa8] sm:$0xff]
    %v408 = vld [vmem:[#allocation7 + $0xb0] sm:$0xff]
    %v409 = vld [vmem:[#allocation7 + $0xb8] sm:$0xff]
    %v410 = vld [vmem:[#allocation7 + $0xc0] sm:$0xff]
    %v411 = vld [vmem:[#allocation7 + $0xc8] sm:$0xff]
    %v412 = vld [vmem:[#allocation7 + $0xd0] sm:$0xff]
    %v413 = vld [vmem:[#allocation7 + $0xd8] sm:$0xff]
    %v414 = vld [vmem:[#allocation7 + $0xe0] sm:$0xff]
    %v415 = vld [vmem:[#allocation7 + $0xe8] sm:$0xff]
    %v416 = vld [vmem:[#allocation7 + $0xf0] sm:$0xff]
    %v417 = vld [vmem:[#allocation7 + $0xf8] sm:$0xff]
    %v418 = vld [vmem:[#allocation7 + $0x100] sm:$0xff]
    %v419 = vld [vmem:[#allocation7 + $0x108] sm:$0xff]
    %v420 = vld [vmem:[#allocation7 + $0x110] sm:$0xff]
    %v421 = vld [vmem:[#allocation7 + $0x118] sm:$0xff]
    %v422 = vld [vmem:[#allocation7 + $0x120] sm:$0xff]
    %v423 = vld [vmem:[#allocation7 + $0x128] sm:$0xff]
    %v424 = vld [vmem:[#allocation7 + $0x130] sm:$0xff]
    %v425 = vld [vmem:[#allocation7 + $0x138] sm:$0xff]
    %v426 = vld [vmem:[#allocation7 + $0x140] sm:$0xff]
    %v427 = vld [vmem:[#allocation7 + $0x148] sm:$0xff]
    %v428 = vld [vmem:[#allocation7 + $0x150] sm:$0xff]
    %v429 = vld [vmem:[#allocation7 + $0x158] sm:$0xff]
    %v430 = vld [vmem:[#allocation7 + $0x160] sm:$0xff]
    %v431 = vld [vmem:[#allocation7 + $0x168] sm:$0xff]
    %v432 = vld [vmem:[#allocation7 + $0x170] sm:$0xff]
    %v433 = vld [vmem:[#allocation7 + $0x178] sm:$0xff]
    %v434 = vld [vmem:[#allocation7 + $0x180] sm:$0xff]
    %v435 = vld [vmem:[#allocation7 + $0x188] sm:$0xff]
    %v436 = vld [vmem:[#allocation7 + $0x190] sm:$0xff]
    %v437 = vld [vmem:[#allocation7 + $0x198] sm:$0xff]
    %v438 = vld [vmem:[#allocation7 + $0x1a0] sm:$0xff]
    %v439 = vld [vmem:[#allocation7 + $0x1a8] sm:$0xff]
    %v440 = vld [vmem:[#allocation7 + $0x1b0] sm:$0xff]
    %v441 = vld [vmem:[#allocation7 + $0x1b8] sm:$0xff]
    %v442 = vld [vmem:[#allocation7 + $0x1c0] sm:$0xff]
    %v443 = vld [vmem:[#allocation7 + $0x1c8] sm:$0xff]
    %v444 = vld [vmem:[#allocation7 + $0x1d0] sm:$0xff]
    %v445 = vld [vmem:[#allocation7 + $0x1d8] sm:$0xff]
    %v446 = vld [vmem:[#allocation7 + $0x1e0] sm:$0xff]
    %v447 = vld [vmem:[#allocation7 + $0x1e8] sm:$0xff]
    %v448 = vld [vmem:[#allocation7 + $0x1f0] sm:$0xff]
    %v449 = vld [vmem:[#allocation7 + $0x1f8] sm:$0xff]
    %v450 = vld [vmem:[#allocation7 + $0x200] sm:$0xff]
    %v451 = vld [vmem:[#allocation7 + $0x208] sm:$0xff]
    %v452 = vld [vmem:[#allocation7 + $0x210] sm:$0xff]
    %v453 = vld [vmem:[#allocation7 + $0x218] sm:$0xff]
    %v454 = vld [vmem:[#allocation7 + $0x220] sm:$0xff]
    %v455 = vld [vmem:[#allocation7 + $0x228] sm:$0xff]
    %v456 = vld [vmem:[#allocation7 + $0x230] sm:$0xff]
    %v457 = vld [vmem:[#allocation7 + $0x238] sm:$0xff]
    %v458 = vld [vmem:[#allocation7 + $0x240] sm:$0xff]
    %v459 = vld [vmem:[#allocation7 + $0x248] sm:$0xff]
    %v460 = vld [vmem:[#allocation7 + $0x250] sm:$0xff]
    %v461 = vld [vmem:[#allocation7 + $0x258] sm:$0xff]
    %v462 = vld [vmem:[#allocation7 + $0x260] sm:$0xff]
    %v463 = vld [vmem:[#allocation7 + $0x268] sm:$0xff]
    %v464 = vld [vmem:[#allocation7 + $0x270] sm:$0xff]
    %v465 = vld [vmem:[#allocation7 + $0x278] sm:$0xff]
    %v466 = vld [vmem:[#allocation7 + $0x280] sm:$0xff]
    %v467 = vld [vmem:[#allocation7 + $0x288] sm:$0xff]
    %v468 = vld [vmem:[#allocation7 + $0x290] sm:$0xff]
    %v469 = vld [vmem:[#allocation7 + $0x298] sm:$0xff]
    %v470 = vld [vmem:[#allocation7 + $0x2a0] sm:$0xff]
    %v471 = vld [vmem:[#allocation7 + $0x2a8] sm:$0xff]
    %v472 = vld [vmem:[#allocation7 + $0x2b0] sm:$0xff]
    %v473 = vld [vmem:[#allocation7 + $0x2b8] sm:$0xff]
    %v474 = vld [vmem:[#allocation7 + $0x2c0] sm:$0xff]
    %v475 = vld [vmem:[#allocation7 + $0x2c8] sm:$0xff]
    %v476 = vld [vmem:[#allocation7 + $0x2d0] sm:$0xff]
    %v477 = vld [vmem:[#allocation7 + $0x2d8] sm:$0xff]
    %v478 = vld [vmem:[#allocation7 + $0x2e0] sm:$0xff]
    %v479 = vld [vmem:[#allocation7 + $0x2e8] sm:$0xff]
    %v480 = vld [vmem:[#allocation7 + $0x2f0] sm:$0xff]
    %v481 = vld [vmem:[#allocation7 + $0x2f8] sm:$0xff]
    %v482 = vld [vmem:[#allocation7 + $0x300] sm:$0xff]
    %v483 = vld [vmem:[#allocation7 + $0x308] sm:$0xff]
    %v484 = vld [vmem:[#allocation7 + $0x310] sm:$0xff]
    %v485 = vld [vmem:[#allocation7 + $0x318] sm:$0xff]
    %v486 = vld [vmem:[#allocation7 + $0x320] sm:$0xff]
    %v487 = vld [vmem:[#allocation7 + $0x328] sm:$0xff]
    %v488 = vld [vmem:[#allocation7 + $0x330] sm:$0xff]
    %v489 = vld [vmem:[#allocation7 + $0x338] sm:$0xff]
    %v490 = vld [vmem:[#allocation7 + $0x340] sm:$0xff]
    %v491 = vld [vmem:[#allocation7 + $0x348] sm:$0xff]
    %v492 = vld [vmem:[#allocation7 + $0x350] sm:$0xff]
    %v493 = vld [vmem:[#allocation7 + $0x358] sm:$0xff]
    %v494 = vld [vmem:[#allocation7 + $0x360] sm:$0xff]
    %v495 = vld [vmem:[#allocation7 + $0x368] sm:$0xff]
    %v496 = vld [vmem:[#allocation7 + $0x370] sm:$0xff]
    %v497 = vld [vmem:[#allocation7 + $0x378] sm:$0xff]
    %v498 = vld [vmem:[#allocation7 + $0x380] sm:$0xff]
    %v499 = vld [vmem:[#allocation7 + $0x388] sm:$0xff]
    %v500 = vld [vmem:[#allocation7 + $0x390] sm:$0xff]
    %v501 = vld [vmem:[#allocation7 + $0x398] sm:$0xff]
    %v502 = vld [vmem:[#allocation7 + $0x3a0] sm:$0xff]
    %v503 = vld [vmem:[#allocation7 + $0x3a8] sm:$0xff]
    %v504 = vld [vmem:[#allocation7 + $0x3b0] sm:$0xff]
    %v505 = vld [vmem:[#allocation7 + $0x3b8] sm:$0xff]
    %v506 = vld [vmem:[#allocation7 + $0x3c0] sm:$0xff]
    %v507 = vld [vmem:[#allocation7 + $0x3c8] sm:$0xff]
    %v508 = vld [vmem:[#allocation7 + $0x3d0] sm:$0xff]
    %v509 = vld [vmem:[#allocation7 + $0x3d8] sm:$0xff]
    %v510 = vld [vmem:[#allocation7 + $0x3e0] sm:$0xff]
    %v511 = vld [vmem:[#allocation7 + $0x3e8] sm:$0xff]
    %v512 = vld [vmem:[#allocation7 + $0x3f0] sm:$0xff]
    %v513 = vld [vmem:[#allocation7 + $0x3f8] sm:$0xff]
    %v514 = vld [vmem:[%s3] sm:$0xf]
    %v516 = vlaneseq
    %v517 = vshrl.u32 %v516, 7
    %v518 = vsub.s32 0, %v517
    %v519 = vrot.slane %v385, %v518
    %v520 = vlaneseq
    %v521 = vshrl.u32 %v520, 7
    %v522 = vsub.s32 1, %v521
    %v523 = vrot.slane %v385, %v522
    %v527 = vlaneseq
    %v528 = vshrl.u32 %v527, 7
    %v529 = vsub.s32 0, %v528
    %v530 = vrot.slane %v514, %v529
    %v531 = vlaneseq
    %v532 = vshrl.u32 %v531, 7
    %v533 = vsub.s32 1, %v532
    %v534 = vrot.slane %v514, %v533
    %v535 = vlaneseq
    %v536 = vshrl.u32 %v535, 7
    %v537 = vsub.s32 2, %v536
    %v538 = vrot.slane %v514, %v537
    %v539 = vlaneseq
    %v540 = vshrl.u32 %v539, 7
    %v541 = vsub.s32 3, %v540
    %v542 = vrot.slane %v514, %v541
    %547 = vmatprep.subr.mxu0 %v387
    %548 = vmatpush1.msra.mxu0 %v386
    %549 = vmatprep.subr.mxu0 %v391
    %550 = vmatpush1.msra.mxu0 %v390
    %551 = vmatprep.subr.mxu0 %v395
    %552 = vmatpush1.msra.mxu0 %v394
    %553 = vmatprep.subr.mxu0 %v399
    %554 = vmatpush1.msra.mxu0 %v398
    %555 = vmatprep.subr.mxu0 %v403
    %556 = vmatpush1.msra.mxu0 %v402
    %557 = vmatprep.subr.mxu0 %v407
    %558 = vmatpush1.msra.mxu0 %v406
    %559 = vmatprep.subr.mxu0 %v411
    %560 = vmatpush1.msra.mxu0 %v410
    %561 = vmatprep.subr.mxu0 %v415
    %562 = vmatpush1.msra.mxu0 %v414
    %563 = vmatprep.subr.mxu0 %v419
    %564 = vmatpush1.msra.mxu0 %v418
    %565 = vmatprep.subr.mxu0 %v423
    %566 = vmatpush1.msra.mxu0 %v422
    %567 = vmatprep.subr.mxu0 %v427
    %568 = vmatpush1.msra.mxu0 %v426
    %569 = vmatprep.subr.mxu0 %v431
    %570 = vmatpush1.msra.mxu0 %v430
    %571 = vmatprep.subr.mxu0 %v435
    %572 = vmatpush1.msra.mxu0 %v434
    %573 = vmatprep.subr.mxu0 %v439
    %574 = vmatpush1.msra.mxu0 %v438
    %575 = vmatprep.subr.mxu0 %v443
    %576 = vmatpush1.msra.mxu0 %v442
    %577 = vmatprep.subr.mxu0 %v447
    %578 = vmatpush1.msra.mxu0 %v446
    %579 = vmatprep.subr.mxu0 %v451
    %580 = vmatpush1.msra.mxu0 %v450
    %581 = vmatprep.subr.mxu0 %v455
    %582 = vmatpush1.msra.mxu0 %v454
    %583 = vmatprep.subr.mxu0 %v459
    %584 = vmatpush1.msra.mxu0 %v458
    %585 = vmatprep.subr.mxu0 %v463
    %586 = vmatpush1.msra.mxu0 %v462
    %587 = vmatprep.subr.mxu0 %v467
    %588 = vmatpush1.msra.mxu0 %v466
    %589 = vmatprep.subr.mxu0 %v471
    %590 = vmatpush1.msra.mxu0 %v470
    %591 = vmatprep.subr.mxu0 %v475
    %592 = vmatpush1.msra.mxu0 %v474
    %593 = vmatprep.subr.mxu0 %v479
    %594 = vmatpush1.msra.mxu0 %v478
    %595 = vmatprep.subr.mxu0 %v483
    %596 = vmatpush1.msra.mxu0 %v482
    %597 = vmatprep.subr.mxu0 %v487
    %598 = vmatpush1.msra.mxu0 %v486
    %599 = vmatprep.subr.mxu0 %v491
    %600 = vmatpush1.msra.mxu0 %v490
    %601 = vmatprep.subr.mxu0 %v495
    %602 = vmatpush1.msra.mxu0 %v494
    %603 = vmatprep.subr.mxu0 %v499
    %604 = vmatpush1.msra.mxu0 %v498
    %605 = vmatprep.subr.mxu0 %v503
    %606 = vmatpush1.msra.mxu0 %v502
    %607 = vmatprep.subr.mxu0 %v507
    %608 = vmatpush1.msra.mxu0 %v506
    %609 = vmatprep.subr.mxu0 %v511
    %610 = vmatpush1.msra.mxu0 %v510
    %611 = vmatprep.mubr.f32.mxu0 %v523
    %612 = vmatmul.mubr.f32.gmra.mrb[0].mxu0 %v519
    %v613 = vpop.f32.mrb[0].mxu0
    %v614 = vadd.f32 %v530, %v613
    %v615 = vpop.f32.mrb[0].mxu0
    %v616 = vadd.f32 %v534, %v615
    %617 = vdwg.mxu0
    %618 = vmatprep.subr.mxu0 %v389
    %619 = vmatpush1.msra.mxu0 %v388
    %620 = vmatprep.subr.mxu0 %v393
    %621 = vmatpush1.msra.mxu0 %v392
    %622 = vmatprep.subr.mxu0 %v397
    %623 = vmatpush1.msra.mxu0 %v396
    %624 = vmatprep.subr.mxu0 %v401
    %625 = vmatpush1.msra.mxu0 %v400
    %626 = vmatprep.subr.mxu0 %v405
    %627 = vmatpush1.msra.mxu0 %v404
    %628 = vmatprep.subr.mxu0 %v409
    %629 = vmatpush1.msra.mxu0 %v408
    %630 = vmatprep.subr.mxu0 %v413
    %631 = vmatpush1.msra.mxu0 %v412
    %632 = vmatprep.subr.mxu0 %v417
    %633 = vmatpush1.msra.mxu0 %v416
    %634 = vmatprep.subr.mxu0 %v421
    %635 = vmatpush1.msra.mxu0 %v420
    %636 = vmatprep.subr.mxu0 %v425
    %637 = vmatpush1.msra.mxu0 %v424
    %638 = vmatprep.subr.mxu0 %v429
    %639 = vmatpush1.msra.mxu0 %v428
    %640 = vmatprep.subr.mxu0 %v433
    %641 = vmatpush1.msra.mxu0 %v432
    %642 = vmatprep.subr.mxu0 %v437
    %643 = vmatpush1.msra.mxu0 %v436
    %644 = vmatprep.subr.mxu0 %v441
    %645 = vmatpush1.msra.mxu0 %v440
    %646 = vmatprep.subr.mxu0 %v445
    %647 = vmatpush1.msra.mxu0 %v444
    %648 = vmatprep.subr.mxu0 %v449
    %649 = vmatpush1.msra.mxu0 %v448
    %650 = vmatprep.subr.mxu0 %v453
    %651 = vmatpush1.msra.mxu0 %v452
    %652 = vmatprep.subr.mxu0 %v457
    %653 = vmatpush1.msra.mxu0 %v456
    %654 = vmatprep.subr.mxu0 %v461
    %655 = vmatpush1.msra.mxu0 %v460
    %656 = vmatprep.subr.mxu0 %v465
    %657 = vmatpush1.msra.mxu0 %v464
    %658 = vmatprep.subr.mxu0 %v469
    %659 = vmatpush1.msra.mxu0 %v468
    %660 = vmatprep.subr.mxu0 %v473
    %661 = vmatpush1.msra.mxu0 %v472
    %662 = vmatprep.subr.mxu0 %v477
    %663 = vmatpush1.msra.mxu0 %v476
    %664 = vmatprep.subr.mxu0 %v481
    %665 = vmatpush1.msra.mxu0 %v480
    %666 = vmatprep.subr.mxu0 %v485
    %667 = vmatpush1.msra.mxu0 %v484
    %668 = vmatprep.subr.mxu0 %v489
    %669 = vmatpush1.msra.mxu0 %v488
    %670 = vmatprep.subr.mxu0 %v493
    %671 = vmatpush1.msra.mxu0 %v492
    %672 = vmatprep.subr.mxu0 %v497
    %673 = vmatpush1.msra.mxu0 %v496
    %674 = vmatprep.subr.mxu0 %v501
    %675 = vmatpush1.msra.mxu0 %v500
    %676 = vmatprep.subr.mxu0 %v505
    %677 = vmatpush1.msra.mxu0 %v504
    %678 = vmatprep.subr.mxu0 %v509
    %679 = vmatpush1.msra.mxu0 %v508
    %680 = vmatprep.subr.mxu0 %v513
    %681 = vmatpush1.msra.mxu0 %v512
    %682 = vmatprep.mubr.f32.mxu0 %v523
    %683 = vmatmul.mubr.f32.gmra.mrb[0].mxu0 %v519
    %v684 = vpop.f32.mrb[0].mxu0
    %v685 = vadd.f32 %v538, %v684
    %v686 = vpop.f32.mrb[0].mxu0
    %v687 = vadd.f32 %v542, %v686
    %688 = vdwg.mxu0
    %v689 = vxor.u32 %v614, 2147483648
    %v690 = vmul.f32 %v689, 1.442695
    %v691 = vpow.pop %v690
    %v692 = vadd.f32 %v691, 1.0
    %v693 = vrcp.pop %v692
    %v694 = vmul.f32 1.0, %v693
    %v695 = vxor.u32 %v616, 2147483648
    %v696 = vmul.f32 %v695, 1.442695
    %v697 = vpow.pop %v696
    %v698 = vadd.f32 %v697, 1.0
    %v699 = vrcp.pop %v698
    %v700 = vmul.f32 1.0, %v699
    %v701 = vmul.f32 %v694, %v687
    %v702 = vadd.f32 %v685, %v701
    %v703 = vtanh.pop %v702
    %v704 = vsub.f32 1.0, %v700
    %v705 = vmul.f32 %v704, %v703
    %v706 = vmul.f32 %v700, %v380
    %v707 = vadd.f32 %v705, %v706
    %708 = vst [vmem:[#allocation9 + $0x1] sm:$0x1] %v707
    %v709 = vld [vmem:[#allocation4 + $0x2] sm:$0x1]
    %710 = vst.msk [vmem:[#allocation3] sm:$0x1] %vm55, %v709
    %711 = vst.msk [vmem:[#allocation3 + $0x1] sm:$0x1] %vm55, %v707
    %v712 = vld [vmem:[#allocation3] sm:$0x3]
    %v713 = vld [vmem:[#allocation7] sm:$0xff]
    %v714 = vld [vmem:[#allocation7 + $0x8] sm:$0xff]
    %v715 = vld [vmem:[#allocation7 + $0x10] sm:$0xff]
    %v716 = vld [vmem:[#allocation7 + $0x18] sm:$0xff]
    %v717 = vld [vmem:[#allocation7 + $0x20] sm:$0xff]
    %v718 = vld [vmem:[#allocation7 + $0x28] sm:$0xff]
    %v719 = vld [vmem:[#allocation7 + $0x30] sm:$0xff]
    %v720 = vld [vmem:[#allocation7 + $0x38] sm:$0xff]
    %v721 = vld [vmem:[#allocation7 + $0x40] sm:$0xff]
    %v722 = vld [vmem:[#allocation7 + $0x48] sm:$0xff]
    %v723 = vld [vmem:[#allocation7 + $0x50] sm:$0xff]
    %v724 = vld [vmem:[#allocation7 + $0x58] sm:$0xff]
    %v725 = vld [vmem:[#allocation7 + $0x60] sm:$0xff]
    %v726 = vld [vmem:[#allocation7 + $0x68] sm:$0xff]
    %v727 = vld [vmem:[#allocation7 + $0x70] sm:$0xff]
    %v728 = vld [vmem:[#allocation7 + $0x78] sm:$0xff]
    %v729 = vld [vmem:[#allocation7 + $0x80] sm:$0xff]
    %v730 = vld [vmem:[#allocation7 + $0x88] sm:$0xff]
    %v731 = vld [vmem:[#allocation7 + $0x90] sm:$0xff]
    %v732 = vld [vmem:[#allocation7 + $0x98] sm:$0xff]
    %v733 = vld [vmem:[#allocation7 + $0xa0] sm:$0xff]
    %v734 = vld [vmem:[#allocation7 + $0xa8] sm:$0xff]
    %v735 = vld [vmem:[#allocation7 + $0xb0] sm:$0xff]
    %v736 = vld [vmem:[#allocation7 + $0xb8] sm:$0xff]
    %v737 = vld [vmem:[#allocation7 + $0xc0] sm:$0xff]
    %v738 = vld [vmem:[#allocation7 + $0xc8] sm:$0xff]
    %v739 = vld [vmem:[#allocation7 + $0xd0] sm:$0xff]
    %v740 = vld [vmem:[#allocation7 + $0xd8] sm:$0xff]
    %v741 = vld [vmem:[#allocation7 + $0xe0] sm:$0xff]
    %v742 = vld [vmem:[#allocation7 + $0xe8] sm:$0xff]
    %v743 = vld [vmem:[#allocation7 + $0xf0] sm:$0xff]
    %v744 = vld [vmem:[#allocation7 + $0xf8] sm:$0xff]
    %v745 = vld [vmem:[#allocation7 + $0x100] sm:$0xff]
    %v746 = vld [vmem:[#allocation7 + $0x108] sm:$0xff]
    %v747 = vld [vmem:[#allocation7 + $0x110] sm:$0xff]
    %v748 = vld [vmem:[#allocation7 + $0x118] sm:$0xff]
    %v749 = vld [vmem:[#allocation7 + $0x120] sm:$0xff]
    %v750 = vld [vmem:[#allocation7 + $0x128] sm:$0xff]
    %v751 = vld [vmem:[#allocation7 + $0x130] sm:$0xff]
    %v752 = vld [vmem:[#allocation7 + $0x138] sm:$0xff]
    %v753 = vld [vmem:[#allocation7 + $0x140] sm:$0xff]
    %v754 = vld [vmem:[#allocation7 + $0x148] sm:$0xff]
    %v755 = vld [vmem:[#allocation7 + $0x150] sm:$0xff]
    %v756 = vld [vmem:[#allocation7 + $0x158] sm:$0xff]
    %v757 = vld [vmem:[#allocation7 + $0x160] sm:$0xff]
    %v758 = vld [vmem:[#allocation7 + $0x168] sm:$0xff]
    %v759 = vld [vmem:[#allocation7 + $0x170] sm:$0xff]
    %v760 = vld [vmem:[#allocation7 + $0x178] sm:$0xff]
    %v761 = vld [vmem:[#allocation7 + $0x180] sm:$0xff]
    %v762 = vld [vmem:[#allocation7 + $0x188] sm:$0xff]
    %v763 = vld [vmem:[#allocation7 + $0x190] sm:$0xff]
    %v764 = vld [vmem:[#allocation7 + $0x198] sm:$0xff]
    %v765 = vld [vmem:[#allocation7 + $0x1a0] sm:$0xff]
    %v766 = vld [vmem:[#allocation7 + $0x1a8] sm:$0xff]
    %v767 = vld [vmem:[#allocation7 + $0x1b0] sm:$0xff]
    %v768 = vld [vmem:[#allocation7 + $0x1b8] sm:$0xff]
    %v769 = vld [vmem:[#allocation7 + $0x1c0] sm:$0xff]
    %v770 = vld [vmem:[#allocation7 + $0x1c8] sm:$0xff]
    %v771 = vld [vmem:[#allocation7 + $0x1d0] sm:$0xff]
    %v772 = vld [vmem:[#allocation7 + $0x1d8] sm:$0xff]
    %v773 = vld [vmem:[#allocation7 + $0x1e0] sm:$0xff]
    %v774 = vld [vmem:[#allocation7 + $0x1e8] sm:$0xff]
    %v775 = vld [vmem:[#allocation7 + $0x1f0] sm:$0xff]
    %v776 = vld [vmem:[#allocation7 + $0x1f8] sm:$0xff]
    %v777 = vld [vmem:[#allocation7 + $0x200] sm:$0xff]
    %v778 = vld [vmem:[#allocation7 + $0x208] sm:$0xff]
    %v779 = vld [vmem:[#allocation7 + $0x210] sm:$0xff]
    %v780 = vld [vmem:[#allocation7 + $0x218] sm:$0xff]
    %v781 = vld [vmem:[#allocation7 + $0x220] sm:$0xff]
    %v782 = vld [vmem:[#allocation7 + $0x228] sm:$0xff]
    %v783 = vld [vmem:[#allocation7 + $0x230] sm:$0xff]
    %v784 = vld [vmem:[#allocation7 + $0x238] sm:$0xff]
    %v785 = vld [vmem:[#allocation7 + $0x240] sm:$0xff]
    %v786 = vld [vmem:[#allocation7 + $0x248] sm:$0xff]
    %v787 = vld [vmem:[#allocation7 + $0x250] sm:$0xff]
    %v788 = vld [vmem:[#allocation7 + $0x258] sm:$0xff]
    %v789 = vld [vmem:[#allocation7 + $0x260] sm:$0xff]
    %v790 = vld [vmem:[#allocation7 + $0x268] sm:$0xff]
    %v791 = vld [vmem:[#allocation7 + $0x270] sm:$0xff]
    %v792 = vld [vmem:[#allocation7 + $0x278] sm:$0xff]
    %v793 = vld [vmem:[#allocation7 + $0x280] sm:$0xff]
    %v794 = vld [vmem:[#allocation7 + $0x288] sm:$0xff]
    %v795 = vld [vmem:[#allocation7 + $0x290] sm:$0xff]
    %v796 = vld [vmem:[#allocation7 + $0x298] sm:$0xff]
    %v797 = vld [vmem:[#allocation7 + $0x2a0] sm:$0xff]
    %v798 = vld [vmem:[#allocation7 + $0x2a8] sm:$0xff]
    %v799 = vld [vmem:[#allocation7 + $0x2b0] sm:$0xff]
    %v800 = vld [vmem:[#allocation7 + $0x2b8] sm:$0xff]
    %v801 = vld [vmem:[#allocation7 + $0x2c0] sm:$0xff]
    %v802 = vld [vmem:[#allocation7 + $0x2c8] sm:$0xff]
    %v803 = vld [vmem:[#allocation7 + $0x2d0] sm:$0xff]
    %v804 = vld [vmem:[#allocation7 + $0x2d8] sm:$0xff]
    %v805 = vld [vmem:[#allocation7 + $0x2e0] sm:$0xff]
    %v806 = vld [vmem:[#allocation7 + $0x2e8] sm:$0xff]
    %v807 = vld [vmem:[#allocation7 + $0x2f0] sm:$0xff]
    %v808 = vld [vmem:[#allocation7 + $0x2f8] sm:$0xff]
    %v809 = vld [vmem:[#allocation7 + $0x300] sm:$0xff]
    %v810 = vld [vmem:[#allocation7 + $0x308] sm:$0xff]
    %v811 = vld [vmem:[#allocation7 + $0x310] sm:$0xff]
    %v812 = vld [vmem:[#allocation7 + $0x318] sm:$0xff]
    %v813 = vld [vmem:[#allocation7 + $0x320] sm:$0xff]
    %v814 = vld [vmem:[#allocation7 + $0x328] sm:$0xff]
    %v815 = vld [vmem:[#allocation7 + $0x330] sm:$0xff]
    %v816 = vld [vmem:[#allocation7 + $0x338] sm:$0xff]
    %v817 = vld [vmem:[#allocation7 + $0x340] sm:$0xff]
    %v818 = vld [vmem:[#allocation7 + $0x348] sm:$0xff]
    %v819 = vld [vmem:[#allocation7 + $0x350] sm:$0xff]
    %v820 = vld [vmem:[#allocation7 + $0x358] sm:$0xff]
    %v821 = vld [vmem:[#allocation7 + $0x360] sm:$0xff]
    %v822 = vld [vmem:[#allocation7 + $0x368] sm:$0xff]
    %v823 = vld [vmem:[#allocation7 + $0x370] sm:$0xff]
    %v824 = vld [vmem:[#allocation7 + $0x378] sm:$0xff]
    %v825 = vld [vmem:[#allocation7 + $0x380] sm:$0xff]
    %v826 = vld [vmem:[#allocation7 + $0x388] sm:$0xff]
    %v827 = vld [vmem:[#allocation7 + $0x390] sm:$0xff]
    %v828 = vld [vmem:[#allocation7 + $0x398] sm:$0xff]
    %v829 = vld [vmem:[#allocation7 + $0x3a0] sm:$0xff]
    %v830 = vld [vmem:[#allocation7 + $0x3a8] sm:$0xff]
    %v831 = vld [vmem:[#allocation7 + $0x3b0] sm:$0xff]
    %v832 = vld [vmem:[#allocation7 + $0x3b8] sm:$0xff]
    %v833 = vld [vmem:[#allocation7 + $0x3c0] sm:$0xff]
    %v834 = vld [vmem:[#allocation7 + $0x3c8] sm:$0xff]
    %v835 = vld [vmem:[#allocation7 + $0x3d0] sm:$0xff]
    %v836 = vld [vmem:[#allocation7 + $0x3d8] sm:$0xff]
    %v837 = vld [vmem:[#allocation7 + $0x3e0] sm:$0xff]
    %v838 = vld [vmem:[#allocation7 + $0x3e8] sm:$0xff]
    %v839 = vld [vmem:[#allocation7 + $0x3f0] sm:$0xff]
    %v840 = vld [vmem:[#allocation7 + $0x3f8] sm:$0xff]
    %v841 = vld [vmem:[%s3] sm:$0xf]
    %v843 = vlaneseq
    %v844 = vshrl.u32 %v843, 7
    %v845 = vsub.s32 0, %v844
    %v846 = vrot.slane %v712, %v845
    %v847 = vlaneseq
    %v848 = vshrl.u32 %v847, 7
    %v849 = vsub.s32 1, %v848
    %v850 = vrot.slane %v712, %v849
    %v854 = vlaneseq
    %v855 = vshrl.u32 %v854, 7
    %v856 = vsub.s32 0, %v855
    %v857 = vrot.slane %v841, %v856
    %v858 = vlaneseq
    %v859 = vshrl.u32 %v858, 7
    %v860 = vsub.s32 1, %v859
    %v861 = vrot.slane %v841, %v860
    %v862 = vlaneseq
    %v863 = vshrl.u32 %v862, 7
    %v864 = vsub.s32 2, %v863
    %v865 = vrot.slane %v841, %v864
    %v866 = vlaneseq
    %v867 = vshrl.u32 %v866, 7
    %v868 = vsub.s32 3, %v867
    %v869 = vrot.slane %v841, %v868
    %874 = vmatprep.subr.mxu0 %v714
    %875 = vmatpush1.msra.mxu0 %v713
    %876 = vmatprep.subr.mxu0 %v718
    %877 = vmatpush1.msra.mxu0 %v717
    %878 = vmatprep.subr.mxu0 %v722
    %879 = vmatpush1.msra.mxu0 %v721
    %880 = vmatprep.subr.mxu0 %v726
    %881 = vmatpush1.msra.mxu0 %v725
    %882 = vmatprep.subr.mxu0 %v730
    %883 = vmatpush1.msra.mxu0 %v729
    %884 = vmatprep.subr.mxu0 %v734
    %885 = vmatpush1.msra.mxu0 %v733
    %886 = vmatprep.subr.mxu0 %v738
    %887 = vmatpush1.msra.mxu0 %v737
    %888 = vmatprep.subr.mxu0 %v742
    %889 = vmatpush1.msra.mxu0 %v741
    %890 = vmatprep.subr.mxu0 %v746
    %891 = vmatpush1.msra.mxu0 %v745
    %892 = vmatprep.subr.mxu0 %v750
    %893 = vmatpush1.msra.mxu0 %v749
    %894 = vmatprep.subr.mxu0 %v754
    %895 = vmatpush1.msra.mxu0 %v753
    %896 = vmatprep.subr.mxu0 %v758
    %897 = vmatpush1.msra.mxu0 %v757
    %898 = vmatprep.subr.mxu0 %v762
    %899 = vmatpush1.msra.mxu0 %v761
    %900 = vmatprep.subr.mxu0 %v766
    %901 = vmatpush1.msra.mxu0 %v765
    %902 = vmatprep.subr.mxu0 %v770
    %903 = vmatpush1.msra.mxu0 %v769
    %904 = vmatprep.subr.mxu0 %v774
    %905 = vmatpush1.msra.mxu0 %v773
    %906 = vmatprep.subr.mxu0 %v778
    %907 = vmatpush1.msra.mxu0 %v777
    %908 = vmatprep.subr.mxu0 %v782
    %909 = vmatpush1.msra.mxu0 %v781
    %910 = vmatprep.subr.mxu0 %v786
    %911 = vmatpush1.msra.mxu0 %v785
    %912 = vmatprep.subr.mxu0 %v790
    %913 = vmatpush1.msra.mxu0 %v789
    %914 = vmatprep.subr.mxu0 %v794
    %915 = vmatpush1.msra.mxu0 %v793
    %916 = vmatprep.subr.mxu0 %v798
    %917 = vmatpush1.msra.mxu0 %v797
    %918 = vmatprep.subr.mxu0 %v802
    %919 = vmatpush1.msra.mxu0 %v801
    %920 = vmatprep.subr.mxu0 %v806
    %921 = vmatpush1.msra.mxu0 %v805
    %922 = vmatprep.subr.mxu0 %v810
    %923 = vmatpush1.msra.mxu0 %v809
    %924 = vmatprep.subr.mxu0 %v814
    %925 = vmatpush1.msra.mxu0 %v813
    %926 = vmatprep.subr.mxu0 %v818
    %927 = vmatpush1.msra.mxu0 %v817
    %928 = vmatprep.subr.mxu0 %v822
    %929 = vmatpush1.msra.mxu0 %v821
    %930 = vmatprep.subr.mxu0 %v826
    %931 = vmatpush1.msra.mxu0 %v825
    %932 = vmatprep.subr.mxu0 %v830
    %933 = vmatpush1.msra.mxu0 %v829
    %934 = vmatprep.subr.mxu0 %v834
    %935 = vmatpush1.msra.mxu0 %v833
    %936 = vmatprep.subr.mxu0 %v838
    %937 = vmatpush1.msra.mxu0 %v837
    %938 = vmatprep.mubr.f32.mxu0 %v850
    %939 = vmatmul.mubr.f32.gmra.mrb[0].mxu0 %v846
    %v940 = vpop.f32.mrb[0].mxu0
    %v941 = vadd.f32 %v857, %v940
    %v942 = vpop.f32.mrb[0].mxu0
    %v943 = vadd.f32 %v861, %v942
    %944 = vdwg.mxu0
    %945 = vmatprep.subr.mxu0 %v716
    %946 = vmatpush1.msra.mxu0 %v715
    %947 = vmatprep.subr.mxu0 %v720
    %948 = vmatpush1.msra.mxu0 %v719
    %949 = vmatprep.subr.mxu0 %v724
    %950 = vmatpush1.msra.mxu0 %v723
    %951 = vmatprep.subr.mxu0 %v728
    %952 = vmatpush1.msra.mxu0 %v727
    %953 = vmatprep.subr.mxu0 %v732
    %954 = vmatpush1.msra.mxu0 %v731
    %955 = vmatprep.subr.mxu0 %v736
    %956 = vmatpush1.msra.mxu0 %v735
    %957 = vmatprep.subr.mxu0 %v740
    %958 = vmatpush1.msra.mxu0 %v739
    %959 = vmatprep.subr.mxu0 %v744
    %960 = vmatpush1.msra.mxu0 %v743
    %961 = vmatprep.subr.mxu0 %v748
    %962 = vmatpush1.msra.mxu0 %v747
    %963 = vmatprep.subr.mxu0 %v752
    %964 = vmatpush1.msra.mxu0 %v751
    %965 = vmatprep.subr.mxu0 %v756
    %966 = vmatpush1.msra.mxu0 %v755
    %967 = vmatprep.subr.mxu0 %v760
    %968 = vmatpush1.msra.mxu0 %v759
    %969 = vmatprep.subr.mxu0 %v764
    %970 = vmatpush1.msra.mxu0 %v763
    %971 = vmatprep.subr.mxu0 %v768
    %972 = vmatpush1.msra.mxu0 %v767
    %973 = vmatprep.subr.mxu0 %v772
    %974 = vmatpush1.msra.mxu0 %v771
    %975 = vmatprep.subr.mxu0 %v776
    %976 = vmatpush1.msra.mxu0 %v775
    %977 = vmatprep.subr.mxu0 %v780
    %978 = vmatpush1.msra.mxu0 %v779
    %979 = vmatprep.subr.mxu0 %v784
    %980 = vmatpush1.msra.mxu0 %v783
    %981 = vmatprep.subr.mxu0 %v788
    %982 = vmatpush1.msra.mxu0 %v787
    %983 = vmatprep.subr.mxu0 %v792
    %984 = vmatpush1.msra.mxu0 %v791
    %985 = vmatprep.subr.mxu0 %v796
    %986 = vmatpush1.msra.mxu0 %v795
    %987 = vmatprep.subr.mxu0 %v800
    %988 = vmatpush1.msra.mxu0 %v799
    %989 = vmatprep.subr.mxu0 %v804
    %990 = vmatpush1.msra.mxu0 %v803
    %991 = vmatprep.subr.mxu0 %v808
    %992 = vmatpush1.msra.mxu0 %v807
    %993 = vmatprep.subr.mxu0 %v812
    %994 = vmatpush1.msra.mxu0 %v811
    %995 = vmatprep.subr.mxu0 %v816
    %996 = vmatpush1.msra.mxu0 %v815
    %997 = vmatprep.subr.mxu0 %v820
    %998 = vmatpush1.msra.mxu0 %v819
    %999 = vmatprep.subr.mxu0 %v824
    %1000 = vmatpush1.msra.mxu0 %v823
    %1001 = vmatprep.subr.mxu0 %v828
    %1002 = vmatpush1.msra.mxu0 %v827
    %1003 = vmatprep.subr.mxu0 %v832
    %1004 = vmatpush1.msra.mxu0 %v831
    %1005 = vmatprep.subr.mxu0 %v836
    %1006 = vmatpush1.msra.mxu0 %v835
    %1007 = vmatprep.subr.mxu0 %v840
    %1008 = vmatpush1.msra.mxu0 %v839
    %1009 = vmatprep.mubr.f32.mxu0 %v850
    %1010 = vmatmul.mubr.f32.gmra.mrb[0].mxu0 %v846
    %v1011 = vpop.f32.mrb[0].mxu0
    %v1012 = vadd.f32 %v865, %v1011
    %v1013 = vpop.f32.mrb[0].mxu0
    %v1014 = vadd.f32 %v869, %v1013
    %1015 = vdwg.mxu0
    %v1016 = vxor.u32 %v941, 2147483648
    %v1017 = vmul.f32 %v1016, 1.442695
    %v1018 = vpow.pop %v1017
    %v1019 = vadd.f32 %v1018, 1.0
    %v1020 = vrcp.pop %v1019
    %v1021 = vmul.f32 1.0, %v1020
    %v1022 = vxor.u32 %v943, 2147483648
    %v1023 = vmul.f32 %v1022, 1.442695
    %v1024 = vpow.pop %v1023
    %v1025 = vadd.f32 %v1024, 1.0
    %v1026 = vrcp.pop %v1025
    %v1027 = vmul.f32 1.0, %v1026
    %v1028 = vmul.f32 %v1021, %v1014
    %v1029 = vadd.f32 %v1012, %v1028
    %v1030 = vtanh.pop %v1029
    %v1031 = vsub.f32 1.0, %v1027
    %v1032 = vmul.f32 %v1031, %v1030
    %v1033 = vmul.f32 %v1027, %v707
    %v1034 = vadd.f32 %v1032, %v1033
    %1035 = vst [vmem:[#allocation9 + $0x2] sm:$0x1] %v1034
    %v1036 = vld [vmem:[#allocation4 + $0x3] sm:$0x1]
    %1037 = vst.msk [vmem:[#allocation3] sm:$0x1] %vm55, %v1036
    %1038 = vst.msk [vmem:[#allocation3 + $0x1] sm:$0x1] %vm55, %v1034
    %v1039 = vld [vmem:[#allocation3] sm:$0x3]
    %v1040 = vld [vmem:[#allocation7] sm:$0xff]
    %v1041 = vld [vmem:[#allocation7 + $0x8] sm:$0xff]
    %v1042 = vld [vmem:[#allocation7 + $0x10] sm:$0xff]
    %v1043 = vld [vmem:[#allocation7 + $0x18] sm:$0xff]
    %v1044 = vld [vmem:[#allocation7 + $0x20] sm:$0xff]
    %v1045 = vld [vmem:[#allocation7 + $0x28] sm:$0xff]
    %v1046 = vld [vmem:[#allocation7 + $0x30] sm:$0xff]
    %v1047 = vld [vmem:[#allocation7 + $0x38] sm:$0xff]
    %v1048 = vld [vmem:[#allocation7 + $0x40] sm:$0xff]
    %v1049 = vld [vmem:[#allocation7 + $0x48] sm:$0xff]
    %v1050 = vld [vmem:[#allocation7 + $0x50] sm:$0xff]
    %v1051 = vld [vmem:[#allocation7 + $0x58] sm:$0xff]
    %v1052 = vld [vmem:[#allocation7 + $0x60] sm:$0xff]
    %v1053 = vld [vmem:[#allocation7 + $0x68] sm:$0xff]
    %v1054 = vld [vmem:[#allocation7 + $0x70] sm:$0xff]
    %v1055 = vld [vmem:[#allocation7 + $0x78] sm:$0xff]
    %v1056 = vld [vmem:[#allocation7 + $0x80] sm:$0xff]
    %v1057 = vld [vmem:[#allocation7 + $0x88] sm:$0xff]
    %v1058 = vld [vmem:[#allocation7 + $0x90] sm:$0xff]
    %v1059 = vld [vmem:[#allocation7 + $0x98] sm:$0xff]
    %v1060 = vld [vmem:[#allocation7 + $0xa0] sm:$0xff]
    %v1061 = vld [vmem:[#allocation7 + $0xa8] sm:$0xff]
    %v1062 = vld [vmem:[#allocation7 + $0xb0] sm:$0xff]
    %v1063 = vld [vmem:[#allocation7 + $0xb8] sm:$0xff]
    %v1064 = vld [vmem:[#allocation7 + $0xc0] sm:$0xff]
    %v1065 = vld [vmem:[#allocation7 + $0xc8] sm:$0xff]
    %v1066 = vld [vmem:[#allocation7 + $0xd0] sm:$0xff]
    %v1067 = vld [vmem:[#allocation7 + $0xd8] sm:$0xff]
    %v1068 = vld [vmem:[#allocation7 + $0xe0] sm:$0xff]
    %v1069 = vld [vmem:[#allocation7 + $0xe8] sm:$0xff]
    %v1070 = vld [vmem:[#allocation7 + $0xf0] sm:$0xff]
    %v1071 = vld [vmem:[#allocation7 + $0xf8] sm:$0xff]
    %v1072 = vld [vmem:[#allocation7 + $0x100] sm:$0xff]
    %v1073 = vld [vmem:[#allocation7 + $0x108] sm:$0xff]
    %v1074 = vld [vmem:[#allocation7 + $0x110] sm:$0xff]
    %v1075 = vld [vmem:[#allocation7 + $0x118] sm:$0xff]
    %v1076 = vld [vmem:[#allocation7 + $0x120] sm:$0xff]
    %v1077 = vld [vmem:[#allocation7 + $0x128] sm:$0xff]
    %v1078 = vld [vmem:[#allocation7 + $0x130] sm:$0xff]
    %v1079 = vld [vmem:[#allocation7 + $0x138] sm:$0xff]
    %v1080 = vld [vmem:[#allocation7 + $0x140] sm:$0xff]
    %v1081 = vld [vmem:[#allocation7 + $0x148] sm:$0xff]
    %v1082 = vld [vmem:[#allocation7 + $0x150] sm:$0xff]
    %v1083 = vld [vmem:[#allocation7 + $0x158] sm:$0xff]
    %v1084 = vld [vmem:[#allocation7 + $0x160] sm:$0xff]
    %v1085 = vld [vmem:[#allocation7 + $0x168] sm:$0xff]
    %v1086 = vld [vmem:[#allocation7 + $0x170] sm:$0xff]
    %v1087 = vld [vmem:[#allocation7 + $0x178] sm:$0xff]
    %v1088 = vld [vmem:[#allocation7 + $0x180] sm:$0xff]
    %v1089 = vld [vmem:[#allocation7 + $0x188] sm:$0xff]
    %v1090 = vld [vmem:[#allocation7 + $0x190] sm:$0xff]
    %v1091 = vld [vmem:[#allocation7 + $0x198] sm:$0xff]
    %v1092 = vld [vmem:[#allocation7 + $0x1a0] sm:$0xff]
    %v1093 = vld [vmem:[#allocation7 + $0x1a8] sm:$0xff]
    %v1094 = vld [vmem:[#allocation7 + $0x1b0] sm:$0xff]
    %v1095 = vld [vmem:[#allocation7 + $0x1b8] sm:$0xff]
    %v1096 = vld [vmem:[#allocation7 + $0x1c0] sm:$0xff]
    %v1097 = vld [vmem:[#allocation7 + $0x1c8] sm:$0xff]
    %v1098 = vld [vmem:[#allocation7 + $0x1d0] sm:$0xff]
    %v1099 = vld [vmem:[#allocation7 + $0x1d8] sm:$0xff]
    %v1100 = vld [vmem:[#allocation7 + $0x1e0] sm:$0xff]
    %v1101 = vld [vmem:[#allocation7 + $0x1e8] sm:$0xff]
    %v1102 = vld [vmem:[#allocation7 + $0x1f0] sm:$0xff]
    %v1103 = vld [vmem:[#allocation7 + $0x1f8] sm:$0xff]
    %v1104 = vld [vmem:[#allocation7 + $0x200] sm:$0xff]
    %v1105 = vld [vmem:[#allocation7 + $0x208] sm:$0xff]
    %v1106 = vld [vmem:[#allocation7 + $0x210] sm:$0xff]
    %v1107 = vld [vmem:[#allocation7 + $0x218] sm:$0xff]
    %v1108 = vld [vmem:[#allocation7 + $0x220] sm:$0xff]
    %v1109 = vld [vmem:[#allocation7 + $0x228] sm:$0xff]
    %v1110 = vld [vmem:[#allocation7 + $0x230] sm:$0xff]
    %v1111 = vld [vmem:[#allocation7 + $0x238] sm:$0xff]
    %v1112 = vld [vmem:[#allocation7 + $0x240] sm:$0xff]
    %v1113 = vld [vmem:[#allocation7 + $0x248] sm:$0xff]
    %v1114 = vld [vmem:[#allocation7 + $0x250] sm:$0xff]
    %v1115 = vld [vmem:[#allocation7 + $0x258] sm:$0xff]
    %v1116 = vld [vmem:[#allocation7 + $0x260] sm:$0xff]
    %v1117 = vld [vmem:[#allocation7 + $0x268] sm:$0xff]
    %v1118 = vld [vmem:[#allocation7 + $0x270] sm:$0xff]
    %v1119 = vld [vmem:[#allocation7 + $0x278] sm:$0xff]
    %v1120 = vld [vmem:[#allocation7 + $0x280] sm:$0xff]
    %v1121 = vld [vmem:[#allocation7 + $0x288] sm:$0xff]
    %v1122 = vld [vmem:[#allocation7 + $0x290] sm:$0xff]
    %v1123 = vld [vmem:[#allocation7 + $0x298] sm:$0xff]
    %v1124 = vld [vmem:[#allocation7 + $0x2a0] sm:$0xff]
    %v1125 = vld [vmem:[#allocation7 + $0x2a8] sm:$0xff]
    %v1126 = vld [vmem:[#allocation7 + $0x2b0] sm:$0xff]
    %v1127 = vld [vmem:[#allocation7 + $0x2b8] sm:$0xff]
    %v1128 = vld [vmem:[#allocation7 + $0x2c0] sm:$0xff]
    %v1129 = vld [vmem:[#allocation7 + $0x2c8] sm:$0xff]
    %v1130 = vld [vmem:[#allocation7 + $0x2d0] sm:$0xff]
    %v1131 = vld [vmem:[#allocation7 + $0x2d8] sm:$0xff]
    %v1132 = vld [vmem:[#allocation7 + $0x2e0] sm:$0xff]
    %v1133 = vld [vmem:[#allocation7 + $0x2e8] sm:$0xff]
    %v1134 = vld [vmem:[#allocation7 + $0x2f0] sm:$0xff]
    %v1135 = vld [vmem:[#allocation7 + $0x2f8] sm:$0xff]
    %v1136 = vld [vmem:[#allocation7 + $0x300] sm:$0xff]
    %v1137 = vld [vmem:[#allocation7 + $0x308] sm:$0xff]
    %v1138 = vld [vmem:[#allocation7 + $0x310] sm:$0xff]
    %v1139 = vld [vmem:[#allocation7 + $0x318] sm:$0xff]
    %v1140 = vld [vmem:[#allocation7 + $0x320] sm:$0xff]
    %v1141 = vld [vmem:[#allocation7 + $0x328] sm:$0xff]
    %v1142 = vld [vmem:[#allocation7 + $0x330] sm:$0xff]
    %v1143 = vld [vmem:[#allocation7 + $0x338] sm:$0xff]
    %v1144 = vld [vmem:[#allocation7 + $0x340] sm:$0xff]
    %v1145 = vld [vmem:[#allocation7 + $0x348] sm:$0xff]
    %v1146 = vld [vmem:[#allocation7 + $0x350] sm:$0xff]
    %v1147 = vld [vmem:[#allocation7 + $0x358] sm:$0xff]
    %v1148 = vld [vmem:[#allocation7 + $0x360] sm:$0xff]
    %v1149 = vld [vmem:[#allocation7 + $0x368] sm:$0xff]
    %v1150 = vld [vmem:[#allocation7 + $0x370] sm:$0xff]
    %v1151 = vld [vmem:[#allocation7 + $0x378] sm:$0xff]
    %v1152 = vld [vmem:[#allocation7 + $0x380] sm:$0xff]
    %v1153 = vld [vmem:[#allocation7 + $0x388] sm:$0xff]
    %v1154 = vld [vmem:[#allocation7 + $0x390] sm:$0xff]
    %v1155 = vld [vmem:[#allocation7 + $0x398] sm:$0xff]
    %v1156 = vld [vmem:[#allocation7 + $0x3a0] sm:$0xff]
    %v1157 = vld [vmem:[#allocation7 + $0x3a8] sm:$0xff]
    %v1158 = vld [vmem:[#allocation7 + $0x3b0] sm:$0xff]
    %v1159 = vld [vmem:[#allocation7 + $0x3b8] sm:$0xff]
    %v1160 = vld [vmem:[#allocation7 + $0x3c0] sm:$0xff]
    %v1161 = vld [vmem:[#allocation7 + $0x3c8] sm:$0xff]
    %v1162 = vld [vmem:[#allocation7 + $0x3d0] sm:$0xff]
    %v1163 = vld [vmem:[#allocation7 + $0x3d8] sm:$0xff]
    %v1164 = vld [vmem:[#allocation7 + $0x3e0] sm:$0xff]
    %v1165 = vld [vmem:[#allocation7 + $0x3e8] sm:$0xff]
    %v1166 = vld [vmem:[#allocation7 + $0x3f0] sm:$0xff]
    %v1167 = vld [vmem:[#allocation7 + $0x3f8] sm:$0xff]
    %v1168 = vld [vmem:[%s3] sm:$0xf]
    %v1170 = vlaneseq
    %v1171 = vshrl.u32 %v1170, 7
    %v1172 = vsub.s32 0, %v1171
    %v1173 = vrot.slane %v1039, %v1172
    %v1174 = vlaneseq
    %v1175 = vshrl.u32 %v1174, 7
    %v1176 = vsub.s32 1, %v1175
    %v1177 = vrot.slane %v1039, %v1176
    %v1181 = vlaneseq
    %v1182 = vshrl.u32 %v1181, 7
    %v1183 = vsub.s32 0, %v1182
    %v1184 = vrot.slane %v1168, %v1183
    %v1185 = vlaneseq
    %v1186 = vshrl.u32 %v1185, 7
    %v1187 = vsub.s32 1, %v1186
    %v1188 = vrot.slane %v1168, %v1187
    %v1189 = vlaneseq
    %v1190 = vshrl.u32 %v1189, 7
    %v1191 = vsub.s32 2, %v1190
    %v1192 = vrot.slane %v1168, %v1191
    %v1193 = vlaneseq
    %v1194 = vshrl.u32 %v1193, 7
    %v1195 = vsub.s32 3, %v1194
    %v1196 = vrot.slane %v1168, %v1195
    %1201 = vmatprep.subr.mxu0 %v1041
    %1202 = vmatpush1.msra.mxu0 %v1040
    %1203 = vmatprep.subr.mxu0 %v1045
    %1204 = vmatpush1.msra.mxu0 %v1044
    %1205 = vmatprep.subr.mxu0 %v1049
    %1206 = vmatpush1.msra.mxu0 %v1048
    %1207 = vmatprep.subr.mxu0 %v1053
    %1208 = vmatpush1.msra.mxu0 %v1052
    %1209 = vmatprep.subr.mxu0 %v1057
    %1210 = vmatpush1.msra.mxu0 %v1056
    %1211 = vmatprep.subr.mxu0 %v1061
    %1212 = vmatpush1.msra.mxu0 %v1060
    %1213 = vmatprep.subr.mxu0 %v1065
    %1214 = vmatpush1.msra.mxu0 %v1064
    %1215 = vmatprep.subr.mxu0 %v1069
    %1216 = vmatpush1.msra.mxu0 %v1068
    %1217 = vmatprep.subr.mxu0 %v1073
    %1218 = vmatpush1.msra.mxu0 %v1072
    %1219 = vmatprep.subr.mxu0 %v1077
    %1220 = vmatpush1.msra.mxu0 %v1076
    %1221 = vmatprep.subr.mxu0 %v1081
    %1222 = vmatpush1.msra.mxu0 %v1080
    %1223 = vmatprep.subr.mxu0 %v1085
    %1224 = vmatpush1.msra.mxu0 %v1084
    %1225 = vmatprep.subr.mxu0 %v1089
    %1226 = vmatpush1.msra.mxu0 %v1088
    %1227 = vmatprep.subr.mxu0 %v1093
    %1228 = vmatpush1.msra.mxu0 %v1092
    %1229 = vmatprep.subr.mxu0 %v1097
    %1230 = vmatpush1.msra.mxu0 %v1096
    %1231 = vmatprep.subr.mxu0 %v1101
    %1232 = vmatpush1.msra.mxu0 %v1100
    %1233 = vmatprep.subr.mxu0 %v1105
    %1234 = vmatpush1.msra.mxu0 %v1104
    %1235 = vmatprep.subr.mxu0 %v1109
    %1236 = vmatpush1.msra.mxu0 %v1108
    %1237 = vmatprep.subr.mxu0 %v1113
    %1238 = vmatpush1.msra.mxu0 %v1112
    %1239 = vmatprep.subr.mxu0 %v1117
    %1240 = vmatpush1.msra.mxu0 %v1116
    %1241 = vmatprep.subr.mxu0 %v1121
    %1242 = vmatpush1.msra.mxu0 %v1120
    %1243 = vmatprep.subr.mxu0 %v1125
    %1244 = vmatpush1.msra.mxu0 %v1124
    %1245 = vmatprep.subr.mxu0 %v1129
    %1246 = vmatpush1.msra.mxu0 %v1128
    %1247 = vmatprep.subr.mxu0 %v1133
    %1248 = vmatpush1.msra.mxu0 %v1132
    %1249 = vmatprep.subr.mxu0 %v1137
    %1250 = vmatpush1.msra.mxu0 %v1136
    %1251 = vmatprep.subr.mxu0 %v1141
    %1252 = vmatpush1.msra.mxu0 %v1140
    %1253 = vmatprep.subr.mxu0 %v1145
    %1254 = vmatpush1.msra.mxu0 %v1144
    %1255 = vmatprep.subr.mxu0 %v1149
    %1256 = vmatpush1.msra.mxu0 %v1148
    %1257 = vmatprep.subr.mxu0 %v1153
    %1258 = vmatpush1.msra.mxu0 %v1152
    %1259 = vmatprep.subr.mxu0 %v1157
    %1260 = vmatpush1.msra.mxu0 %v1156
    %1261 = vmatprep.subr.mxu0 %v1161
    %1262 = vmatpush1.msra.mxu0 %v1160
    %1263 = vmatprep.subr.mxu0 %v1165
    %1264 = vmatpush1.msra.mxu0 %v1164
    %1265 = vmatprep.mubr.f32.mxu0 %v1177
    %1266 = vmatmul.mubr.f32.gmra.mrb[0].mxu0 %v1173
    %v1267 = vpop.f32.mrb[0].mxu0
    %v1268 = vadd.f32 %v1184, %v1267
    %v1269 = vpop.f32.mrb[0].mxu0
    %v1270 = vadd.f32 %v1188, %v1269
    %1271 = vdwg.mxu0
    %1272 = vmatprep.subr.mxu0 %v1043
    %1273 = vmatpush1.msra.mxu0 %v1042
    %1274 = vmatprep.subr.mxu0 %v1047
    %1275 = vmatpush1.msra.mxu0 %v1046
    %1276 = vmatprep.subr.mxu0 %v1051
    %1277 = vmatpush1.msra.mxu0 %v1050
    %1278 = vmatprep.subr.mxu0 %v1055
    %1279 = vmatpush1.msra.mxu0 %v1054
    %1280 = vmatprep.subr.mxu0 %v1059
    %1281 = vmatpush1.msra.mxu0 %v1058
    %1282 = vmatprep.subr.mxu0 %v1063
    %1283 = vmatpush1.msra.mxu0 %v1062
    %1284 = vmatprep.subr.mxu0 %v1067
    %1285 = vmatpush1.msra.mxu0 %v1066
    %1286 = vmatprep.subr.mxu0 %v1071
    %1287 = vmatpush1.msra.mxu0 %v1070
    %1288 = vmatprep.subr.mxu0 %v1075
    %1289 = vmatpush1.msra.mxu0 %v1074
    %1290 = vmatprep.subr.mxu0 %v1079
    %1291 = vmatpush1.msra.mxu0 %v1078
    %1292 = vmatprep.subr.mxu0 %v1083
    %1293 = vmatpush1.msra.mxu0 %v1082
    %1294 = vmatprep.subr.mxu0 %v1087
    %1295 = vmatpush1.msra.mxu0 %v1086
    %1296 = vmatprep.subr.mxu0 %v1091
    %1297 = vmatpush1.msra.mxu0 %v1090
    %1298 = vmatprep.subr.mxu0 %v1095
    %1299 = vmatpush1.msra.mxu0 %v1094
    %1300 = vmatprep.subr.mxu0 %v1099
    %1301 = vmatpush1.msra.mxu0 %v1098
    %1302 = vmatprep.subr.mxu0 %v1103
    %1303 = vmatpush1.msra.mxu0 %v1102
    %1304 = vmatprep.subr.mxu0 %v1107
    %1305 = vmatpush1.msra.mxu0 %v1106
    %1306 = vmatprep.subr.mxu0 %v1111
    %1307 = vmatpush1.msra.mxu0 %v1110
    %1308 = vmatprep.subr.mxu0 %v1115
    %1309 = vmatpush1.msra.mxu0 %v1114
    %1310 = vmatprep.subr.mxu0 %v1119
    %1311 = vmatpush1.msra.mxu0 %v1118
    %1312 = vmatprep.subr.mxu0 %v1123
    %1313 = vmatpush1.msra.mxu0 %v1122
    %1314 = vmatprep.subr.mxu0 %v1127
    %1315 = vmatpush1.msra.mxu0 %v1126
    %1316 = vmatprep.subr.mxu0 %v1131
    %1317 = vmatpush1.msra.mxu0 %v1130
    %1318 = vmatprep.subr.mxu0 %v1135
    %1319 = vmatpush1.msra.mxu0 %v1134
    %1320 = vmatprep.subr.mxu0 %v1139
    %1321 = vmatpush1.msra.mxu0 %v1138
    %1322 = vmatprep.subr.mxu0 %v1143
    %1323 = vmatpush1.msra.mxu0 %v1142
    %1324 = vmatprep.subr.mxu0 %v1147
    %1325 = vmatpush1.msra.mxu0 %v1146
    %1326 = vmatprep.subr.mxu0 %v1151
    %1327 = vmatpush1.msra.mxu0 %v1150
    %1328 = vmatprep.subr.mxu0 %v1155
    %1329 = vmatpush1.msra.mxu0 %v1154
    %1330 = vmatprep.subr.mxu0 %v1159
    %1331 = vmatpush1.msra.mxu0 %v1158
    %1332 = vmatprep.subr.mxu0 %v1163
    %1333 = vmatpush1.msra.mxu0 %v1162
    %1334 = vmatprep.subr.mxu0 %v1167
    %1335 = vmatpush1.msra.mxu0 %v1166
    %1336 = vmatprep.mubr.f32.mxu0 %v1177
    %1337 = vmatmul.mubr.f32.gmra.mrb[0].mxu0 %v1173
    %v1338 = vpop.f32.mrb[0].mxu0
    %v1339 = vadd.f32 %v1192, %v1338
    %v1340 = vpop.f32.mrb[0].mxu0
    %v1341 = vadd.f32 %v1196, %v1340
    %1342 = vdwg.mxu0
    %v1343 = vxor.u32 %v1268, 2147483648
    %v1344 = vmul.f32 %v1343, 1.442695
    %v1345 = vpow.pop %v1344
    %v1346 = vadd.f32 %v1345, 1.0
    %v1347 = vrcp.pop %v1346
    %v1348 = vmul.f32 1.0, %v1347
    %v1349 = vxor.u32 %v1270, 2147483648
    %v1350 = vmul.f32 %v1349, 1.442695
    %v1351 = vpow.pop %v1350
    %v1352 = vadd.f32 %v1351, 1.0
    %v1353 = vrcp.pop %v1352
    %v1354 = vmul.f32 1.0, %v1353
    %v1355 = vmul.f32 %v1348, %v1341
    %v1356 = vadd.f32 %v1339, %v1355
    %v1357 = vtanh.pop %v1356
    %v1358 = vsub.f32 1.0, %v1354
    %v1359 = vmul.f32 %v1358, %v1357
    %v1360 = vmul.f32 %v1354, %v1034
    %v1361 = vadd.f32 %v1359, %v1360
    %1362 = vst [vmem:[#allocation9 + $0x3] sm:$0x1] %v1361
    %v1363 = vld [vmem:[#allocation4 + $0x4] sm:$0x1]
    %1364 = vst.msk [vmem:[#allocation3] sm:$0x1] %vm55, %v1363
    %1365 = vst.msk [vmem:[#allocation3 + $0x1] sm:$0x1] %vm55, %v1361
    %v1366 = vld [vmem:[#allocation3] sm:$0x3]
    %v1367 = vld [vmem:[#allocation7] sm:$0xff]
    %v1368 = vld [vmem:[#allocation7 + $0x8] sm:$0xff]
    %v1369 = vld [vmem:[#allocation7 + $0x10] sm:$0xff]
    %v1370 = vld [vmem:[#allocation7 + $0x18] sm:$0xff]
    %v1371 = vld [vmem:[#allocation7 + $0x20] sm:$0xff]
    %v1372 = vld [vmem:[#allocation7 + $0x28] sm:$0xff]
    %v1373 = vld [vmem:[#allocation7 + $0x30] sm:$0xff]
    %v1374 = vld [vmem:[#allocation7 + $0x38] sm:$0xff]
    %v1375 = vld [vmem:[#allocation7 + $0x40] sm:$0xff]
    %v1376 = vld [vmem:[#allocation7 + $0x48] sm:$0xff]
    %v1377 = vld [vmem:[#allocation7 + $0x50] sm:$0xff]
    %v1378 = vld [vmem:[#allocation7 + $0x58] sm:$0xff]
    %v1379 = vld [vmem:[#allocation7 + $0x60] sm:$0xff]
    %v1380 = vld [vmem:[#allocation7 + $0x68] sm:$0xff]
    %v1381 = vld [vmem:[#allocation7 + $0x70] sm:$0xff]
    %v1382 = vld [vmem:[#allocation7 + $0x78] sm:$0xff]
    %v1383 = vld [vmem:[#allocation7 + $0x80] sm:$0xff]
    %v1384 = vld [vmem:[#allocation7 + $0x88] sm:$0xff]
    %v1385 = vld [vmem:[#allocation7 + $0x90] sm:$0xff]
    %v1386 = vld [vmem:[#allocation7 + $0x98] sm:$0xff]
    %v1387 = vld [vmem:[#allocation7 + $0xa0] sm:$0xff]
    %v1388 = vld [vmem:[#allocation7 + $0xa8] sm:$0xff]
    %v1389 = vld [vmem:[#allocation7 + $0xb0] sm:$0xff]
    %v1390 = vld [vmem:[#allocation7 + $0xb8] sm:$0xff]
    %v1391 = vld [vmem:[#allocation7 + $0xc0] sm:$0xff]
    %v1392 = vld [vmem:[#allocation7 + $0xc8] sm:$0xff]
    %v1393 = vld [vmem:[#allocation7 + $0xd0] sm:$0xff]
    %v1394 = vld [vmem:[#allocation7 + $0xd8] sm:$0xff]
    %v1395 = vld [vmem:[#allocation7 + $0xe0] sm:$0xff]
    %v1396 = vld [vmem:[#allocation7 + $0xe8] sm:$0xff]
    %v1397 = vld [vmem:[#allocation7 + $0xf0] sm:$0xff]
    %v1398 = vld [vmem:[#allocation7 + $0xf8] sm:$0xff]
    %v1399 = vld [vmem:[#allocation7 + $0x100] sm:$0xff]
    %v1400 = vld [vmem:[#allocation7 + $0x108] sm:$0xff]
    %v1401 = vld [vmem:[#allocation7 + $0x110] sm:$0xff]
    %v1402 = vld [vmem:[#allocation7 + $0x118] sm:$0xff]
    %v1403 = vld [vmem:[#allocation7 + $0x120] sm:$0xff]
    %v1404 = vld [vmem:[#allocation7 + $0x128] sm:$0xff]
    %v1405 = vld [vmem:[#allocation7 + $0x130] sm:$0xff]
    %v1406 = vld [vmem:[#allocation7 + $0x138] sm:$0xff]
    %v1407 = vld [vmem:[#allocation7 + $0x140] sm:$0xff]
    %v1408 = vld [vmem:[#allocation7 + $0x148] sm:$0xff]
    %v1409 = vld [vmem:[#allocation7 + $0x150] sm:$0xff]
    %v1410 = vld [vmem:[#allocation7 + $0x158] sm:$0xff]
    %v1411 = vld [vmem:[#allocation7 + $0x160] sm:$0xff]
    %v1412 = vld [vmem:[#allocation7 + $0x168] sm:$0xff]
    %v1413 = vld [vmem:[#allocation7 + $0x170] sm:$0xff]
    %v1414 = vld [vmem:[#allocation7 + $0x178] sm:$0xff]
    %v1415 = vld [vmem:[#allocation7 + $0x180] sm:$0xff]
    %v1416 = vld [vmem:[#allocation7 + $0x188] sm:$0xff]
    %v1417 = vld [vmem:[#allocation7 + $0x190] sm:$0xff]
    %v1418 = vld [vmem:[#allocation7 + $0x198] sm:$0xff]
    %v1419 = vld [vmem:[#allocation7 + $0x1a0] sm:$0xff]
    %v1420 = vld [vmem:[#allocation7 + $0x1a8] sm:$0xff]
    %v1421 = vld [vmem:[#allocation7 + $0x1b0] sm:$0xff]
    %v1422 = vld [vmem:[#allocation7 + $0x1b8] sm:$0xff]
    %v1423 = vld [vmem:[#allocation7 + $0x1c0] sm:$0xff]
    %v1424 = vld [vmem:[#allocation7 + $0x1c8] sm:$0xff]
    %v1425 = vld [vmem:[#allocation7 + $0x1d0] sm:$0xff]
    %v1426 = vld [vmem:[#allocation7 + $0x1d8] sm:$0xff]
    %v1427 = vld [vmem:[#allocation7 + $0x1e0] sm:$0xff]
    %v1428 = vld [vmem:[#allocation7 + $0x1e8] sm:$0xff]
    %v1429 = vld [vmem:[#allocation7 + $0x1f0] sm:$0xff]
    %v1430 = vld [vmem:[#allocation7 + $0x1f8] sm:$0xff]
    %v1431 = vld [vmem:[#allocation7 + $0x200] sm:$0xff]
    %v1432 = vld [vmem:[#allocation7 + $0x208] sm:$0xff]
    %v1433 = vld [vmem:[#allocation7 + $0x210] sm:$0xff]
    %v1434 = vld [vmem:[#allocation7 + $0x218] sm:$0xff]
    %v1435 = vld [vmem:[#allocation7 + $0x220] sm:$0xff]
    %v1436 = vld [vmem:[#allocation7 + $0x228] sm:$0xff]
    %v1437 = vld [vmem:[#allocation7 + $0x230] sm:$0xff]
    %v1438 = vld [vmem:[#allocation7 + $0x238] sm:$0xff]
    %v1439 = vld [vmem:[#allocation7 + $0x240] sm:$0xff]
    %v1440 = vld [vmem:[#allocation7 + $0x248] sm:$0xff]
    %v1441 = vld [vmem:[#allocation7 + $0x250] sm:$0xff]
    %v1442 = vld [vmem:[#allocation7 + $0x258] sm:$0xff]
    %v1443 = vld [vmem:[#allocation7 + $0x260] sm:$0xff]
    %v1444 = vld [vmem:[#allocation7 + $0x268] sm:$0xff]
    %v1445 = vld [vmem:[#allocation7 + $0x270] sm:$0xff]
    %v1446 = vld [vmem:[#allocation7 + $0x278] sm:$0xff]
    %v1447 = vld [vmem:[#allocation7 + $0x280] sm:$0xff]
    %v1448 = vld [vmem:[#allocation7 + $0x288] sm:$0xff]
    %v1449 = vld [vmem:[#allocation7 + $0x290] sm:$0xff]
    %v1450 = vld [vmem:[#allocation7 + $0x298] sm:$0xff]
    %v1451 = vld [vmem:[#allocation7 + $0x2a0] sm:$0xff]
    %v1452 = vld [vmem:[#allocation7 + $0x2a8] sm:$0xff]
    %v1453 = vld [vmem:[#allocation7 + $0x2b0] sm:$0xff]
    %v1454 = vld [vmem:[#allocation7 + $0x2b8] sm:$0xff]
    %v1455 = vld [vmem:[#allocation7 + $0x2c0] sm:$0xff]
    %v1456 = vld [vmem:[#allocation7 + $0x2c8] sm:$0xff]
    %v1457 = vld [vmem:[#allocation7 + $0x2d0] sm:$0xff]
    %v1458 = vld [vmem:[#allocation7 + $0x2d8] sm:$0xff]
    %v1459 = vld [vmem:[#allocation7 + $0x2e0] sm:$0xff]
    %v1460 = vld [vmem:[#allocation7 + $0x2e8] sm:$0xff]
    %v1461 = vld [vmem:[#allocation7 + $0x2f0] sm:$0xff]
    %v1462 = vld [vmem:[#allocation7 + $0x2f8] sm:$0xff]
    %v1463 = vld [vmem:[#allocation7 + $0x300] sm:$0xff]
    %v1464 = vld [vmem:[#allocation7 + $0x308] sm:$0xff]
    %v1465 = vld [vmem:[#allocation7 + $0x310] sm:$0xff]
    %v1466 = vld [vmem:[#allocation7 + $0x318] sm:$0xff]
    %v1467 = vld [vmem:[#allocation7 + $0x320] sm:$0xff]
    %v1468 = vld [vmem:[#allocation7 + $0x328] sm:$0xff]
    %v1469 = vld [vmem:[#allocation7 + $0x330] sm:$0xff]
    %v1470 = vld [vmem:[#allocation7 + $0x338] sm:$0xff]
    %v1471 = vld [vmem:[#allocation7 + $0x340] sm:$0xff]
    %v1472 = vld [vmem:[#allocation7 + $0x348] sm:$0xff]
    %v1473 = vld [vmem:[#allocation7 + $0x350] sm:$0xff]
    %v1474 = vld [vmem:[#allocation7 + $0x358] sm:$0xff]
    %v1475 = vld [vmem:[#allocation7 + $0x360] sm:$0xff]
    %v1476 = vld [vmem:[#allocation7 + $0x368] sm:$0xff]
    %v1477 = vld [vmem:[#allocation7 + $0x370] sm:$0xff]
    %v1478 = vld [vmem:[#allocation7 + $0x378] sm:$0xff]
    %v1479 = vld [vmem:[#allocation7 + $0x380] sm:$0xff]
    %v1480 = vld [vmem:[#allocation7 + $0x388] sm:$0xff]
    %v1481 = vld [vmem:[#allocation7 + $0x390] sm:$0xff]
    %v1482 = vld [vmem:[#allocation7 + $0x398] sm:$0xff]
    %v1483 = vld [vmem:[#allocation7 + $0x3a0] sm:$0xff]
    %v1484 = vld [vmem:[#allocation7 + $0x3a8] sm:$0xff]
    %v1485 = vld [vmem:[#allocation7 + $0x3b0] sm:$0xff]
    %v1486 = vld [vmem:[#allocation7 + $0x3b8] sm:$0xff]
    %v1487 = vld [vmem:[#allocation7 + $0x3c0] sm:$0xff]
    %v1488 = vld [vmem:[#allocation7 + $0x3c8] sm:$0xff]
    %v1489 = vld [vmem:[#allocation7 + $0x3d0] sm:$0xff]
    %v1490 = vld [vmem:[#allocation7 + $0x3d8] sm:$0xff]
    %v1491 = vld [vmem:[#allocation7 + $0x3e0] sm:$0xff]
    %v1492 = vld [vmem:[#allocation7 + $0x3e8] sm:$0xff]
    %v1493 = vld [vmem:[#allocation7 + $0x3f0] sm:$0xff]
    %v1494 = vld [vmem:[#allocation7 + $0x3f8] sm:$0xff]
    %v1495 = vld [vmem:[%s3] sm:$0xf]
    %v1497 = vlaneseq
    %v1498 = vshrl.u32 %v1497, 7
    %v1499 = vsub.s32 0, %v1498
    %v1500 = vrot.slane %v1366, %v1499
    %v1501 = vlaneseq
    %v1502 = vshrl.u32 %v1501, 7
    %v1503 = vsub.s32 1, %v1502
    %v1504 = vrot.slane %v1366, %v1503
    %v1508 = vlaneseq
    %v1509 = vshrl.u32 %v1508, 7
    %v1510 = vsub.s32 0, %v1509
    %v1511 = vrot.slane %v1495, %v1510
    %v1512 = vlaneseq
    %v1513 = vshrl.u32 %v1512, 7
    %v1514 = vsub.s32 1, %v1513
    %v1515 = vrot.slane %v1495, %v1514
    %v1516 = vlaneseq
    %v1517 = vshrl.u32 %v1516, 7
    %v1518 = vsub.s32 2, %v1517
    %v1519 = vrot.slane %v1495, %v1518
    %v1520 = vlaneseq
    %v1521 = vshrl.u32 %v1520, 7
    %v1522 = vsub.s32 3, %v1521
    %v1523 = vrot.slane %v1495, %v1522
    %1528 = vmatprep.subr.mxu0 %v1368
    %1529 = vmatpush1.msra.mxu0 %v1367
    %1530 = vmatprep.subr.mxu0 %v1372
    %1531 = vmatpush1.msra.mxu0 %v1371
    %1532 = vmatprep.subr.mxu0 %v1376
    %1533 = vmatpush1.msra.mxu0 %v1375
    %1534 = vmatprep.subr.mxu0 %v1380
    %1535 = vmatpush1.msra.mxu0 %v1379
    %1536 = vmatprep.subr.mxu0 %v1384
    %1537 = vmatpush1.msra.mxu0 %v1383
    %1538 = vmatprep.subr.mxu0 %v1388
    %1539 = vmatpush1.msra.mxu0 %v1387
    %1540 = vmatprep.subr.mxu0 %v1392
    %1541 = vmatpush1.msra.mxu0 %v1391
    %1542 = vmatprep.subr.mxu0 %v1396
    %1543 = vmatpush1.msra.mxu0 %v1395
    %1544 = vmatprep.subr.mxu0 %v1400
    %1545 = vmatpush1.msra.mxu0 %v1399
    %1546 = vmatprep.subr.mxu0 %v1404
    %1547 = vmatpush1.msra.mxu0 %v1403
    %1548 = vmatprep.subr.mxu0 %v1408
    %1549 = vmatpush1.msra.mxu0 %v1407
    %1550 = vmatprep.subr.mxu0 %v1412
    %1551 = vmatpush1.msra.mxu0 %v1411
    %1552 = vmatprep.subr.mxu0 %v1416
    %1553 = vmatpush1.msra.mxu0 %v1415
    %1554 = vmatprep.subr.mxu0 %v1420
    %1555 = vmatpush1.msra.mxu0 %v1419
    %1556 = vmatprep.subr.mxu0 %v1424
    %1557 = vmatpush1.msra.mxu0 %v1423
    %1558 = vmatprep.subr.mxu0 %v1428
    %1559 = vmatpush1.msra.mxu0 %v1427
    %1560 = vmatprep.subr.mxu0 %v1432
    %1561 = vmatpush1.msra.mxu0 %v1431
    %1562 = vmatprep.subr.mxu0 %v1436
    %1563 = vmatpush1.msra.mxu0 %v1435
    %1564 = vmatprep.subr.mxu0 %v1440
    %1565 = vmatpush1.msra.mxu0 %v1439
    %1566 = vmatprep.subr.mxu0 %v1444
    %1567 = vmatpush1.msra.mxu0 %v1443
    %1568 = vmatprep.subr.mxu0 %v1448
    %1569 = vmatpush1.msra.mxu0 %v1447
    %1570 = vmatprep.subr.mxu0 %v1452
    %1571 = vmatpush1.msra.mxu0 %v1451
    %1572 = vmatprep.subr.mxu0 %v1456
    %1573 = vmatpush1.msra.mxu0 %v1455
    %1574 = vmatprep.subr.mxu0 %v1460
    %1575 = vmatpush1.msra.mxu0 %v1459
    %1576 = vmatprep.subr.mxu0 %v1464
    %1577 = vmatpush1.msra.mxu0 %v1463
    %1578 = vmatprep.subr.mxu0 %v1468
    %1579 = vmatpush1.msra.mxu0 %v1467
    %1580 = vmatprep.subr.mxu0 %v1472
    %1581 = vmatpush1.msra.mxu0 %v1471
    %1582 = vmatprep.subr.mxu0 %v1476
    %1583 = vmatpush1.msra.mxu0 %v1475
    %1584 = vmatprep.subr.mxu0 %v1480
    %1585 = vmatpush1.msra.mxu0 %v1479
    %1586 = vmatprep.subr.mxu0 %v1484
    %1587 = vmatpush1.msra.mxu0 %v1483
    %1588 = vmatprep.subr.mxu0 %v1488
    %1589 = vmatpush1.msra.mxu0 %v1487
    %1590 = vmatprep.subr.mxu0 %v1492
    %1591 = vmatpush1.msra.mxu0 %v1491
    %1592 = vmatprep.mubr.f32.mxu0 %v1504
    %1593 = vmatmul.mubr.f32.gmra.mrb[0].mxu0 %v1500
    %v1594 = vpop.f32.mrb[0].mxu0
    %v1595 = vadd.f32 %v1511, %v1594
    %v1596 = vpop.f32.mrb[0].mxu0
    %v1597 = vadd.f32 %v1515, %v1596
    %1598 = vdwg.mxu0
    %1599 = vmatprep.subr.mxu0 %v1370
    %1600 = vmatpush1.msra.mxu0 %v1369
    %1601 = vmatprep.subr.mxu0 %v1374
    %1602 = vmatpush1.msra.mxu0 %v1373
    %1603 = vmatprep.subr.mxu0 %v1378
    %1604 = vmatpush1.msra.mxu0 %v1377
    %1605 = vmatprep.subr.mxu0 %v1382
    %1606 = vmatpush1.msra.mxu0 %v1381
    %1607 = vmatprep.subr.mxu0 %v1386
    %1608 = vmatpush1.msra.mxu0 %v1385
    %1609 = vmatprep.subr.mxu0 %v1390
    %1610 = vmatpush1.msra.mxu0 %v1389
    %1611 = vmatprep.subr.mxu0 %v1394
    %1612 = vmatpush1.msra.mxu0 %v1393
    %1613 = vmatprep.subr.mxu0 %v1398
    %1614 = vmatpush1.msra.mxu0 %v1397
    %1615 = vmatprep.subr.mxu0 %v1402
    %1616 = vmatpush1.msra.mxu0 %v1401
    %1617 = vmatprep.subr.mxu0 %v1406
    %1618 = vmatpush1.msra.mxu0 %v1405
    %1619 = vmatprep.subr.mxu0 %v1410
    %1620 = vmatpush1.msra.mxu0 %v1409
    %1621 = vmatprep.subr.mxu0 %v1414
    %1622 = vmatpush1.msra.mxu0 %v1413
    %1623 = vmatprep.subr.mxu0 %v1418
    %1624 = vmatpush1.msra.mxu0 %v1417
    %1625 = vmatprep.subr.mxu0 %v1422
    %1626 = vmatpush1.msra.mxu0 %v1421
    %1627 = vmatprep.subr.mxu0 %v1426
    %1628 = vmatpush1.msra.mxu0 %v1425
    %1629 = vmatprep.subr.mxu0 %v1430
    %1630 = vmatpush1.msra.mxu0 %v1429
    %1631 = vmatprep.subr.mxu0 %v1434
    %1632 = vmatpush1.msra.mxu0 %v1433
    %1633 = vmatprep.subr.mxu0 %v1438
    %1634 = vmatpush1.msra.mxu0 %v1437
    %1635 = vmatprep.subr.mxu0 %v1442
    %1636 = vmatpush1.msra.mxu0 %v1441
    %1637 = vmatprep.subr.mxu0 %v1446
    %1638 = vmatpush1.msra.mxu0 %v1445
    %1639 = vmatprep.subr.mxu0 %v1450
    %1640 = vmatpush1.msra.mxu0 %v1449
    %1641 = vmatprep.subr.mxu0 %v1454
    %1642 = vmatpush1.msra.mxu0 %v1453
    %1643 = vmatprep.subr.mxu0 %v1458
    %1644 = vmatpush1.msra.mxu0 %v1457
    %1645 = vmatprep.subr.mxu0 %v1462
    %1646 = vmatpush1.msra.mxu0 %v1461
    %1647 = vmatprep.subr.mxu0 %v1466
    %1648 = vmatpush1.msra.mxu0 %v1465
    %1649 = vmatprep.subr.mxu0 %v1470
    %1650 = vmatpush1.msra.mxu0 %v1469
    %1651 = vmatprep.subr.mxu0 %v1474
    %1652 = vmatpush1.msra.mxu0 %v1473
    %1653 = vmatprep.subr.mxu0 %v1478
    %1654 = vmatpush1.msra.mxu0 %v1477
    %1655 = vmatprep.subr.mxu0 %v1482
    %1656 = vmatpush1.msra.mxu0 %v1481
    %1657 = vmatprep.subr.mxu0 %v1486
    %1658 = vmatpush1.msra.mxu0 %v1485
    %1659 = vmatprep.subr.mxu0 %v1490
    %1660 = vmatpush1.msra.mxu0 %v1489
    %1661 = vmatprep.subr.mxu0 %v1494
    %1662 = vmatpush1.msra.mxu0 %v1493
    %1663 = vmatprep.mubr.f32.mxu0 %v1504
    %1664 = vmatmul.mubr.f32.gmra.mrb[0].mxu0 %v1500
    %v1665 = vpop.f32.mrb[0].mxu0
    %v1666 = vadd.f32 %v1519, %v1665
    %v1667 = vpop.f32.mrb[0].mxu0
    %v1668 = vadd.f32 %v1523, %v1667
    %1669 = vdwg.mxu0
    %v1670 = vxor.u32 %v1595, 2147483648
    %v1671 = vmul.f32 %v1670, 1.442695
    %v1672 = vpow.pop %v1671
    %v1673 = vadd.f32 %v1672, 1.0
    %v1674 = vrcp.pop %v1673
    %v1675 = vmul.f32 1.0, %v1674
    %v1676 = vxor.u32 %v1597, 2147483648
    %v1677 = vmul.f32 %v1676, 1.442695
    %v1678 = vpow.pop %v1677
    %v1679 = vadd.f32 %v1678, 1.0
    %v1680 = vrcp.pop %v1679
    %v1681 = vmul.f32 1.0, %v1680
    %v1682 = vmul.f32 %v1675, %v1668
    %v1683 = vadd.f32 %v1666, %v1682
    %v1684 = vtanh.pop %v1683
    %v1685 = vsub.f32 1.0, %v1681
    %v1686 = vmul.f32 %v1685, %v1684
    %v1687 = vmul.f32 %v1681, %v1361
    %v1688 = vadd.f32 %v1686, %v1687
    %1689 = vst [vmem:[#allocation9 + $0x4] sm:$0x1] %v1688
    %v1690 = vld [vmem:[#allocation4 + $0x5] sm:$0x1]
    %1691 = vst.msk [vmem:[#allocation3] sm:$0x1] %vm55, %v1690
    %1692 = vst.msk [vmem:[#allocation3 + $0x1] sm:$0x1] %vm55, %v1688
    %v1693 = vld [vmem:[#allocation3] sm:$0x3]
    %v1694 = vld [vmem:[#allocation7] sm:$0xff]
    %v1695 = vld [vmem:[#allocation7 + $0x8] sm:$0xff]
    %v1696 = vld [vmem:[#allocation7 + $0x10] sm:$0xff]
    %v1697 = vld [vmem:[#allocation7 + $0x18] sm:$0xff]
    %v1698 = vld [vmem:[#allocation7 + $0x20] sm:$0xff]
    %v1699 = vld [vmem:[#allocation7 + $0x28] sm:$0xff]
    %v1700 = vld [vmem:[#allocation7 + $0x30] sm:$0xff]
    %v1701 = vld [vmem:[#allocation7 + $0x38] sm:$0xff]
    %v1702 = vld [vmem:[#allocation7 + $0x40] sm:$0xff]
    %v1703 = vld [vmem:[#allocation7 + $0x48] sm:$0xff]
    %v1704 = vld [vmem:[#allocation7 + $0x50] sm:$0xff]
    %v1705 = vld [vmem:[#allocation7 + $0x58] sm:$0xff]
    %v1706 = vld [vmem:[#allocation7 + $0x60] sm:$0xff]
    %v1707 = vld [vmem:[#allocation7 + $0x68] sm:$0xff]
    %v1708 = vld [vmem:[#allocation7 + $0x70] sm:$0xff]
    %v1709 = vld [vmem:[#allocation7 + $0x78] sm:$0xff]
    %v1710 = vld [vmem:[#allocation7 + $0x80] sm:$0xff]
    %v1711 = vld [vmem:[#allocation7 + $0x88] sm:$0xff]
    %v1712 = vld [vmem:[#allocation7 + $0x90] sm:$0xff]
    %v1713 = vld [vmem:[#allocation7 + $0x98] sm:$0xff]
    %v1714 = vld [vmem:[#allocation7 + $0xa0] sm:$0xff]
    %v1715 = vld [vmem:[#allocation7 + $0xa8] sm:$0xff]
    %v1716 = vld [vmem:[#allocation7 + $0xb0] sm:$0xff]
    %v1717 = vld [vmem:[#allocation7 + $0xb8] sm:$0xff]
    %v1718 = vld [vmem:[#allocation7 + $0xc0] sm:$0xff]
    %v1719 = vld [vmem:[#allocation7 + $0xc8] sm:$0xff]
    %v1720 = vld [vmem:[#allocation7 + $0xd0] sm:$0xff]
    %v1721 = vld [vmem:[#allocation7 + $0xd8] sm:$0xff]
    %v1722 = vld [vmem:[#allocation7 + $0xe0] sm:$0xff]
    %v1723 = vld [vmem:[#allocation7 + $0xe8] sm:$0xff]
    %v1724 = vld [vmem:[#allocation7 + $0xf0] sm:$0xff]
    %v1725 = vld [vmem:[#allocation7 + $0xf8] sm:$0xff]
    %v1726 = vld [vmem:[#allocation7 + $0x100] sm:$0xff]
    %v1727 = vld [vmem:[#allocation7 + $0x108] sm:$0xff]
    %v1728 = vld [vmem:[#allocation7 + $0x110] sm:$0xff]
    %v1729 = vld [vmem:[#allocation7 + $0x118] sm:$0xff]
    %v1730 = vld [vmem:[#allocation7 + $0x120] sm:$0xff]
    %v1731 = vld [vmem:[#allocation7 + $0x128] sm:$0xff]
    %v1732 = vld [vmem:[#allocation7 + $0x130] sm:$0xff]
    %v1733 = vld [vmem:[#allocation7 + $0x138] sm:$0xff]
    %v1734 = vld [vmem:[#allocation7 + $0x140] sm:$0xff]
    %v1735 = vld [vmem:[#allocation7 + $0x148] sm:$0xff]
    %v1736 = vld [vmem:[#allocation7 + $0x150] sm:$0xff]
    %v1737 = vld [vmem:[#allocation7 + $0x158] sm:$0xff]
    %v1738 = vld [vmem:[#allocation7 + $0x160] sm:$0xff]
    %v1739 = vld [vmem:[#allocation7 + $0x168] sm:$0xff]
    %v1740 = vld [vmem:[#allocation7 + $0x170] sm:$0xff]
    %v1741 = vld [vmem:[#allocation7 + $0x178] sm:$0xff]
    %v1742 = vld [vmem:[#allocation7 + $0x180] sm:$0xff]
    %v1743 = vld [vmem:[#allocation7 + $0x188] sm:$0xff]
    %v1744 = vld [vmem:[#allocation7 + $0x190] sm:$0xff]
    %v1745 = vld [vmem:[#allocation7 + $0x198] sm:$0xff]
    %v1746 = vld [vmem:[#allocation7 + $0x1a0] sm:$0xff]
    %v1747 = vld [vmem:[#allocation7 + $0x1a8] sm:$0xff]
    %v1748 = vld [vmem:[#allocation7 + $0x1b0] sm:$0xff]
    %v1749 = vld [vmem:[#allocation7 + $0x1b8] sm:$0xff]
    %v1750 = vld [vmem:[#allocation7 + $0x1c0] sm:$0xff]
    %v1751 = vld [vmem:[#allocation7 + $0x1c8] sm:$0xff]
    %v1752 = vld [vmem:[#allocation7 + $0x1d0] sm:$0xff]
    %v1753 = vld [vmem:[#allocation7 + $0x1d8] sm:$0xff]
    %v1754 = vld [vmem:[#allocation7 + $0x1e0] sm:$0xff]
    %v1755 = vld [vmem:[#allocation7 + $0x1e8] sm:$0xff]
    %v1756 = vld [vmem:[#allocation7 + $0x1f0] sm:$0xff]
    %v1757 = vld [vmem:[#allocation7 + $0x1f8] sm:$0xff]
    %v1758 = vld [vmem:[#allocation7 + $0x200] sm:$0xff]
    %v1759 = vld [vmem:[#allocation7 + $0x208] sm:$0xff]
    %v1760 = vld [vmem:[#allocation7 + $0x210] sm:$0xff]
    %v1761 = vld [vmem:[#allocation7 + $0x218] sm:$0xff]
    %v1762 = vld [vmem:[#allocation7 + $0x220] sm:$0xff]
    %v1763 = vld [vmem:[#allocation7 + $0x228] sm:$0xff]
    %v1764 = vld [vmem:[#allocation7 + $0x230] sm:$0xff]
    %v1765 = vld [vmem:[#allocation7 + $0x238] sm:$0xff]
    %v1766 = vld [vmem:[#allocation7 + $0x240] sm:$0xff]
    %v1767 = vld [vmem:[#allocation7 + $0x248] sm:$0xff]
    %v1768 = vld [vmem:[#allocation7 + $0x250] sm:$0xff]
    %v1769 = vld [vmem:[#allocation7 + $0x258] sm:$0xff]
    %v1770 = vld [vmem:[#allocation7 + $0x260] sm:$0xff]
    %v1771 = vld [vmem:[#allocation7 + $0x268] sm:$0xff]
    %v1772 = vld [vmem:[#allocation7 + $0x270] sm:$0xff]
    %v1773 = vld [vmem:[#allocation7 + $0x278] sm:$0xff]
    %v1774 = vld [vmem:[#allocation7 + $0x280] sm:$0xff]
    %v1775 = vld [vmem:[#allocation7 + $0x288] sm:$0xff]
    %v1776 = vld [vmem:[#allocation7 + $0x290] sm:$0xff]
    %v1777 = vld [vmem:[#allocation7 + $0x298] sm:$0xff]
    %v1778 = vld [vmem:[#allocation7 + $0x2a0] sm:$0xff]
    %v1779 = vld [vmem:[#allocation7 + $0x2a8] sm:$0xff]
    %v1780 = vld [vmem:[#allocation7 + $0x2b0] sm:$0xff]
    %v1781 = vld [vmem:[#allocation7 + $0x2b8] sm:$0xff]
    %v1782 = vld [vmem:[#allocation7 + $0x2c0] sm:$0xff]
    %v1783 = vld [vmem:[#allocation7 + $0x2c8] sm:$0xff]
    %v1784 = vld [vmem:[#allocation7 + $0x2d0] sm:$0xff]
    %v1785 = vld [vmem:[#allocation7 + $0x2d8] sm:$0xff]
    %v1786 = vld [vmem:[#allocation7 + $0x2e0] sm:$0xff]
    %v1787 = vld [vmem:[#allocation7 + $0x2e8] sm:$0xff]
    %v1788 = vld [vmem:[#allocation7 + $0x2f0] sm:$0xff]
    %v1789 = vld [vmem:[#allocation7 + $0x2f8] sm:$0xff]
    %v1790 = vld [vmem:[#allocation7 + $0x300] sm:$0xff]
    %v1791 = vld [vmem:[#allocation7 + $0x308] sm:$0xff]
    %v1792 = vld [vmem:[#allocation7 + $0x310] sm:$0xff]
    %v1793 = vld [vmem:[#allocation7 + $0x318] sm:$0xff]
    %v1794 = vld [vmem:[#allocation7 + $0x320] sm:$0xff]
    %v1795 = vld [vmem:[#allocation7 + $0x328] sm:$0xff]
    %v1796 = vld [vmem:[#allocation7 + $0x330] sm:$0xff]
    %v1797 = vld [vmem:[#allocation7 + $0x338] sm:$0xff]
    %v1798 = vld [vmem:[#allocation7 + $0x340] sm:$0xff]
    %v1799 = vld [vmem:[#allocation7 + $0x348] sm:$0xff]
    %v1800 = vld [vmem:[#allocation7 + $0x350] sm:$0xff]
    %v1801 = vld [vmem:[#allocation7 + $0x358] sm:$0xff]
    %v1802 = vld [vmem:[#allocation7 + $0x360] sm:$0xff]
    %v1803 = vld [vmem:[#allocation7 + $0x368] sm:$0xff]
    %v1804 = vld [vmem:[#allocation7 + $0x370] sm:$0xff]
    %v1805 = vld [vmem:[#allocation7 + $0x378] sm:$0xff]
    %v1806 = vld [vmem:[#allocation7 + $0x380] sm:$0xff]
    %v1807 = vld [vmem:[#allocation7 + $0x388] sm:$0xff]
    %v1808 = vld [vmem:[#allocation7 + $0x390] sm:$0xff]
    %v1809 = vld [vmem:[#allocation7 + $0x398] sm:$0xff]
    %v1810 = vld [vmem:[#allocation7 + $0x3a0] sm:$0xff]
    %v1811 = vld [vmem:[#allocation7 + $0x3a8] sm:$0xff]
    %v1812 = vld [vmem:[#allocation7 + $0x3b0] sm:$0xff]
    %v1813 = vld [vmem:[#allocation7 + $0x3b8] sm:$0xff]
    %v1814 = vld [vmem:[#allocation7 + $0x3c0] sm:$0xff]
    %v1815 = vld [vmem:[#allocation7 + $0x3c8] sm:$0xff]
    %v1816 = vld [vmem:[#allocation7 + $0x3d0] sm:$0xff]
    %v1817 = vld [vmem:[#allocation7 + $0x3d8] sm:$0xff]
    %v1818 = vld [vmem:[#allocation7 + $0x3e0] sm:$0xff]
    %v1819 = vld [vmem:[#allocation7 + $0x3e8] sm:$0xff]
    %v1820 = vld [vmem:[#allocation7 + $0x3f0] sm:$0xff]
    %v1821 = vld [vmem:[#allocation7 + $0x3f8] sm:$0xff]
    %v1822 = vld [vmem:[%s3] sm:$0xf]
    %v1824 = vlaneseq
    %v1825 = vshrl.u32 %v1824, 7
    %v1826 = vsub.s32 0, %v1825
    %v1827 = vrot.slane %v1693, %v1826
    %v1828 = vlaneseq
    %v1829 = vshrl.u32 %v1828, 7
    %v1830 = vsub.s32 1, %v1829
    %v1831 = vrot.slane %v1693, %v1830
    %v1835 = vlaneseq
    %v1836 = vshrl.u32 %v1835, 7
    %v1837 = vsub.s32 0, %v1836
    %v1838 = vrot.slane %v1822, %v1837
    %v1839 = vlaneseq
    %v1840 = vshrl.u32 %v1839, 7
    %v1841 = vsub.s32 1, %v1840
    %v1842 = vrot.slane %v1822, %v1841
    %v1843 = vlaneseq
    %v1844 = vshrl.u32 %v1843, 7
    %v1845 = vsub.s32 2, %v1844
    %v1846 = vrot.slane %v1822, %v1845
    %v1847 = vlaneseq
    %v1848 = vshrl.u32 %v1847, 7
    %v1849 = vsub.s32 3, %v1848
    %v1850 = vrot.slane %v1822, %v1849
    %1855 = vmatprep.subr.mxu0 %v1695
    %1856 = vmatpush1.msra.mxu0 %v1694
    %1857 = vmatprep.subr.mxu0 %v1699
    %1858 = vmatpush1.msra.mxu0 %v1698
    %1859 = vmatprep.subr.mxu0 %v1703
    %1860 = vmatpush1.msra.mxu0 %v1702
    %1861 = vmatprep.subr.mxu0 %v1707
    %1862 = vmatpush1.msra.mxu0 %v1706
    %1863 = vmatprep.subr.mxu0 %v1711
    %1864 = vmatpush1.msra.mxu0 %v1710
    %1865 = vmatprep.subr.mxu0 %v1715
    %1866 = vmatpush1.msra.mxu0 %v1714
    %1867 = vmatprep.subr.mxu0 %v1719
    %1868 = vmatpush1.msra.mxu0 %v1718
    %1869 = vmatprep.subr.mxu0 %v1723
    %1870 = vmatpush1.msra.mxu0 %v1722
    %1871 = vmatprep.subr.mxu0 %v1727
    %1872 = vmatpush1.msra.mxu0 %v1726
    %1873 = vmatprep.subr.mxu0 %v1731
    %1874 = vmatpush1.msra.mxu0 %v1730
    %1875 = vmatprep.subr.mxu0 %v1735
    %1876 = vmatpush1.msra.mxu0 %v1734
    %1877 = vmatprep.subr.mxu0 %v1739
    %1878 = vmatpush1.msra.mxu0 %v1738
    %1879 = vmatprep.subr.mxu0 %v1743
    %1880 = vmatpush1.msra.mxu0 %v1742
    %1881 = vmatprep.subr.mxu0 %v1747
    %1882 = vmatpush1.msra.mxu0 %v1746
    %1883 = vmatprep.subr.mxu0 %v1751
    %1884 = vmatpush1.msra.mxu0 %v1750
    %1885 = vmatprep.subr.mxu0 %v1755
    %1886 = vmatpush1.msra.mxu0 %v1754
    %1887 = vmatprep.subr.mxu0 %v1759
    %1888 = vmatpush1.msra.mxu0 %v1758
    %1889 = vmatprep.subr.mxu0 %v1763
    %1890 = vmatpush1.msra.mxu0 %v1762
    %1891 = vmatprep.subr.mxu0 %v1767
    %1892 = vmatpush1.msra.mxu0 %v1766
    %1893 = vmatprep.subr.mxu0 %v1771
    %1894 = vmatpush1.msra.mxu0 %v1770
    %1895 = vmatprep.subr.mxu0 %v1775
    %1896 = vmatpush1.msra.mxu0 %v1774
    %1897 = vmatprep.subr.mxu0 %v1779
    %1898 = vmatpush1.msra.mxu0 %v1778
    %1899 = vmatprep.subr.mxu0 %v1783
    %1900 = vmatpush1.msra.mxu0 %v1782
    %1901 = vmatprep.subr.mxu0 %v1787
    %1902 = vmatpush1.msra.mxu0 %v1786
    %1903 = vmatprep.subr.mxu0 %v1791
    %1904 = vmatpush1.msra.mxu0 %v1790
    %1905 = vmatprep.subr.mxu0 %v1795
    %1906 = vmatpush1.msra.mxu0 %v1794
    %1907 = vmatprep.subr.mxu0 %v1799
    %1908 = vmatpush1.msra.mxu0 %v1798
    %1909 = vmatprep.subr.mxu0 %v1803
    %1910 = vmatpush1.msra.mxu0 %v1802
    %1911 = vmatprep.subr.mxu0 %v1807
    %1912 = vmatpush1.msra.mxu0 %v1806
    %1913 = vmatprep.subr.mxu0 %v1811
    %1914 = vmatpush1.msra.mxu0 %v1810
    %1915 = vmatprep.subr.mxu0 %v1815
    %1916 = vmatpush1.msra.mxu0 %v1814
    %1917 = vmatprep.subr.mxu0 %v1819
    %1918 = vmatpush1.msra.mxu0 %v1818
    %1919 = vmatprep.mubr.f32.mxu0 %v1831
    %1920 = vmatmul.mubr.f32.gmra.mrb[0].mxu0 %v1827
    %v1921 = vpop.f32.mrb[0].mxu0
    %v1922 = vadd.f32 %v1838, %v1921
    %v1923 = vpop.f32.mrb[0].mxu0
    %v1924 = vadd.f32 %v1842, %v1923
    %1925 = vdwg.mxu0
    %1926 = vmatprep.subr.mxu0 %v1697
    %1927 = vmatpush1.msra.mxu0 %v1696
    %1928 = vmatprep.subr.mxu0 %v1701
    %1929 = vmatpush1.msra.mxu0 %v1700
    %1930 = vmatprep.subr.mxu0 %v1705
    %1931 = vmatpush1.msra.mxu0 %v1704
    %1932 = vmatprep.subr.mxu0 %v1709
    %1933 = vmatpush1.msra.mxu0 %v1708
    %1934 = vmatprep.subr.mxu0 %v1713
    %1935 = vmatpush1.msra.mxu0 %v1712
    %1936 = vmatprep.subr.mxu0 %v1717
    %1937 = vmatpush1.msra.mxu0 %v1716
    %1938 = vmatprep.subr.mxu0 %v1721
    %1939 = vmatpush1.msra.mxu0 %v1720
    %1940 = vmatprep.subr.mxu0 %v1725
    %1941 = vmatpush1.msra.mxu0 %v1724
    %1942 = vmatprep.subr.mxu0 %v1729
    %1943 = vmatpush1.msra.mxu0 %v1728
    %1944 = vmatprep.subr.mxu0 %v1733
    %1945 = vmatpush1.msra.mxu0 %v1732
    %1946 = vmatprep.subr.mxu0 %v1737
    %1947 = vmatpush1.msra.mxu0 %v1736
    %1948 = vmatprep.subr.mxu0 %v1741
    %1949 = vmatpush1.msra.mxu0 %v1740
    %1950 = vmatprep.subr.mxu0 %v1745
    %1951 = vmatpush1.msra.mxu0 %v1744
    %1952 = vmatprep.subr.mxu0 %v1749
    %1953 = vmatpush1.msra.mxu0 %v1748
    %1954 = vmatprep.subr.mxu0 %v1753
    %1955 = vmatpush1.msra.mxu0 %v1752
    %1956 = vmatprep.subr.mxu0 %v1757
    %1957 = vmatpush1.msra.mxu0 %v1756
    %1958 = vmatprep.subr.mxu0 %v1761
    %1959 = vmatpush1.msra.mxu0 %v1760
    %1960 = vmatprep.subr.mxu0 %v1765
    %1961 = vmatpush1.msra.mxu0 %v1764
    %1962 = vmatprep.subr.mxu0 %v1769
    %1963 = vmatpush1.msra.mxu0 %v1768
    %1964 = vmatprep.subr.mxu0 %v1773
    %1965 = vmatpush1.msra.mxu0 %v1772
    %1966 = vmatprep.subr.mxu0 %v1777
    %1967 = vmatpush1.msra.mxu0 %v1776
    %1968 = vmatprep.subr.mxu0 %v1781
    %1969 = vmatpush1.msra.mxu0 %v1780
    %1970 = vmatprep.subr.mxu0 %v1785
    %1971 = vmatpush1.msra.mxu0 %v1784
    %1972 = vmatprep.subr.mxu0 %v1789
    %1973 = vmatpush1.msra.mxu0 %v1788
    %1974 = vmatprep.subr.mxu0 %v1793
    %1975 = vmatpush1.msra.mxu0 %v1792
    %1976 = vmatprep.subr.mxu0 %v1797
    %1977 = vmatpush1.msra.mxu0 %v1796
    %1978 = vmatprep.subr.mxu0 %v1801
    %1979 = vmatpush1.msra.mxu0 %v1800
    %1980 = vmatprep.subr.mxu0 %v1805
    %1981 = vmatpush1.msra.mxu0 %v1804
    %1982 = vmatprep.subr.mxu0 %v1809
    %1983 = vmatpush1.msra.mxu0 %v1808
    %1984 = vmatprep.subr.mxu0 %v1813
    %1985 = vmatpush1.msra.mxu0 %v1812
    %1986 = vmatprep.subr.mxu0 %v1817
    %1987 = vmatpush1.msra.mxu0 %v1816
    %1988 = vmatprep.subr.mxu0 %v1821
    %1989 = vmatpush1.msra.mxu0 %v1820
    %1990 = vmatprep.mubr.f32.mxu0 %v1831
    %1991 = vmatmul.mubr.f32.gmra.mrb[0].mxu0 %v1827
    %v1992 = vpop.f32.mrb[0].mxu0
    %v1993 = vadd.f32 %v1846, %v1992
    %v1994 = vpop.f32.mrb[0].mxu0
    %v1995 = vadd.f32 %v1850, %v1994
    %1996 = vdwg.mxu0
    %v1997 = vxor.u32 %v1922, 2147483648
    %v1998 = vmul.f32 %v1997, 1.442695
    %v1999 = vpow.pop %v1998
    %v2000 = vadd.f32 %v1999, 1.0
    %v2001 = vrcp.pop %v2000
    %v2002 = vmul.f32 1.0, %v2001
    %v2003 = vxor.u32 %v1924, 2147483648
    %v2004 = vmul.f32 %v2003, 1.442695
    %v2005 = vpow.pop %v2004
    %v2006 = vadd.f32 %v2005, 1.0
    %v2007 = vrcp.pop %v2006
    %v2008 = vmul.f32 1.0, %v2007
    %v2009 = vmul.f32 %v2002, %v1995
    %v2010 = vadd.f32 %v1993, %v2009
    %v2011 = vtanh.pop %v2010
    %v2012 = vsub.f32 1.0, %v2008
    %v2013 = vmul.f32 %v2012, %v2011
    %v2014 = vmul.f32 %v2008, %v1688
    %v2015 = vadd.f32 %v2013, %v2014
    %2016 = vst [vmem:[#allocation9 + $0x5] sm:$0x1] %v2015
    %v2017 = vld [vmem:[#allocation4 + $0x6] sm:$0x1]
    %2018 = vst.msk [vmem:[#allocation3] sm:$0x1] %vm55, %v2017
    %2019 = vst.msk [vmem:[#allocation3 + $0x1] sm:$0x1] %vm55, %v2015
    %v2020 = vld [vmem:[#allocation3] sm:$0x3]
    %v2021 = vld [vmem:[#allocation7] sm:$0xff]
    %v2022 = vld [vmem:[#allocation7 + $0x8] sm:$0xff]
    %v2023 = vld [vmem:[#allocation7 + $0x10] sm:$0xff]
    %v2024 = vld [vmem:[#allocation7 + $0x18] sm:$0xff]
    %v2025 = vld [vmem:[#allocation7 + $0x20] sm:$0xff]
    %v2026 = vld [vmem:[#allocation7 + $0x28] sm:$0xff]
    %v2027 = vld [vmem:[#allocation7 + $0x30] sm:$0xff]
    %v2028 = vld [vmem:[#allocation7 + $0x38] sm:$0xff]
    %v2029 = vld [vmem:[#allocation7 + $0x40] sm:$0xff]
    %v2030 = vld [vmem:[#allocation7 + $0x48] sm:$0xff]
    %v2031 = vld [vmem:[#allocation7 + $0x50] sm:$0xff]
    %v2032 = vld [vmem:[#allocation7 + $0x58] sm:$0xff]
    %v2033 = vld [vmem:[#allocation7 + $0x60] sm:$0xff]
    %v2034 = vld [vmem:[#allocation7 + $0x68] sm:$0xff]
    %v2035 = vld [vmem:[#allocation7 + $0x70] sm:$0xff]
    %v2036 = vld [vmem:[#allocation7 + $0x78] sm:$0xff]
    %v2037 = vld [vmem:[#allocation7 + $0x80] sm:$0xff]
    %v2038 = vld [vmem:[#allocation7 + $0x88] sm:$0xff]
    %v2039 = vld [vmem:[#allocation7 + $0x90] sm:$0xff]
    %v2040 = vld [vmem:[#allocation7 + $0x98] sm:$0xff]
    %v2041 = vld [vmem:[#allocation7 + $0xa0] sm:$0xff]
    %v2042 = vld [vmem:[#allocation7 + $0xa8] sm:$0xff]
    %v2043 = vld [vmem:[#allocation7 + $0xb0] sm:$0xff]
    %v2044 = vld [vmem:[#allocation7 + $0xb8] sm:$0xff]
    %v2045 = vld [vmem:[#allocation7 + $0xc0] sm:$0xff]
    %v2046 = vld [vmem:[#allocation7 + $0xc8] sm:$0xff]
    %v2047 = vld [vmem:[#allocation7 + $0xd0] sm:$0xff]
    %v2048 = vld [vmem:[#allocation7 + $0xd8] sm:$0xff]
    %v2049 = vld [vmem:[#allocation7 + $0xe0] sm:$0xff]
    %v2050 = vld [vmem:[#allocation7 + $0xe8] sm:$0xff]
    %v2051 = vld [vmem:[#allocation7 + $0xf0] sm:$0xff]
    %v2052 = vld [vmem:[#allocation7 + $0xf8] sm:$0xff]
    %v2053 = vld [vmem:[#allocation7 + $0x100] sm:$0xff]
    %v2054 = vld [vmem:[#allocation7 + $0x108] sm:$0xff]
    %v2055 = vld [vmem:[#allocation7 + $0x110] sm:$0xff]
    %v2056 = vld [vmem:[#allocation7 + $0x118] sm:$0xff]
    %v2057 = vld [vmem:[#allocation7 + $0x120] sm:$0xff]
    %v2058 = vld [vmem:[#allocation7 + $0x128] sm:$0xff]
    %v2059 = vld [vmem:[#allocation7 + $0x130] sm:$0xff]
    %v2060 = vld [vmem:[#allocation7 + $0x138] sm:$0xff]
    %v2061 = vld [vmem:[#allocation7 + $0x140] sm:$0xff]
    %v2062 = vld [vmem:[#allocation7 + $0x148] sm:$0xff]
    %v2063 = vld [vmem:[#allocation7 + $0x150] sm:$0xff]
    %v2064 = vld [vmem:[#allocation7 + $0x158] sm:$0xff]
    %v2065 = vld [vmem:[#allocation7 + $0x160] sm:$0xff]
    %v2066 = vld [vmem:[#allocation7 + $0x168] sm:$0xff]
    %v2067 = vld [vmem:[#allocation7 + $0x170] sm:$0xff]
    %v2068 = vld [vmem:[#allocation7 + $0x178] sm:$0xff]
    %v2069 = vld [vmem:[#allocation7 + $0x180] sm:$0xff]
    %v2070 = vld [vmem:[#allocation7 + $0x188] sm:$0xff]
    %v2071 = vld [vmem:[#allocation7 + $0x190] sm:$0xff]
    %v2072 = vld [vmem:[#allocation7 + $0x198] sm:$0xff]
    %v2073 = vld [vmem:[#allocation7 + $0x1a0] sm:$0xff]
    %v2074 = vld [vmem:[#allocation7 + $0x1a8] sm:$0xff]
    %v2075 = vld [vmem:[#allocation7 + $0x1b0] sm:$0xff]
    %v2076 = vld [vmem:[#allocation7 + $0x1b8] sm:$0xff]
    %v2077 = vld [vmem:[#allocation7 + $0x1c0] sm:$0xff]
    %v2078 = vld [vmem:[#allocation7 + $0x1c8] sm:$0xff]
    %v2079 = vld [vmem:[#allocation7 + $0x1d0] sm:$0xff]
    %v2080 = vld [vmem:[#allocation7 + $0x1d8] sm:$0xff]
    %v2081 = vld [vmem:[#allocation7 + $0x1e0] sm:$0xff]
    %v2082 = vld [vmem:[#allocation7 + $0x1e8] sm:$0xff]
    %v2083 = vld [vmem:[#allocation7 + $0x1f0] sm:$0xff]
    %v2084 = vld [vmem:[#allocation7 + $0x1f8] sm:$0xff]
    %v2085 = vld [vmem:[#allocation7 + $0x200] sm:$0xff]
    %v2086 = vld [vmem:[#allocation7 + $0x208] sm:$0xff]
    %v2087 = vld [vmem:[#allocation7 + $0x210] sm:$0xff]
    %v2088 = vld [vmem:[#allocation7 + $0x218] sm:$0xff]
    %v2089 = vld [vmem:[#allocation7 + $0x220] sm:$0xff]
    %v2090 = vld [vmem:[#allocation7 + $0x228] sm:$0xff]
    %v2091 = vld [vmem:[#allocation7 + $0x230] sm:$0xff]
    %v2092 = vld [vmem:[#allocation7 + $0x238] sm:$0xff]
    %v2093 = vld [vmem:[#allocation7 + $0x240] sm:$0xff]
    %v2094 = vld [vmem:[#allocation7 + $0x248] sm:$0xff]
    %v2095 = vld [vmem:[#allocation7 + $0x250] sm:$0xff]
    %v2096 = vld [vmem:[#allocation7 + $0x258] sm:$0xff]
    %v2097 = vld [vmem:[#allocation7 + $0x260] sm:$0xff]
    %v2098 = vld [vmem:[#allocation7 + $0x268] sm:$0xff]
    %v2099 = vld [vmem:[#allocation7 + $0x270] sm:$0xff]
    %v2100 = vld [vmem:[#allocation7 + $0x278] sm:$0xff]
    %v2101 = vld [vmem:[#allocation7 + $0x280] sm:$0xff]
    %v2102 = vld [vmem:[#allocation7 + $0x288] sm:$0xff]
    %v2103 = vld [vmem:[#allocation7 + $0x290] sm:$0xff]
    %v2104 = vld [vmem:[#allocation7 + $0x298] sm:$0xff]
    %v2105 = vld [vmem:[#allocation7 + $0x2a0] sm:$0xff]
    %v2106 = vld [vmem:[#allocation7 + $0x2a8] sm:$0xff]
    %v2107 = vld [vmem:[#allocation7 + $0x2b0] sm:$0xff]
    %v2108 = vld [vmem:[#allocation7 + $0x2b8] sm:$0xff]
    %v2109 = vld [vmem:[#allocation7 + $0x2c0] sm:$0xff]
    %v2110 = vld [vmem:[#allocation7 + $0x2c8] sm:$0xff]
    %v2111 = vld [vmem:[#allocation7 + $0x2d0] sm:$0xff]
    %v2112 = vld [vmem:[#allocation7 + $0x2d8] sm:$0xff]
    %v2113 = vld [vmem:[#allocation7 + $0x2e0] sm:$0xff]
    %v2114 = vld [vmem:[#allocation7 + $0x2e8] sm:$0xff]
    %v2115 = vld [vmem:[#allocation7 + $0x2f0] sm:$0xff]
    %v2116 = vld [vmem:[#allocation7 + $0x2f8] sm:$0xff]
    %v2117 = vld [vmem:[#allocation7 + $0x300] sm:$0xff]
    %v2118 = vld [vmem:[#allocation7 + $0x308] sm:$0xff]
    %v2119 = vld [vmem:[#allocation7 + $0x310] sm:$0xff]
    %v2120 = vld [vmem:[#allocation7 + $0x318] sm:$0xff]
    %v2121 = vld [vmem:[#allocation7 + $0x320] sm:$0xff]
    %v2122 = vld [vmem:[#allocation7 + $0x328] sm:$0xff]
    %v2123 = vld [vmem:[#allocation7 + $0x330] sm:$0xff]
    %v2124 = vld [vmem:[#allocation7 + $0x338] sm:$0xff]
    %v2125 = vld [vmem:[#allocation7 + $0x340] sm:$0xff]
    %v2126 = vld [vmem:[#allocation7 + $0x348] sm:$0xff]
    %v2127 = vld [vmem:[#allocation7 + $0x350] sm:$0xff]
    %v2128 = vld [vmem:[#allocation7 + $0x358] sm:$0xff]
    %v2129 = vld [vmem:[#allocation7 + $0x360] sm:$0xff]
    %v2130 = vld [vmem:[#allocation7 + $0x368] sm:$0xff]
    %v2131 = vld [vmem:[#allocation7 + $0x370] sm:$0xff]
    %v2132 = vld [vmem:[#allocation7 + $0x378] sm:$0xff]
    %v2133 = vld [vmem:[#allocation7 + $0x380] sm:$0xff]
    %v2134 = vld [vmem:[#allocation7 + $0x388] sm:$0xff]
    %v2135 = vld [vmem:[#allocation7 + $0x390] sm:$0xff]
    %v2136 = vld [vmem:[#allocation7 + $0x398] sm:$0xff]
    %v2137 = vld [vmem:[#allocation7 + $0x3a0] sm:$0xff]
    %v2138 = vld [vmem:[#allocation7 + $0x3a8] sm:$0xff]
    %v2139 = vld [vmem:[#allocation7 + $0x3b0] sm:$0xff]
    %v2140 = vld [vmem:[#allocation7 + $0x3b8] sm:$0xff]
    %v2141 = vld [vmem:[#allocation7 + $0x3c0] sm:$0xff]
    %v2142 = vld [vmem:[#allocation7 + $0x3c8] sm:$0xff]
    %v2143 = vld [vmem:[#allocation7 + $0x3d0] sm:$0xff]
    %v2144 = vld [vmem:[#allocation7 + $0x3d8] sm:$0xff]
    %v2145 = vld [vmem:[#allocation7 + $0x3e0] sm:$0xff]
    %v2146 = vld [vmem:[#allocation7 + $0x3e8] sm:$0xff]
    %v2147 = vld [vmem:[#allocation7 + $0x3f0] sm:$0xff]
    %v2148 = vld [vmem:[#allocation7 + $0x3f8] sm:$0xff]
    %v2149 = vld [vmem:[%s3] sm:$0xf]
    %v2151 = vlaneseq
    %v2152 = vshrl.u32 %v2151, 7
    %v2153 = vsub.s32 0, %v2152
    %v2154 = vrot.slane %v2020, %v2153
    %v2155 = vlaneseq
    %v2156 = vshrl.u32 %v2155, 7
    %v2157 = vsub.s32 1, %v2156
    %v2158 = vrot.slane %v2020, %v2157
    %v2162 = vlaneseq
    %v2163 = vshrl.u32 %v2162, 7
    %v2164 = vsub.s32 0, %v2163
    %v2165 = vrot.slane %v2149, %v2164
    %v2166 = vlaneseq
    %v2167 = vshrl.u32 %v2166, 7
    %v2168 = vsub.s32 1, %v2167
    %v2169 = vrot.slane %v2149, %v2168
    %v2170 = vlaneseq
    %v2171 = vshrl.u32 %v2170, 7
    %v2172 = vsub.s32 2, %v2171
    %v2173 = vrot.slane %v2149, %v2172
    %v2174 = vlaneseq
    %v2175 = vshrl.u32 %v2174, 7
    %v2176 = vsub.s32 3, %v2175
    %v2177 = vrot.slane %v2149, %v2176
    %2182 = vmatprep.subr.mxu0 %v2022
    %2183 = vmatpush1.msra.mxu0 %v2021
    %2184 = vmatprep.subr.mxu0 %v2026
    %2185 = vmatpush1.msra.mxu0 %v2025
    %2186 = vmatprep.subr.mxu0 %v2030
    %2187 = vmatpush1.msra.mxu0 %v2029
    %2188 = vmatprep.subr.mxu0 %v2034
    %2189 = vmatpush1.msra.mxu0 %v2033
    %2190 = vmatprep.subr.mxu0 %v2038
    %2191 = vmatpush1.msra.mxu0 %v2037
    %2192 = vmatprep.subr.mxu0 %v2042
    %2193 = vmatpush1.msra.mxu0 %v2041
    %2194 = vmatprep.subr.mxu0 %v2046
    %2195 = vmatpush1.msra.mxu0 %v2045
    %2196 = vmatprep.subr.mxu0 %v2050
    %2197 = vmatpush1.msra.mxu0 %v2049
    %2198 = vmatprep.subr.mxu0 %v2054
    %2199 = vmatpush1.msra.mxu0 %v2053
    %2200 = vmatprep.subr.mxu0 %v2058
    %2201 = vmatpush1.msra.mxu0 %v2057
    %2202 = vmatprep.subr.mxu0 %v2062
    %2203 = vmatpush1.msra.mxu0 %v2061
    %2204 = vmatprep.subr.mxu0 %v2066
    %2205 = vmatpush1.msra.mxu0 %v2065
    %2206 = vmatprep.subr.mxu0 %v2070
    %2207 = vmatpush1.msra.mxu0 %v2069
    %2208 = vmatprep.subr.mxu0 %v2074
    %2209 = vmatpush1.msra.mxu0 %v2073
    %2210 = vmatprep.subr.mxu0 %v2078
    %2211 = vmatpush1.msra.mxu0 %v2077
    %2212 = vmatprep.subr.mxu0 %v2082
    %2213 = vmatpush1.msra.mxu0 %v2081
    %2214 = vmatprep.subr.mxu0 %v2086
    %2215 = vmatpush1.msra.mxu0 %v2085
    %2216 = vmatprep.subr.mxu0 %v2090
    %2217 = vmatpush1.msra.mxu0 %v2089
    %2218 = vmatprep.subr.mxu0 %v2094
    %2219 = vmatpush1.msra.mxu0 %v2093
    %2220 = vmatprep.subr.mxu0 %v2098
    %2221 = vmatpush1.msra.mxu0 %v2097
    %2222 = vmatprep.subr.mxu0 %v2102
    %2223 = vmatpush1.msra.mxu0 %v2101
    %2224 = vmatprep.subr.mxu0 %v2106
    %2225 = vmatpush1.msra.mxu0 %v2105
    %2226 = vmatprep.subr.mxu0 %v2110
    %2227 = vmatpush1.msra.mxu0 %v2109
    %2228 = vmatprep.subr.mxu0 %v2114
    %2229 = vmatpush1.msra.mxu0 %v2113
    %2230 = vmatprep.subr.mxu0 %v2118
    %2231 = vmatpush1.msra.mxu0 %v2117
    %2232 = vmatprep.subr.mxu0 %v2122
    %2233 = vmatpush1.msra.mxu0 %v2121
    %2234 = vmatprep.subr.mxu0 %v2126
    %2235 = vmatpush1.msra.mxu0 %v2125
    %2236 = vmatprep.subr.mxu0 %v2130
    %2237 = vmatpush1.msra.mxu0 %v2129
    %2238 = vmatprep.subr.mxu0 %v2134
    %2239 = vmatpush1.msra.mxu0 %v2133
    %2240 = vmatprep.subr.mxu0 %v2138
    %2241 = vmatpush1.msra.mxu0 %v2137
    %2242 = vmatprep.subr.mxu0 %v2142
    %2243 = vmatpush1.msra.mxu0 %v2141
    %2244 = vmatprep.subr.mxu0 %v2146
    %2245 = vmatpush1.msra.mxu0 %v2145
    %2246 = vmatprep.mubr.f32.mxu0 %v2158
    %2247 = vmatmul.mubr.f32.gmra.mrb[0].mxu0 %v2154
    %v2248 = vpop.f32.mrb[0].mxu0
    %v2249 = vadd.f32 %v2165, %v2248
    %v2250 = vpop.f32.mrb[0].mxu0
    %v2251 = vadd.f32 %v2169, %v2250
    %2252 = vdwg.mxu0
    %2253 = vmatprep.subr.mxu0 %v2024
    %2254 = vmatpush1.msra.mxu0 %v2023
    %2255 = vmatprep.subr.mxu0 %v2028
    %2256 = vmatpush1.msra.mxu0 %v2027
    %2257 = vmatprep.subr.mxu0 %v2032
    %2258 = vmatpush1.msra.mxu0 %v2031
    %2259 = vmatprep.subr.mxu0 %v2036
    %2260 = vmatpush1.msra.mxu0 %v2035
    %2261 = vmatprep.subr.mxu0 %v2040
    %2262 = vmatpush1.msra.mxu0 %v2039
    %2263 = vmatprep.subr.mxu0 %v2044
    %2264 = vmatpush1.msra.mxu0 %v2043
    %2265 = vmatprep.subr.mxu0 %v2048
    %2266 = vmatpush1.msra.mxu0 %v2047
    %2267 = vmatprep.subr.mxu0 %v2052
    %2268 = vmatpush1.msra.mxu0 %v2051
    %2269 = vmatprep.subr.mxu0 %v2056
    %2270 = vmatpush1.msra.mxu0 %v2055
    %2271 = vmatprep.subr.mxu0 %v2060
    %2272 = vmatpush1.msra.mxu0 %v2059
    %2273 = vmatprep.subr.mxu0 %v2064
    %2274 = vmatpush1.msra.mxu0 %v2063
    %2275 = vmatprep.subr.mxu0 %v2068
    %2276 = vmatpush1.msra.mxu0 %v2067
    %2277 = vmatprep.subr.mxu0 %v2072
    %2278 = vmatpush1.msra.mxu0 %v2071
    %2279 = vmatprep.subr.mxu0 %v2076
    %2280 = vmatpush1.msra.mxu0 %v2075
    %2281 = vmatprep.subr.mxu0 %v2080
    %2282 = vmatpush1.msra.mxu0 %v2079
    %2283 = vmatprep.subr.mxu0 %v2084
    %2284 = vmatpush1.msra.mxu0 %v2083
    %2285 = vmatprep.subr.mxu0 %v2088
    %2286 = vmatpush1.msra.mxu0 %v2087
    %2287 = vmatprep.subr.mxu0 %v2092
    %2288 = vmatpush1.msra.mxu0 %v2091
    %2289 = vmatprep.subr.mxu0 %v2096
    %2290 = vmatpush1.msra.mxu0 %v2095
    %2291 = vmatprep.subr.mxu0 %v2100
    %2292 = vmatpush1.msra.mxu0 %v2099
    %2293 = vmatprep.subr.mxu0 %v2104
    %2294 = vmatpush1.msra.mxu0 %v2103
    %2295 = vmatprep.subr.mxu0 %v2108
    %2296 = vmatpush1.msra.mxu0 %v2107
    %2297 = vmatprep.subr.mxu0 %v2112
    %2298 = vmatpush1.msra.mxu0 %v2111
    %2299 = vmatprep.subr.mxu0 %v2116
    %2300 = vmatpush1.msra.mxu0 %v2115
    %2301 = vmatprep.subr.mxu0 %v2120
    %2302 = vmatpush1.msra.mxu0 %v2119
    %2303 = vmatprep.subr.mxu0 %v2124
    %2304 = vmatpush1.msra.mxu0 %v2123
    %2305 = vmatprep.subr.mxu0 %v2128
    %2306 = vmatpush1.msra.mxu0 %v2127
    %2307 = vmatprep.subr.mxu0 %v2132
    %2308 = vmatpush1.msra.mxu0 %v2131
    %2309 = vmatprep.subr.mxu0 %v2136
    %2310 = vmatpush1.msra.mxu0 %v2135
    %2311 = vmatprep.subr.mxu0 %v2140
    %2312 = vmatpush1.msra.mxu0 %v2139
    %2313 = vmatprep.subr.mxu0 %v2144
    %2314 = vmatpush1.msra.mxu0 %v2143
    %2315 = vmatprep.subr.mxu0 %v2148
    %2316 = vmatpush1.msra.mxu0 %v2147
    %2317 = vmatprep.mubr.f32.mxu0 %v2158
    %2318 = vmatmul.mubr.f32.gmra.mrb[0].mxu0 %v2154
    %v2319 = vpop.f32.mrb[0].mxu0
    %v2320 = vadd.f32 %v2173, %v2319
    %v2321 = vpop.f32.mrb[0].mxu0
    %v2322 = vadd.f32 %v2177, %v2321
    %2323 = vdwg.mxu0
    %v2324 = vxor.u32 %v2249, 2147483648
    %v2325 = vmul.f32 %v2324, 1.442695
    %v2326 = vpow.pop %v2325
    %v2327 = vadd.f32 %v2326, 1.0
    %v2328 = vrcp.pop %v2327
    %v2329 = vmul.f32 1.0, %v2328
    %v2330 = vxor.u32 %v2251, 2147483648
    %v2331 = vmul.f32 %v2330, 1.442695
    %v2332 = vpow.pop %v2331
    %v2333 = vadd.f32 %v2332, 1.0
    %v2334 = vrcp.pop %v2333
    %v2335 = vmul.f32 1.0, %v2334
    %v2336 = vmul.f32 %v2329, %v2322
    %v2337 = vadd.f32 %v2320, %v2336
    %v2338 = vtanh.pop %v2337
    %v2339 = vsub.f32 1.0, %v2335
    %v2340 = vmul.f32 %v2339, %v2338
    %v2341 = vmul.f32 %v2335, %v2015
    %v2342 = vadd.f32 %v2340, %v2341
    %2343 = vst [vmem:[#allocation9 + $0x6] sm:$0x1] %v2342
    %v2344 = vld [vmem:[#allocation4 + $0x7] sm:$0x1]
    %2345 = vst.msk [vmem:[#allocation3] sm:$0x1] %vm55, %v2344
    %2346 = vst.msk [vmem:[#allocation3 + $0x1] sm:$0x1] %vm55, %v2342
    %v2347 = vld [vmem:[#allocation3] sm:$0x3]
    %v2348 = vld [vmem:[#allocation7] sm:$0xff]
    %v2349 = vld [vmem:[#allocation7 + $0x8] sm:$0xff]
    %v2350 = vld [vmem:[#allocation7 + $0x10] sm:$0xff]
    %v2351 = vld [vmem:[#allocation7 + $0x18] sm:$0xff]
    %v2352 = vld [vmem:[#allocation7 + $0x20] sm:$0xff]
    %v2353 = vld [vmem:[#allocation7 + $0x28] sm:$0xff]
    %v2354 = vld [vmem:[#allocation7 + $0x30] sm:$0xff]
    %v2355 = vld [vmem:[#allocation7 + $0x38] sm:$0xff]
    %v2356 = vld [vmem:[#allocation7 + $0x40] sm:$0xff]
    %v2357 = vld [vmem:[#allocation7 + $0x48] sm:$0xff]
    %v2358 = vld [vmem:[#allocation7 + $0x50] sm:$0xff]
    %v2359 = vld [vmem:[#allocation7 + $0x58] sm:$0xff]
    %v2360 = vld [vmem:[#allocation7 + $0x60] sm:$0xff]
    %v2361 = vld [vmem:[#allocation7 + $0x68] sm:$0xff]
    %v2362 = vld [vmem:[#allocation7 + $0x70] sm:$0xff]
    %v2363 = vld [vmem:[#allocation7 + $0x78] sm:$0xff]
    %v2364 = vld [vmem:[#allocation7 + $0x80] sm:$0xff]
    %v2365 = vld [vmem:[#allocation7 + $0x88] sm:$0xff]
    %v2366 = vld [vmem:[#allocation7 + $0x90] sm:$0xff]
    %v2367 = vld [vmem:[#allocation7 + $0x98] sm:$0xff]
    %v2368 = vld [vmem:[#allocation7 + $0xa0] sm:$0xff]
    %v2369 = vld [vmem:[#allocation7 + $0xa8] sm:$0xff]
    %v2370 = vld [vmem:[#allocation7 + $0xb0] sm:$0xff]
    %v2371 = vld [vmem:[#allocation7 + $0xb8] sm:$0xff]
    %v2372 = vld [vmem:[#allocation7 + $0xc0] sm:$0xff]
    %v2373 = vld [vmem:[#allocation7 + $0xc8] sm:$0xff]
    %v2374 = vld [vmem:[#allocation7 + $0xd0] sm:$0xff]
    %v2375 = vld [vmem:[#allocation7 + $0xd8] sm:$0xff]
    %v2376 = vld [vmem:[#allocation7 + $0xe0] sm:$0xff]
    %v2377 = vld [vmem:[#allocation7 + $0xe8] sm:$0xff]
    %v2378 = vld [vmem:[#allocation7 + $0xf0] sm:$0xff]
    %v2379 = vld [vmem:[#allocation7 + $0xf8] sm:$0xff]
    %v2380 = vld [vmem:[#allocation7 + $0x100] sm:$0xff]
    %v2381 = vld [vmem:[#allocation7 + $0x108] sm:$0xff]
    %v2382 = vld [vmem:[#allocation7 + $0x110] sm:$0xff]
    %v2383 = vld [vmem:[#allocation7 + $0x118] sm:$0xff]
    %v2384 = vld [vmem:[#allocation7 + $0x120] sm:$0xff]
    %v2385 = vld [vmem:[#allocation7 + $0x128] sm:$0xff]
    %v2386 = vld [vmem:[#allocation7 + $0x130] sm:$0xff]
    %v2387 = vld [vmem:[#allocation7 + $0x138] sm:$0xff]
    %v2388 = vld [vmem:[#allocation7 + $0x140] sm:$0xff]
    %v2389 = vld [vmem:[#allocation7 + $0x148] sm:$0xff]
    %v2390 = vld [vmem:[#allocation7 + $0x150] sm:$0xff]
    %v2391 = vld [vmem:[#allocation7 + $0x158] sm:$0xff]
    %v2392 = vld [vmem:[#allocation7 + $0x160] sm:$0xff]
    %v2393 = vld [vmem:[#allocation7 + $0x168] sm:$0xff]
    %v2394 = vld [vmem:[#allocation7 + $0x170] sm:$0xff]
    %v2395 = vld [vmem:[#allocation7 + $0x178] sm:$0xff]
    %v2396 = vld [vmem:[#allocation7 + $0x180] sm:$0xff]
    %v2397 = vld [vmem:[#allocation7 + $0x188] sm:$0xff]
    %v2398 = vld [vmem:[#allocation7 + $0x190] sm:$0xff]
    %v2399 = vld [vmem:[#allocation7 + $0x198] sm:$0xff]
    %v2400 = vld [vmem:[#allocation7 + $0x1a0] sm:$0xff]
    %v2401 = vld [vmem:[#allocation7 + $0x1a8] sm:$0xff]
    %v2402 = vld [vmem:[#allocation7 + $0x1b0] sm:$0xff]
    %v2403 = vld [vmem:[#allocation7 + $0x1b8] sm:$0xff]
    %v2404 = vld [vmem:[#allocation7 + $0x1c0] sm:$0xff]
    %v2405 = vld [vmem:[#allocation7 + $0x1c8] sm:$0xff]
    %v2406 = vld [vmem:[#allocation7 + $0x1d0] sm:$0xff]
    %v2407 = vld [vmem:[#allocation7 + $0x1d8] sm:$0xff]
    %v2408 = vld [vmem:[#allocation7 + $0x1e0] sm:$0xff]
    %v2409 = vld [vmem:[#allocation7 + $0x1e8] sm:$0xff]
    %v2410 = vld [vmem:[#allocation7 + $0x1f0] sm:$0xff]
    %v2411 = vld [vmem:[#allocation7 + $0x1f8] sm:$0xff]
    %v2412 = vld [vmem:[#allocation7 + $0x200] sm:$0xff]
    %v2413 = vld [vmem:[#allocation7 + $0x208] sm:$0xff]
    %v2414 = vld [vmem:[#allocation7 + $0x210] sm:$0xff]
    %v2415 = vld [vmem:[#allocation7 + $0x218] sm:$0xff]
    %v2416 = vld [vmem:[#allocation7 + $0x220] sm:$0xff]
    %v2417 = vld [vmem:[#allocation7 + $0x228] sm:$0xff]
    %v2418 = vld [vmem:[#allocation7 + $0x230] sm:$0xff]
    %v2419 = vld [vmem:[#allocation7 + $0x238] sm:$0xff]
    %v2420 = vld [vmem:[#allocation7 + $0x240] sm:$0xff]
    %v2421 = vld [vmem:[#allocation7 + $0x248] sm:$0xff]
    %v2422 = vld [vmem:[#allocation7 + $0x250] sm:$0xff]
    %v2423 = vld [vmem:[#allocation7 + $0x258] sm:$0xff]
    %v2424 = vld [vmem:[#allocation7 + $0x260] sm:$0xff]
    %v2425 = vld [vmem:[#allocation7 + $0x268] sm:$0xff]
    %v2426 = vld [vmem:[#allocation7 + $0x270] sm:$0xff]
    %v2427 = vld [vmem:[#allocation7 + $0x278] sm:$0xff]
    %v2428 = vld [vmem:[#allocation7 + $0x280] sm:$0xff]
    %v2429 = vld [vmem:[#allocation7 + $0x288] sm:$0xff]
    %v2430 = vld [vmem:[#allocation7 + $0x290] sm:$0xff]
    %v2431 = vld [vmem:[#allocation7 + $0x298] sm:$0xff]
    %v2432 = vld [vmem:[#allocation7 + $0x2a0] sm:$0xff]
    %v2433 = vld [vmem:[#allocation7 + $0x2a8] sm:$0xff]
    %v2434 = vld [vmem:[#allocation7 + $0x2b0] sm:$0xff]
    %v2435 = vld [vmem:[#allocation7 + $0x2b8] sm:$0xff]
    %v2436 = vld [vmem:[#allocation7 + $0x2c0] sm:$0xff]
    %v2437 = vld [vmem:[#allocation7 + $0x2c8] sm:$0xff]
    %v2438 = vld [vmem:[#allocation7 + $0x2d0] sm:$0xff]
    %v2439 = vld [vmem:[#allocation7 + $0x2d8] sm:$0xff]
    %v2440 = vld [vmem:[#allocation7 + $0x2e0] sm:$0xff]
    %v2441 = vld [vmem:[#allocation7 + $0x2e8] sm:$0xff]
    %v2442 = vld [vmem:[#allocation7 + $0x2f0] sm:$0xff]
    %v2443 = vld [vmem:[#allocation7 + $0x2f8] sm:$0xff]
    %v2444 = vld [vmem:[#allocation7 + $0x300] sm:$0xff]
    %v2445 = vld [vmem:[#allocation7 + $0x308] sm:$0xff]
    %v2446 = vld [vmem:[#allocation7 + $0x310] sm:$0xff]
    %v2447 = vld [vmem:[#allocation7 + $0x318] sm:$0xff]
    %v2448 = vld [vmem:[#allocation7 + $0x320] sm:$0xff]
    %v2449 = vld [vmem:[#allocation7 + $0x328] sm:$0xff]
    %v2450 = vld [vmem:[#allocation7 + $0x330] sm:$0xff]
    %v2451 = vld [vmem:[#allocation7 + $0x338] sm:$0xff]
    %v2452 = vld [vmem:[#allocation7 + $0x340] sm:$0xff]
    %v2453 = vld [vmem:[#allocation7 + $0x348] sm:$0xff]
    %v2454 = vld [vmem:[#allocation7 + $0x350] sm:$0xff]
    %v2455 = vld [vmem:[#allocation7 + $0x358] sm:$0xff]
    %v2456 = vld [vmem:[#allocation7 + $0x360] sm:$0xff]
    %v2457 = vld [vmem:[#allocation7 + $0x368] sm:$0xff]
    %v2458 = vld [vmem:[#allocation7 + $0x370] sm:$0xff]
    %v2459 = vld [vmem:[#allocation7 + $0x378] sm:$0xff]
    %v2460 = vld [vmem:[#allocation7 + $0x380] sm:$0xff]
    %v2461 = vld [vmem:[#allocation7 + $0x388] sm:$0xff]
    %v2462 = vld [vmem:[#allocation7 + $0x390] sm:$0xff]
    %v2463 = vld [vmem:[#allocation7 + $0x398] sm:$0xff]
    %v2464 = vld [vmem:[#allocation7 + $0x3a0] sm:$0xff]
    %v2465 = vld [vmem:[#allocation7 + $0x3a8] sm:$0xff]
    %v2466 = vld [vmem:[#allocation7 + $0x3b0] sm:$0xff]
    %v2467 = vld [vmem:[#allocation7 + $0x3b8] sm:$0xff]
    %v2468 = vld [vmem:[#allocation7 + $0x3c0] sm:$0xff]
    %v2469 = vld [vmem:[#allocation7 + $0x3c8] sm:$0xff]
    %v2470 = vld [vmem:[#allocation7 + $0x3d0] sm:$0xff]
    %v2471 = vld [vmem:[#allocation7 + $0x3d8] sm:$0xff]
    %v2472 = vld [vmem:[#allocation7 + $0x3e0] sm:$0xff]
    %v2473 = vld [vmem:[#allocation7 + $0x3e8] sm:$0xff]
    %v2474 = vld [vmem:[#allocation7 + $0x3f0] sm:$0xff]
    %v2475 = vld [vmem:[#allocation7 + $0x3f8] sm:$0xff]
    %v2476 = vld [vmem:[%s3] sm:$0xf]
    %v2478 = vlaneseq
    %v2479 = vshrl.u32 %v2478, 7
    %v2480 = vsub.s32 0, %v2479
    %v2481 = vrot.slane %v2347, %v2480
    %v2482 = vlaneseq
    %v2483 = vshrl.u32 %v2482, 7
    %v2484 = vsub.s32 1, %v2483
    %v2485 = vrot.slane %v2347, %v2484
    %v2489 = vlaneseq
    %v2490 = vshrl.u32 %v2489, 7
    %v2491 = vsub.s32 0, %v2490
    %v2492 = vrot.slane %v2476, %v2491
    %v2493 = vlaneseq
    %v2494 = vshrl.u32 %v2493, 7
    %v2495 = vsub.s32 1, %v2494
    %v2496 = vrot.slane %v2476, %v2495
    %v2497 = vlaneseq
    %v2498 = vshrl.u32 %v2497, 7
    %v2499 = vsub.s32 2, %v2498
    %v2500 = vrot.slane %v2476, %v2499
    %v2501 = vlaneseq
    %v2502 = vshrl.u32 %v2501, 7
    %v2503 = vsub.s32 3, %v2502
    %v2504 = vrot.slane %v2476, %v2503
    %2509 = vmatprep.subr.mxu0 %v2349
    %2510 = vmatpush1.msra.mxu0 %v2348
    %2511 = vmatprep.subr.mxu0 %v2353
    %2512 = vmatpush1.msra.mxu0 %v2352
    %2513 = vmatprep.subr.mxu0 %v2357
    %2514 = vmatpush1.msra.mxu0 %v2356
    %2515 = vmatprep.subr.mxu0 %v2361
    %2516 = vmatpush1.msra.mxu0 %v2360
    %2517 = vmatprep.subr.mxu0 %v2365
    %2518 = vmatpush1.msra.mxu0 %v2364
    %2519 = vmatprep.subr.mxu0 %v2369
    %2520 = vmatpush1.msra.mxu0 %v2368
    %2521 = vmatprep.subr.mxu0 %v2373
    %2522 = vmatpush1.msra.mxu0 %v2372
    %2523 = vmatprep.subr.mxu0 %v2377
    %2524 = vmatpush1.msra.mxu0 %v2376
    %2525 = vmatprep.subr.mxu0 %v2381
    %2526 = vmatpush1.msra.mxu0 %v2380
    %2527 = vmatprep.subr.mxu0 %v2385
    %2528 = vmatpush1.msra.mxu0 %v2384
    %2529 = vmatprep.subr.mxu0 %v2389
    %2530 = vmatpush1.msra.mxu0 %v2388
    %2531 = vmatprep.subr.mxu0 %v2393
    %2532 = vmatpush1.msra.mxu0 %v2392
    %2533 = vmatprep.subr.mxu0 %v2397
    %2534 = vmatpush1.msra.mxu0 %v2396
    %2535 = vmatprep.subr.mxu0 %v2401
    %2536 = vmatpush1.msra.mxu0 %v2400
    %2537 = vmatprep.subr.mxu0 %v2405
    %2538 = vmatpush1.msra.mxu0 %v2404
    %2539 = vmatprep.subr.mxu0 %v2409
    %2540 = vmatpush1.msra.mxu0 %v2408
    %2541 = vmatprep.subr.mxu0 %v2413
    %2542 = vmatpush1.msra.mxu0 %v2412
    %2543 = vmatprep.subr.mxu0 %v2417
    %2544 = vmatpush1.msra.mxu0 %v2416
    %2545 = vmatprep.subr.mxu0 %v2421
    %2546 = vmatpush1.msra.mxu0 %v2420
    %2547 = vmatprep.subr.mxu0 %v2425
    %2548 = vmatpush1.msra.mxu0 %v2424
    %2549 = vmatprep.subr.mxu0 %v2429
    %2550 = vmatpush1.msra.mxu0 %v2428
    %2551 = vmatprep.subr.mxu0 %v2433
    %2552 = vmatpush1.msra.mxu0 %v2432
    %2553 = vmatprep.subr.mxu0 %v2437
    %2554 = vmatpush1.msra.mxu0 %v2436
    %2555 = vmatprep.subr.mxu0 %v2441
    %2556 = vmatpush1.msra.mxu0 %v2440
    %2557 = vmatprep.subr.mxu0 %v2445
    %2558 = vmatpush1.msra.mxu0 %v2444
    %2559 = vmatprep.subr.mxu0 %v2449
    %2560 = vmatpush1.msra.mxu0 %v2448
    %2561 = vmatprep.subr.mxu0 %v2453
    %2562 = vmatpush1.msra.mxu0 %v2452
    %2563 = vmatprep.subr.mxu0 %v2457
    %2564 = vmatpush1.msra.mxu0 %v2456
    %2565 = vmatprep.subr.mxu0 %v2461
    %2566 = vmatpush1.msra.mxu0 %v2460
    %2567 = vmatprep.subr.mxu0 %v2465
    %2568 = vmatpush1.msra.mxu0 %v2464
    %2569 = vmatprep.subr.mxu0 %v2469
    %2570 = vmatpush1.msra.mxu0 %v2468
    %2571 = vmatprep.subr.mxu0 %v2473
    %2572 = vmatpush1.msra.mxu0 %v2472
    %2573 = vmatprep.mubr.f32.mxu0 %v2485
    %2574 = vmatmul.mubr.f32.gmra.mrb[0].mxu0 %v2481
    %v2575 = vpop.f32.mrb[0].mxu0
    %v2576 = vadd.f32 %v2492, %v2575
    %v2577 = vpop.f32.mrb[0].mxu0
    %v2578 = vadd.f32 %v2496, %v2577
    %2579 = vdwg.mxu0
    %2580 = vmatprep.subr.mxu0 %v2351
    %2581 = vmatpush1.msra.mxu0 %v2350
    %2582 = vmatprep.subr.mxu0 %v2355
    %2583 = vmatpush1.msra.mxu0 %v2354
    %2584 = vmatprep.subr.mxu0 %v2359
    %2585 = vmatpush1.msra.mxu0 %v2358
    %2586 = vmatprep.subr.mxu0 %v2363
    %2587 = vmatpush1.msra.mxu0 %v2362
    %2588 = vmatprep.subr.mxu0 %v2367
    %2589 = vmatpush1.msra.mxu0 %v2366
    %2590 = vmatprep.subr.mxu0 %v2371
    %2591 = vmatpush1.msra.mxu0 %v2370
    %2592 = vmatprep.subr.mxu0 %v2375
    %2593 = vmatpush1.msra.mxu0 %v2374
    %2594 = vmatprep.subr.mxu0 %v2379
    %2595 = vmatpush1.msra.mxu0 %v2378
    %2596 = vmatprep.subr.mxu0 %v2383
    %2597 = vmatpush1.msra.mxu0 %v2382
    %2598 = vmatprep.subr.mxu0 %v2387
    %2599 = vmatpush1.msra.mxu0 %v2386
    %2600 = vmatprep.subr.mxu0 %v2391
    %2601 = vmatpush1.msra.mxu0 %v2390
    %2602 = vmatprep.subr.mxu0 %v2395
    %2603 = vmatpush1.msra.mxu0 %v2394
    %2604 = vmatprep.subr.mxu0 %v2399
    %2605 = vmatpush1.msra.mxu0 %v2398
    %2606 = vmatprep.subr.mxu0 %v2403
    %2607 = vmatpush1.msra.mxu0 %v2402
    %2608 = vmatprep.subr.mxu0 %v2407
    %2609 = vmatpush1.msra.mxu0 %v2406
    %2610 = vmatprep.subr.mxu0 %v2411
    %2611 = vmatpush1.msra.mxu0 %v2410
    %2612 = vmatprep.subr.mxu0 %v2415
    %2613 = vmatpush1.msra.mxu0 %v2414
    %2614 = vmatprep.subr.mxu0 %v2419
    %2615 = vmatpush1.msra.mxu0 %v2418
    %2616 = vmatprep.subr.mxu0 %v2423
    %2617 = vmatpush1.msra.mxu0 %v2422
    %2618 = vmatprep.subr.mxu0 %v2427
    %2619 = vmatpush1.msra.mxu0 %v2426
    %2620 = vmatprep.subr.mxu0 %v2431
    %2621 = vmatpush1.msra.mxu0 %v2430
    %2622 = vmatprep.subr.mxu0 %v2435
    %2623 = vmatpush1.msra.mxu0 %v2434
    %2624 = vmatprep.subr.mxu0 %v2439
    %2625 = vmatpush1.msra.mxu0 %v2438
    %2626 = vmatprep.subr.mxu0 %v2443
    %2627 = vmatpush1.msra.mxu0 %v2442
    %2628 = vmatprep.subr.mxu0 %v2447
    %2629 = vmatpush1.msra.mxu0 %v2446
    %2630 = vmatprep.subr.mxu0 %v2451
    %2631 = vmatpush1.msra.mxu0 %v2450
    %2632 = vmatprep.subr.mxu0 %v2455
    %2633 = vmatpush1.msra.mxu0 %v2454
    %2634 = vmatprep.subr.mxu0 %v2459
    %2635 = vmatpush1.msra.mxu0 %v2458
    %2636 = vmatprep.subr.mxu0 %v2463
    %2637 = vmatpush1.msra.mxu0 %v2462
    %2638 = vmatprep.subr.mxu0 %v2467
    %2639 = vmatpush1.msra.mxu0 %v2466
    %2640 = vmatprep.subr.mxu0 %v2471
    %2641 = vmatpush1.msra.mxu0 %v2470
    %2642 = vmatprep.subr.mxu0 %v2475
    %2643 = vmatpush1.msra.mxu0 %v2474
    %2644 = vmatprep.mubr.f32.mxu0 %v2485
    %2645 = vmatmul.mubr.f32.gmra.mrb[0].mxu0 %v2481
    %v2646 = vpop.f32.mrb[0].mxu0
    %v2647 = vadd.f32 %v2500, %v2646
    %v2648 = vpop.f32.mrb[0].mxu0
    %v2649 = vadd.f32 %v2504, %v2648
    %2650 = vdwg.mxu0
    %v2651 = vxor.u32 %v2576, 2147483648
    %v2652 = vmul.f32 %v2651, 1.442695
    %v2653 = vpow.pop %v2652
    %v2654 = vadd.f32 %v2653, 1.0
    %v2655 = vrcp.pop %v2654
    %v2656 = vmul.f32 1.0, %v2655
    %v2657 = vxor.u32 %v2578, 2147483648
    %v2658 = vmul.f32 %v2657, 1.442695
    %v2659 = vpow.pop %v2658
    %v2660 = vadd.f32 %v2659, 1.0
    %v2661 = vrcp.pop %v2660
    %v2662 = vmul.f32 1.0, %v2661
    %v2663 = vmul.f32 %v2656, %v2649
    %v2664 = vadd.f32 %v2647, %v2663
    %v2665 = vtanh.pop %v2664
    %v2666 = vsub.f32 1.0, %v2662
    %v2667 = vmul.f32 %v2666, %v2665
    %v2668 = vmul.f32 %v2662, %v2342
    %v2669 = vadd.f32 %v2667, %v2668
    %2670 = vst [vmem:[#allocation9 + $0x7] sm:$0x1] %v2669
    %2671 = vst [vmem:[#allocation2] sm:$0x1] %v2669
    // Predicated region
    $region30: #{tpu_custom_call.1} parent=1 // pred_check
      _
    $region31: #{tpu_custom_call.1} parent=1 // pred_check_branch
      %2673 = sbr.rel (0) target = $region33
    $region32: #{tpu_custom_call.1} parent=1 // pred_region
      %s2675 = ssub.s32 128, 128
      %2676 = vsyncadd [#allocation6], %s2675
      %s2678 = sshll.u32 [#allocation9], 4
      %s2679 = int_to_ptr.vmem [resolvable:$true] %s2678
      %2681 = dma.vmem_to_hbm [thread:$0]  %s2679, 128, %s4, [#allocation6]
    $region33: #{tpu_custom_call.1} parent=1 // pred_fallthru
      _
    // Predicated region
    $region34: #{tpu_custom_call.1} parent=1 // pred_check
      _
    $region35: #{tpu_custom_call.1} parent=1 // pred_check_branch
      %2683 = sbr.rel (0) target = $region37
    $region36: #{tpu_custom_call.1} parent=1 // pred_region
      %2684 = dma.done [#allocation6], 128
    $region37: #{tpu_custom_call.1} parent=1 // pred_fallthru
      _
    %2685 = vsyncpa [#allocation5], 1
    %2686 = vsyncpa [#allocation8], 1
    %2687 = vsyncpa [#allocation6], 1

</llo_original>
